<compile_context>
chip_gen: v6e
topology: v6e:2x2x1
jax: 0.10.0
libtpu: 0.0.40
codegen_flags: <defaults>
</compile_context>

<pallas_src>
import functools

import jax
import jax.numpy as jnp
from jax import lax
from jax.experimental import pallas as pl
from jax.experimental.pallas import tpu as pltpu

LANE = 128


def _ceil_to(n, m):
    return ((n + m - 1) // m) * m


# ----------------------------------------------------------------------------
# Fused kernel: one image per grid step, everything resident in VMEM.
# ----------------------------------------------------------------------------
def _mbconv_fused_kernel(x_ref, ew_ref, eb_ref, dw_ref, db_ref,
                         wr_ref, br_ref, we_ref, be_ref, pw_ref, pb_ref,
                         o_ref, xpad_ref,
                         *, K, stride, H, W, Hp, Wp, Ho, Wo, pad,
                         expand, use_skip):
    f32 = jnp.float32
    cdt = xpad_ref.dtype                               # compute dtype (bf16)
    Cexp = xpad_ref.shape[-1]
    Cin = x_ref.shape[-1]

    x_img = x_ref[0]                                   # (H, W, Cin_p), bf16
    x_flat = x_img.reshape(H * W, Cin)

    # ---- 1) expand 1x1 conv (BN scale pre-folded) + bias + SiLU --------------
    if expand:
        y = jnp.dot(x_flat, ew_ref[...], preferred_element_type=f32)
        y = y + eb_ref[...]
        y = y * jax.nn.sigmoid(y)                      # SiLU
        y_img = y.astype(cdt).reshape(H, W, Cexp)
    else:
        y_img = x_img                                  # Cexp_p == Cin_p

    # ---- 2) padded image in bf16 VMEM scratch. Zero only the border ----------
    #         (interior fully overwritten each step; per-step on purpose:
    #          with a "parallel" N axis each TensorCore has its own scratch).
    if pad > 0:
        zrow = jnp.zeros((pad, Wp, Cexp), cdt)
        xpad_ref[pl.ds(0, pad), :, :] = zrow
        xpad_ref[pl.ds(Hp - pad, pad), :, :] = zrow
        zcol = jnp.zeros((H, pad, Cexp), cdt)
        xpad_ref[pl.ds(pad, H), pl.ds(0, pad), :] = zcol
        xpad_ref[pl.ds(pad, H), pl.ds(Wp - pad, pad), :] = zcol
        xpad_ref[pl.ds(pad, H), pl.ds(pad, W), :] = y_img
    else:
        xpad_ref[...] = y_img

    # ---- 3) depthwise KxK conv: bf16 taps, f32 accumulation ------------------
    w_all = dw_ref[...]                                # (K, K, Cexp_p), bf16
    acc = None
    if stride == 1:
        for kh in range(K):
            band = xpad_ref[pl.ds(kh, Ho), :, :]       # one band load per kh
            for kw in range(K):
                patch = band[:, kw:kw + Wo, :]         # static value slice
                tap = patch * w_all[kh, kw]            # bf16 * bf16
                acc = tap.astype(f32) if acc is None else acc + tap
    else:
        # TODO(synk): replace value-level strided slices with a row-tiled
        #             (K-1 halo) depthwise loop for large / v7x stages.
        hspan = (Ho - 1) * stride + 1
        wspan = (Wo - 1) * stride + 1
        for kh in range(K):
            band = xpad_ref[pl.ds(kh, hspan), :, :]    # per-kh band only
            for kw in range(K):
                patch = lax.slice(band, (0, kw, 0), (hspan, kw + wspan, Cexp),
                                  (stride, stride, 1))
                tap = patch * w_all[kh, kw]
                acc = tap.astype(f32) if acc is None else acc + tap

    y = acc + db_ref[...]                              # folded-BN bias (f32)
    y = y * jax.nn.sigmoid(y)                          # SiLU
    y_bf = y.astype(cdt).reshape(Ho * Wo, Cexp)        # cast ONCE, reused below

    # ---- 4) squeeze-and-excite (scale folded into the projection weights) ----
    ones_row = jnp.ones((1, Ho * Wo), cdt)             # MXU pooling, bf16
    pooled = jnp.dot(ones_row, y_bf, preferred_element_type=f32) * (1.0 / (Ho * Wo))
    se = jnp.dot(pooled.astype(cdt), wr_ref[...],
                 preferred_element_type=f32) + br_ref[...]
    se = se * jax.nn.sigmoid(se)                       # SiLU
    se = jnp.dot(se.astype(cdt), we_ref[...],
                 preferred_element_type=f32) + be_ref[...]
    se = jax.nn.sigmoid(se)                            # (1, Cexp_p)
    pw_scaled = pw_ref[...] * jnp.transpose(se).astype(cdt)   # (Cexp_p, Cout_p)

    # ---- 5) project 1x1 conv (folded SE + folded BN) + bias (+ residual) -----
    out = jnp.dot(y_bf, pw_scaled, preferred_element_type=f32) + pb_ref[...]
    if use_skip:
        out = out + x_flat.astype(f32)                 # residual already in VMEM
    o_ref[0] = out.astype(o_ref.dtype).reshape(Ho, Wo, o_ref.shape[-1])


# ----------------------------------------------------------------------------
# Wrapper
# ----------------------------------------------------------------------------
def mbconv_forward(x_nchw, params, *, kernel_size, stride, expansion_factor,
                   compute_dtype=jnp.bfloat16):
    x = jnp.transpose(x_nchw, (0, 2, 3, 1))            # NCHW -> NHWC
    N, H, W, Cin = x.shape
    K = kernel_size
    pad = K // 2
    expand = expansion_factor > 1
    Cexp = params["dw_w"].shape[-1]
    Cse = params["se_wr"].shape[-1]
    Cout = params["proj_w"].shape[-1]
    if not expand:
        assert Cexp == Cin, "expand=False requires expanded channels == Cin"
    use_skip = (stride == 1) and (Cin == Cout)

    Hp, Wp = H + 2 * pad, W + 2 * pad
    Ho = (Hp - K) // stride + 1
    Wo = (Wp - K) // stride + 1

    # ---- pad every channel dim to a multiple of 128 (lane-dense MXU/stores) --
    Cin_p, Cexp_p = _ceil_to(Cin, LANE), _ceil_to(Cexp, LANE)
    Cse_p, Cout_p = _ceil_to(Cse, LANE), _ceil_to(Cout, LANE)
    if use_skip:
        assert Cin_p == Cout_p

    def cpad(a, targets):
        return jnp.pad(a, [(0, t - s) for s, t in zip(a.shape, targets)])

    # Fold BN scales into conv weights (eval-mode BN); biases stay f32.
    if expand:
        ew = cpad((params["expand_w"] * params["expand_scale"]).astype(compute_dtype),
                  (Cin_p, Cexp_p))
        eb = cpad(params["expand_bias"].astype(jnp.float32), (1, Cexp_p))
    else:  # dummies (unused in the kernel when expand=False)
        ew = jnp.zeros((Cin_p, Cexp_p), compute_dtype)
        eb = jnp.zeros((1, Cexp_p), jnp.float32)
    dw = cpad((params["dw_w"] * params["dw_scale"].reshape(1, 1, Cexp)).astype(compute_dtype),
              (K, K, Cexp_p))
    db = cpad(params["dw_bias"].astype(jnp.float32), (1, Cexp_p))
    wr = cpad(params["se_wr"].astype(compute_dtype), (Cexp_p, Cse_p))
    br = cpad(params["se_br"].astype(jnp.float32), (1, Cse_p))
    we = cpad(params["se_we"].astype(compute_dtype), (Cse_p, Cexp_p))
    be = cpad(params["se_be"].astype(jnp.float32), (1, Cexp_p))
    pw = cpad((params["proj_w"] * params["proj_scale"]).astype(compute_dtype),
              (Cexp_p, Cout_p))
    pb = cpad(params["proj_bias"].astype(jnp.float32), (1, Cout_p))

    x_in = cpad(x.astype(compute_dtype), (N, H, W, Cin_p))

    # ---- explicit VMEM budget (blocks + scratch + live f32 temporaries) ------
    bpe = jnp.dtype(compute_dtype).itemsize
    weight_bytes = ((ew.size + dw.size + wr.size + we.size + pw.size) * bpe
                    + (eb.size + db.size + br.size + be.size + pb.size) * 4)
    live_bytes = (H * W * Cexp_p * 4                    # expand output (f32)
                  + Ho * Wp * Cexp_p * bpe              # per-kh band (bf16)
                  + Ho * Wo * Cexp_p * (4 + 2 * bpe)    # acc f32 + tap + y_bf
                  + Ho * Wo * Cout_p * 4)               # projection out (f32)
    vmem_est = (2 * H * W * Cin_p * bpe                 # double-buffered input
                + 2 * Ho * Wo * Cout_p * bpe            # double-buffered output
                + Hp * Wp * Cexp_p * bpe                # padded-image scratch
                + live_bytes + 2 * weight_bytes)
    try:
        vmem_cap = pltpu.get_tpu_info().vmem_capacity_bytes
    except Exception:
        vmem_cap = 128 << 20
    vmem_limit = int(min(max(int(1.5 * vmem_est), 32 << 20), (vmem_cap * 3) // 4))

    flops = 2 * N * (H * W * Cin_p * Cexp_p
                     + Ho * Wo * K * K * Cexp_p
                     + Ho * Wo * Cexp_p                 # SE pooling matmul
                     + 2 * Cexp_p * Cse_p               # SE reduce/expand
                     + Cexp_p * Cout_p                  # SE fold into weights
                     + Ho * Wo * Cexp_p * Cout_p)
    transcendentals = N * (H * W * Cexp_p + Ho * Wo * Cexp_p + Cse_p + 2 * Cexp_p)
    bytes_accessed = int(x_in.size * bpe + N * Ho * Wo * Cout_p * bpe + weight_bytes)
    cost = pl.CostEstimate(flops=int(flops), transcendentals=int(transcendentals),
                           bytes_accessed=bytes_accessed)

    kernel = functools.partial(
        _mbconv_fused_kernel, K=K, stride=stride, H=H, W=W, Hp=Hp, Wp=Wp,
        Ho=Ho, Wo=Wo, pad=pad, expand=expand, use_skip=use_skip)

    out_nhwc = pl.pallas_call(
        kernel,
        out_shape=jax.ShapeDtypeStruct((N, Ho, Wo, Cout_p), compute_dtype),
        grid=(N,),
        in_specs=[
            pl.BlockSpec((1, H, W, Cin_p), lambda n: (n, 0, 0, 0)),   # x
            pl.BlockSpec((Cin_p, Cexp_p), lambda n: (0, 0)),          # expand w
            pl.BlockSpec((1, Cexp_p), lambda n: (0, 0)),              # expand b
            pl.BlockSpec((K, K, Cexp_p), lambda n: (0, 0, 0)),        # dw w
            pl.BlockSpec((1, Cexp_p), lambda n: (0, 0)),              # dw b
            pl.BlockSpec((Cexp_p, Cse_p), lambda n: (0, 0)),          # se reduce w
            pl.BlockSpec((1, Cse_p), lambda n: (0, 0)),               # se reduce b
            pl.BlockSpec((Cse_p, Cexp_p), lambda n: (0, 0)),          # se expand w
            pl.BlockSpec((1, Cexp_p), lambda n: (0, 0)),              # se expand b
            pl.BlockSpec((Cexp_p, Cout_p), lambda n: (0, 0)),         # proj w
            pl.BlockSpec((1, Cout_p), lambda n: (0, 0)),              # proj b
        ],
        out_specs=pl.BlockSpec((1, Ho, Wo, Cout_p), lambda n: (n, 0, 0, 0)),
        scratch_shapes=[pltpu.VMEM((Hp, Wp, Cexp_p), compute_dtype)],
        compiler_params=pltpu.CompilerParams(
            dimension_semantics=("parallel",),
            vmem_limit_bytes=vmem_limit),
        cost_estimate=cost,
    )(x_in, ew, eb, dw, db, wr, br, we, be, pw, pb)

    out = out_nhwc[..., :Cout].astype(jnp.float32)      # strip lane padding
    return jnp.transpose(out, (0, 3, 1, 2))             # back to NCHW, f32


# ----------------------------------------------------------------------------
# Deterministic parameter init (BN folded to scale/bias, eval semantics)
# ----------------------------------------------------------------------------
def init_params(key, Cin, Cout, K, expansion_factor, alpha, eps=1e-5):
    Cexp = int(Cin * expansion_factor)
    Cse = max(1, int(Cin * alpha))
    keys = jax.random.split(key, 10)

    def bn(k, C):
        k1, k2, k3, k4 = jax.random.split(k, 4)
        gamma = 1.0 + 0.1 * jax.random.normal(k1, (C,), jnp.float32)
        beta = 0.1 * jax.random.normal(k2, (C,), jnp.float32)
        mean = 0.1 * jax.random.normal(k3, (C,), jnp.float32)
        var = jax.random.uniform(k4, (C,), jnp.float32, 0.5, 1.5)
        scale = gamma / jnp.sqrt(var + eps)
        bias = beta - mean * scale
        return scale.reshape(1, C), bias.reshape(1, C)

    p = {}
    if expansion_factor > 1:
        p["expand_w"] = 0.1 * jax.random.normal(keys[0], (Cin, Cexp), jnp.float32)
        p["expand_scale"], p["expand_bias"] = bn(keys[1], Cexp)
    p["dw_w"] = 0.1 * jax.random.normal(keys[2], (K, K, Cexp), jnp.float32)
    p["dw_scale"], p["dw_bias"] = bn(keys[3], Cexp)
    p["se_wr"] = 0.1 * jax.random.normal(keys[4], (Cexp, Cse), jnp.float32)
    p["se_br"] = 0.1 * jax.random.normal(keys[5], (1, Cse), jnp.float32)
    p["se_we"] = 0.1 * jax.random.normal(keys[6], (Cse, Cexp), jnp.float32)
    p["se_be"] = 0.1 * jax.random.normal(keys[7], (1, Cexp), jnp.float32)
    p["proj_w"] = 0.1 * jax.random.normal(keys[8], (Cexp, Cout), jnp.float32)
    p["proj_scale"], p["proj_bias"] = bn(keys[9], Cout)
    return p


# ----------------------------------------------------------------------------
# Pure-JAX f32 reference (same semantics) for a correctness check
# ----------------------------------------------------------------------------
def mbconv_reference(x_nchw, params, *, kernel_size, stride, expansion_factor):
    x = jnp.transpose(x_nchw, (0, 2, 3, 1)).astype(jnp.float32)
    N, H, W, Cin = x.shape
    K = kernel_size
    pad = K // 2
    Cexp = params["dw_w"].shape[-1]
    Cout = params["proj_w"].shape[-1]
    use_skip = (stride == 1) and (Cin == Cout)
    silu = lambda v: v * jax.nn.sigmoid(v)

    y = x
    if expansion_factor > 1:
        y = jnp.einsum("nhwc,cd->nhwd", x, params["expand_w"])
        y = silu(y * params["expand_scale"].reshape(1, 1, 1, -1)
                 + params["expand_bias"].reshape(1, 1, 1, -1))

    dw_k = params["dw_w"].reshape(K, K, 1, Cexp)
    y = lax.conv_general_dilated(
        y, dw_k, window_strides=(stride, stride),
        padding=[(pad, pad), (pad, pad)],
        dimension_numbers=("NHWC", "HWIO", "NHWC"),
        feature_group_count=Cexp)
    y = silu(y * params["dw_scale"].reshape(1, 1, 1, -1)
             + params["dw_bias"].reshape(1, 1, 1, -1))

    pooled = jnp.mean(y, axis=(1, 2))                     # (N, Cexp)
    se = silu(pooled @ params["se_wr"] + params["se_br"])
    se = jax.nn.sigmoid(se @ params["se_we"] + params["se_be"])
    y = y * se[:, None, None, :]

    y = jnp.einsum("nhwc,cd->nhwd", y, params["proj_w"])
    y = (y * params["proj_scale"].reshape(1, 1, 1, -1)
         + params["proj_bias"].reshape(1, 1, 1, -1))
    if use_skip:
        y = y + x
    return jnp.transpose(y, (0, 3, 1, 2))


# ----------------------------------------------------------------------------
if __name__ == "__main__":
    N, Cin, H, W = 2, 8, 16, 16
    Cout = 8
    kernel_size = 3
    stride = 1                # use_skip path exercised (stride==1, Cin==Cout)
    expansion_factor = 4
    alpha = 0.25

    root = jax.random.PRNGKey(0)
    k_params, k_x = jax.random.split(root)
    params = init_params(k_params, Cin, Cout, kernel_size, expansion_factor, alpha)
    x = jax.random.normal(k_x, (N, Cin, H, W), jnp.float32)

    out = mbconv_forward(x, params, kernel_size=kernel_size, stride=stride,
                         expansion_factor=expansion_factor)
    out = jax.block_until_ready(out)

    ref = mbconv_reference(x, params, kernel_size=kernel_size, stride=stride,
                           expansion_factor=expansion_factor)

    assert out.shape == ref.shape == (N, Cout, H, W), (out.shape, ref.shape)
    # bf16 activations/weights/output in the kernel vs f32 reference.
    if not jnp.allclose(out, ref, atol=5e-2, rtol=5e-2):
        max_err = float(jnp.max(jnp.abs(out - ref)))
        raise AssertionError(f"mismatch vs reference, max abs err = {max_err}")

    print("KERNEL_OK")
</pallas_src>

<mosaic_0001>
module attributes {stable_mosaic.version = 11 : i64} {
  func.func @_mbconv_fused_kernel(%arg0: i32, %arg1: memref<1x16x16x128xbf16, #tpu.memory_space<vmem>>, %arg2: memref<128x128xbf16, #tpu.memory_space<vmem>>, %arg3: memref<1x128xf32, #tpu.memory_space<vmem>>, %arg4: memref<3x3x128xbf16, #tpu.memory_space<vmem>>, %arg5: memref<1x128xf32, #tpu.memory_space<vmem>>, %arg6: memref<128x128xbf16, #tpu.memory_space<vmem>>, %arg7: memref<1x128xf32, #tpu.memory_space<vmem>>, %arg8: memref<128x128xbf16, #tpu.memory_space<vmem>>, %arg9: memref<1x128xf32, #tpu.memory_space<vmem>>, %arg10: memref<128x128xbf16, #tpu.memory_space<vmem>>, %arg11: memref<1x128xf32, #tpu.memory_space<vmem>>, %arg12: memref<1x16x16x128xbf16, #tpu.memory_space<vmem>>, %arg13: memref<18x18x128xbf16, #tpu.memory_space<vmem>>) attributes {dimension_semantics = [#tpu.dimension_semantics<parallel>], iteration_bounds = array<i64: 2>, scalar_prefetch = 0 : i64, scratch_operands = 1 : i64, tpu.core_type = #tpu.core_type<tc>, window_params = [{transform_indices = @transform_0, window_bounds = array<i64: 1, 16, 16, 128>}, {pipeline_mode = #tpu.pipeline_mode<synchronous>, transform_indices = @transform_1, window_bounds = array<i64: 128, 128>}, {pipeline_mode = #tpu.pipeline_mode<synchronous>, transform_indices = @transform_2, window_bounds = array<i64: 1, 128>}, {pipeline_mode = #tpu.pipeline_mode<synchronous>, transform_indices = @transform_3, window_bounds = array<i64: 3, 3, 128>}, {pipeline_mode = #tpu.pipeline_mode<synchronous>, transform_indices = @transform_4, window_bounds = array<i64: 1, 128>}, {pipeline_mode = #tpu.pipeline_mode<synchronous>, transform_indices = @transform_5, window_bounds = array<i64: 128, 128>}, {pipeline_mode = #tpu.pipeline_mode<synchronous>, transform_indices = @transform_6, window_bounds = array<i64: 1, 128>}, {pipeline_mode = #tpu.pipeline_mode<synchronous>, transform_indices = @transform_7, window_bounds = array<i64: 128, 128>}, {pipeline_mode = #tpu.pipeline_mode<synchronous>, transform_indices = @transform_8, window_bounds = array<i64: 1, 128>}, {pipeline_mode = #tpu.pipeline_mode<synchronous>, transform_indices = @transform_9, window_bounds = array<i64: 128, 128>}, {pipeline_mode = #tpu.pipeline_mode<synchronous>, transform_indices = @transform_10, window_bounds = array<i64: 1, 128>}, {transform_indices = @transform_11, window_bounds = array<i64: 1, 16, 16, 128>}]} {
    %c0 = arith.constant 0 : index
    %c0_0 = arith.constant 0 : index
    %c0_1 = arith.constant 0 : index
    %c0_2 = arith.constant 0 : index
    %0 = vector.load %arg1[%c0, %c0_0, %c0_1, %c0_2] : memref<1x16x16x128xbf16, #tpu.memory_space<vmem>>, vector<1x16x16x128xbf16>
    %1 = vector.shape_cast %0 : vector<1x16x16x128xbf16> to vector<16x16x128xbf16>
    %2 = vector.shape_cast %1 : vector<16x16x128xbf16> to vector<256x128xbf16>
    %c0_3 = arith.constant 0 : index
    %c0_4 = arith.constant 0 : index
    %3 = vector.load %arg2[%c0_3, %c0_4] : memref<128x128xbf16, #tpu.memory_space<vmem>>, vector<128x128xbf16>
    %cst = arith.constant dense<0.000000e+00> : vector<256x128xf32>
    %4 = tpu.matmul %2, %3, %cst {dimension_numbers = #tpu.dot_dimension_numbers<[1], [0], [0], [1], [0, 0, 1, 1], [], []>} : vector<256x128xbf16>, vector<128x128xbf16>, vector<256x128xf32> -> vector<256x128xf32>
    %c0_5 = arith.constant 0 : index
    %c0_6 = arith.constant 0 : index
    %5 = vector.load %arg3[%c0_5, %c0_6] : memref<1x128xf32, #tpu.memory_space<vmem>>, vector<1x128xf32>
    %6 = vector.broadcast %5 : vector<1x128xf32> to vector<256x128xf32>
    %7 = arith.addf %4, %6 : vector<256x128xf32>
    %8 = arith.negf %7 : vector<256x128xf32>
    %9 = math.exp %8 : vector<256x128xf32>
    %cst_7 = arith.constant 1.000000e+00 : f32
    %10 = vector.broadcast %cst_7 : f32 to vector<256x128xf32>
    %11 = arith.addf %10, %9 : vector<256x128xf32>
    %12 = arith.divf %10, %11 : vector<256x128xf32>
    %13 = arith.mulf %7, %12 : vector<256x128xf32>
    %14 = arith.truncf %13 : vector<256x128xf32> to vector<256x128xbf16>
    %15 = vector.shape_cast %14 : vector<256x128xbf16> to vector<16x16x128xbf16>
    %cst_8 = arith.constant 0.000000e+00 : bf16
    %16 = vector.broadcast %cst_8 : bf16 to vector<1x18x128xbf16>
    %c0_9 = arith.constant 0 : index
    %c0_10 = arith.constant 0 : index
    %c0_11 = arith.constant 0 : index
    %17 = vector.load %arg13[%c0_9, %c0_10, %c0_11] : memref<18x18x128xbf16, #tpu.memory_space<vmem>>, vector<1x18x128xbf16>
    tpu.vector_store %arg13[%c0_9, %c0_10, %c0_11], %16 {strides = array<i32>} : memref<18x18x128xbf16, #tpu.memory_space<vmem>>, vector<1x18x128xbf16>,
    %c17 = arith.constant 17 : index
    %c0_12 = arith.constant 0 : index
    %c0_13 = arith.constant 0 : index
    %18 = vector.load %arg13[%c17, %c0_12, %c0_13] : memref<18x18x128xbf16, #tpu.memory_space<vmem>>, vector<1x18x128xbf16>
    tpu.vector_store %arg13[%c17, %c0_12, %c0_13], %16 {strides = array<i32>} : memref<18x18x128xbf16, #tpu.memory_space<vmem>>, vector<1x18x128xbf16>,
    %cst_14 = arith.constant 0.000000e+00 : bf16
    %19 = vector.broadcast %cst_14 : bf16 to vector<16x1x128xbf16>
    %c1 = arith.constant 1 : index
    %c0_15 = arith.constant 0 : index
    %c0_16 = arith.constant 0 : index
    %20 = vector.load %arg13[%c1, %c0_15, %c0_16] : memref<18x18x128xbf16, #tpu.memory_space<vmem>>, vector<16x1x128xbf16>
    tpu.vector_store %arg13[%c1, %c0_15, %c0_16], %19 {strides = array<i32>} : memref<18x18x128xbf16, #tpu.memory_space<vmem>>, vector<16x1x128xbf16>,
    %c1_17 = arith.constant 1 : index
    %c17_18 = arith.constant 17 : index
    %c0_19 = arith.constant 0 : index
    %21 = vector.load %arg13[%c1_17, %c17_18, %c0_19] : memref<18x18x128xbf16, #tpu.memory_space<vmem>>, vector<16x1x128xbf16>
    tpu.vector_store %arg13[%c1_17, %c17_18, %c0_19], %19 {strides = array<i32>} : memref<18x18x128xbf16, #tpu.memory_space<vmem>>, vector<16x1x128xbf16>,
    %c1_20 = arith.constant 1 : index
    %c1_21 = arith.constant 1 : index
    %c0_22 = arith.constant 0 : index
    %22 = vector.load %arg13[%c1_20, %c1_21, %c0_22] : memref<18x18x128xbf16, #tpu.memory_space<vmem>>, vector<16x16x128xbf16>
    tpu.vector_store %arg13[%c1_20, %c1_21, %c0_22], %15 {strides = array<i32>} : memref<18x18x128xbf16, #tpu.memory_space<vmem>>, vector<16x16x128xbf16>,
    %c0_23 = arith.constant 0 : index
    %c0_24 = arith.constant 0 : index
    %c0_25 = arith.constant 0 : index
    %23 = vector.load %arg4[%c0_23, %c0_24, %c0_25] : memref<3x3x128xbf16, #tpu.memory_space<vmem>>, vector<3x3x128xbf16>
    %c0_26 = arith.constant 0 : index
    %c0_27 = arith.constant 0 : index
    %c0_28 = arith.constant 0 : index
    %24 = vector.load %arg13[%c0_26, %c0_27, %c0_28] : memref<18x18x128xbf16, #tpu.memory_space<vmem>>, vector<16x18x128xbf16>
    %25 = vector.extract_strided_slice %24 {offsets = [0, 0, 0], sizes = [16, 16, 128], strides = [1, 1, 1]} : vector<16x18x128xbf16> to vector<16x16x128xbf16>
    %26 = vector.extract_strided_slice %23 {offsets = [0, 0, 0], sizes = [1, 1, 128], strides = [1, 1, 1]} : vector<3x3x128xbf16> to vector<1x1x128xbf16>
    %27 = vector.shape_cast %26 : vector<1x1x128xbf16> to vector<128xbf16>
    %28 = vector.shape_cast %27 : vector<128xbf16> to vector<1x1x128xbf16>
    %29 = vector.broadcast %28 : vector<1x1x128xbf16> to vector<16x16x128xbf16>
    %30 = arith.mulf %25, %29 : vector<16x16x128xbf16>
    %31 = arith.extf %30 : vector<16x16x128xbf16> to vector<16x16x128xf32>
    %32 = vector.extract_strided_slice %24 {offsets = [0, 1, 0], sizes = [16, 16, 128], strides = [1, 1, 1]} : vector<16x18x128xbf16> to vector<16x16x128xbf16>
    %33 = vector.extract_strided_slice %23 {offsets = [0, 1, 0], sizes = [1, 1, 128], strides = [1, 1, 1]} : vector<3x3x128xbf16> to vector<1x1x128xbf16>
    %34 = vector.shape_cast %33 : vector<1x1x128xbf16> to vector<128xbf16>
    %35 = vector.shape_cast %34 : vector<128xbf16> to vector<1x1x128xbf16>
    %36 = vector.broadcast %35 : vector<1x1x128xbf16> to vector<16x16x128xbf16>
    %37 = arith.mulf %32, %36 : vector<16x16x128xbf16>
    %38 = arith.extf %37 : vector<16x16x128xbf16> to vector<16x16x128xf32>
    %39 = arith.addf %31, %38 : vector<16x16x128xf32>
    %40 = vector.extract_strided_slice %24 {offsets = [0, 2, 0], sizes = [16, 16, 128], strides = [1, 1, 1]} : vector<16x18x128xbf16> to vector<16x16x128xbf16>
    %41 = vector.extract_strided_slice %23 {offsets = [0, 2, 0], sizes = [1, 1, 128], strides = [1, 1, 1]} : vector<3x3x128xbf16> to vector<1x1x128xbf16>
    %42 = vector.shape_cast %41 : vector<1x1x128xbf16> to vector<128xbf16>
    %43 = vector.shape_cast %42 : vector<128xbf16> to vector<1x1x128xbf16>
    %44 = vector.broadcast %43 : vector<1x1x128xbf16> to vector<16x16x128xbf16>
    %45 = arith.mulf %40, %44 : vector<16x16x128xbf16>
    %46 = arith.extf %45 : vector<16x16x128xbf16> to vector<16x16x128xf32>
    %47 = arith.addf %39, %46 : vector<16x16x128xf32>
    %c1_29 = arith.constant 1 : index
    %c0_30 = arith.constant 0 : index
    %c0_31 = arith.constant 0 : index
    %48 = vector.load %arg13[%c1_29, %c0_30, %c0_31] : memref<18x18x128xbf16, #tpu.memory_space<vmem>>, vector<16x18x128xbf16>
    %49 = vector.extract_strided_slice %48 {offsets = [0, 0, 0], sizes = [16, 16, 128], strides = [1, 1, 1]} : vector<16x18x128xbf16> to vector<16x16x128xbf16>
    %50 = vector.extract_strided_slice %23 {offsets = [1, 0, 0], sizes = [1, 1, 128], strides = [1, 1, 1]} : vector<3x3x128xbf16> to vector<1x1x128xbf16>
    %51 = vector.shape_cast %50 : vector<1x1x128xbf16> to vector<128xbf16>
    %52 = vector.shape_cast %51 : vector<128xbf16> to vector<1x1x128xbf16>
    %53 = vector.broadcast %52 : vector<1x1x128xbf16> to vector<16x16x128xbf16>
    %54 = arith.mulf %49, %53 : vector<16x16x128xbf16>
    %55 = arith.extf %54 : vector<16x16x128xbf16> to vector<16x16x128xf32>
    %56 = arith.addf %47, %55 : vector<16x16x128xf32>
    %57 = vector.extract_strided_slice %48 {offsets = [0, 1, 0], sizes = [16, 16, 128], strides = [1, 1, 1]} : vector<16x18x128xbf16> to vector<16x16x128xbf16>
    %58 = vector.extract_strided_slice %23 {offsets = [1, 1, 0], sizes = [1, 1, 128], strides = [1, 1, 1]} : vector<3x3x128xbf16> to vector<1x1x128xbf16>
    %59 = vector.shape_cast %58 : vector<1x1x128xbf16> to vector<128xbf16>
    %60 = vector.shape_cast %59 : vector<128xbf16> to vector<1x1x128xbf16>
    %61 = vector.broadcast %60 : vector<1x1x128xbf16> to vector<16x16x128xbf16>
    %62 = arith.mulf %57, %61 : vector<16x16x128xbf16>
    %63 = arith.extf %62 : vector<16x16x128xbf16> to vector<16x16x128xf32>
    %64 = arith.addf %56, %63 : vector<16x16x128xf32>
    %65 = vector.extract_strided_slice %48 {offsets = [0, 2, 0], sizes = [16, 16, 128], strides = [1, 1, 1]} : vector<16x18x128xbf16> to vector<16x16x128xbf16>
    %66 = vector.extract_strided_slice %23 {offsets = [1, 2, 0], sizes = [1, 1, 128], strides = [1, 1, 1]} : vector<3x3x128xbf16> to vector<1x1x128xbf16>
    %67 = vector.shape_cast %66 : vector<1x1x128xbf16> to vector<128xbf16>
    %68 = vector.shape_cast %67 : vector<128xbf16> to vector<1x1x128xbf16>
    %69 = vector.broadcast %68 : vector<1x1x128xbf16> to vector<16x16x128xbf16>
    %70 = arith.mulf %65, %69 : vector<16x16x128xbf16>
    %71 = arith.extf %70 : vector<16x16x128xbf16> to vector<16x16x128xf32>
    %72 = arith.addf %64, %71 : vector<16x16x128xf32>
    %c2 = arith.constant 2 : index
    %c0_32 = arith.constant 0 : index
    %c0_33 = arith.constant 0 : index
    %73 = vector.load %arg13[%c2, %c0_32, %c0_33] : memref<18x18x128xbf16, #tpu.memory_space<vmem>>, vector<16x18x128xbf16>
    %74 = vector.extract_strided_slice %73 {offsets = [0, 0, 0], sizes = [16, 16, 128], strides = [1, 1, 1]} : vector<16x18x128xbf16> to vector<16x16x128xbf16>
    %75 = vector.extract_strided_slice %23 {offsets = [2, 0, 0], sizes = [1, 1, 128], strides = [1, 1, 1]} : vector<3x3x128xbf16> to vector<1x1x128xbf16>
    %76 = vector.shape_cast %75 : vector<1x1x128xbf16> to vector<128xbf16>
    %77 = vector.shape_cast %76 : vector<128xbf16> to vector<1x1x128xbf16>
    %78 = vector.broadcast %77 : vector<1x1x128xbf16> to vector<16x16x128xbf16>
    %79 = arith.mulf %74, %78 : vector<16x16x128xbf16>
    %80 = arith.extf %79 : vector<16x16x128xbf16> to vector<16x16x128xf32>
    %81 = arith.addf %72, %80 : vector<16x16x128xf32>
    %82 = vector.extract_strided_slice %73 {offsets = [0, 1, 0], sizes = [16, 16, 128], strides = [1, 1, 1]} : vector<16x18x128xbf16> to vector<16x16x128xbf16>
    %83 = vector.extract_strided_slice %23 {offsets = [2, 1, 0], sizes = [1, 1, 128], strides = [1, 1, 1]} : vector<3x3x128xbf16> to vector<1x1x128xbf16>
    %84 = vector.shape_cast %83 : vector<1x1x128xbf16> to vector<128xbf16>
    %85 = vector.shape_cast %84 : vector<128xbf16> to vector<1x1x128xbf16>
    %86 = vector.broadcast %85 : vector<1x1x128xbf16> to vector<16x16x128xbf16>
    %87 = arith.mulf %82, %86 : vector<16x16x128xbf16>
    %88 = arith.extf %87 : vector<16x16x128xbf16> to vector<16x16x128xf32>
    %89 = arith.addf %81, %88 : vector<16x16x128xf32>
    %90 = vector.extract_strided_slice %73 {offsets = [0, 2, 0], sizes = [16, 16, 128], strides = [1, 1, 1]} : vector<16x18x128xbf16> to vector<16x16x128xbf16>
    %91 = vector.extract_strided_slice %23 {offsets = [2, 2, 0], sizes = [1, 1, 128], strides = [1, 1, 1]} : vector<3x3x128xbf16> to vector<1x1x128xbf16>
    %92 = vector.shape_cast %91 : vector<1x1x128xbf16> to vector<128xbf16>
    %93 = vector.shape_cast %92 : vector<128xbf16> to vector<1x1x128xbf16>
    %94 = vector.broadcast %93 : vector<1x1x128xbf16> to vector<16x16x128xbf16>
    %95 = arith.mulf %90, %94 : vector<16x16x128xbf16>
    %96 = arith.extf %95 : vector<16x16x128xbf16> to vector<16x16x128xf32>
    %97 = arith.addf %89, %96 : vector<16x16x128xf32>
    %c0_34 = arith.constant 0 : index
    %c0_35 = arith.constant 0 : index
    %98 = vector.load %arg5[%c0_34, %c0_35] : memref<1x128xf32, #tpu.memory_space<vmem>>, vector<1x128xf32>
    %99 = vector.shape_cast %98 : vector<1x128xf32> to vector<1x1x128xf32>
    %100 = vector.broadcast %99 : vector<1x1x128xf32> to vector<16x16x128xf32>
    %101 = arith.addf %97, %100 : vector<16x16x128xf32>
    %102 = arith.negf %101 : vector<16x16x128xf32>
    %103 = math.exp %102 : vector<16x16x128xf32>
    %cst_36 = arith.constant 1.000000e+00 : f32
    %104 = vector.broadcast %cst_36 : f32 to vector<16x16x128xf32>
    %105 = arith.addf %104, %103 : vector<16x16x128xf32>
    %106 = arith.divf %104, %105 : vector<16x16x128xf32>
    %107 = arith.mulf %101, %106 : vector<16x16x128xf32>
    %108 = arith.truncf %107 : vector<16x16x128xf32> to vector<16x16x128xbf16>
    %109 = vector.shape_cast %108 : vector<16x16x128xbf16> to vector<256x128xbf16>
    %cst_37 = arith.constant 1.000000e+00 : bf16
    %110 = vector.broadcast %cst_37 : bf16 to vector<1x256xbf16>
    %cst_38 = arith.constant dense<0.000000e+00> : vector<1x128xf32>
    %111 = tpu.matmul %110, %109, %cst_38 {dimension_numbers = #tpu.dot_dimension_numbers<[1], [0], [0], [1], [0, 0, 1, 1], [], []>} : vector<1x256xbf16>, vector<256x128xbf16>, vector<1x128xf32> -> vector<1x128xf32>
    %cst_39 = arith.constant 3.906250e-03 : f32
    %112 = vector.broadcast %cst_39 : f32 to vector<1x128xf32>
    %113 = arith.mulf %111, %112 : vector<1x128xf32>
    %114 = arith.truncf %113 : vector<1x128xf32> to vector<1x128xbf16>
    %c0_40 = arith.constant 0 : index
    %c0_41 = arith.constant 0 : index
    %115 = vector.load %arg6[%c0_40, %c0_41] : memref<128x128xbf16, #tpu.memory_space<vmem>>, vector<128x128xbf16>
    %cst_42 = arith.constant dense<0.000000e+00> : vector<1x128xf32>
    %116 = tpu.matmul %114, %115, %cst_42 {dimension_numbers = #tpu.dot_dimension_numbers<[1], [0], [0], [1], [0, 0, 1, 1], [], []>} : vector<1x128xbf16>, vector<128x128xbf16>, vector<1x128xf32> -> vector<1x128xf32>
    %c0_43 = arith.constant 0 : index
    %c0_44 = arith.constant 0 : index
    %117 = vector.load %arg7[%c0_43, %c0_44] : memref<1x128xf32, #tpu.memory_space<vmem>>, vector<1x128xf32>
    %118 = arith.addf %116, %117 : vector<1x128xf32>
    %119 = arith.negf %118 : vector<1x128xf32>
    %120 = math.exp %119 : vector<1x128xf32>
    %cst_45 = arith.constant 1.000000e+00 : f32
    %121 = vector.broadcast %cst_45 : f32 to vector<1x128xf32>
    %122 = arith.addf %121, %120 : vector<1x128xf32>
    %123 = arith.divf %121, %122 : vector<1x128xf32>
    %124 = arith.mulf %118, %123 : vector<1x128xf32>
    %125 = arith.truncf %124 : vector<1x128xf32> to vector<1x128xbf16>
    %c0_46 = arith.constant 0 : index
    %c0_47 = arith.constant 0 : index
    %126 = vector.load %arg8[%c0_46, %c0_47] : memref<128x128xbf16, #tpu.memory_space<vmem>>, vector<128x128xbf16>
    %cst_48 = arith.constant dense<0.000000e+00> : vector<1x128xf32>
    %127 = tpu.matmul %125, %126, %cst_48 {dimension_numbers = #tpu.dot_dimension_numbers<[1], [0], [0], [1], [0, 0, 1, 1], [], []>} : vector<1x128xbf16>, vector<128x128xbf16>, vector<1x128xf32> -> vector<1x128xf32>
    %c0_49 = arith.constant 0 : index
    %c0_50 = arith.constant 0 : index
    %128 = vector.load %arg9[%c0_49, %c0_50] : memref<1x128xf32, #tpu.memory_space<vmem>>, vector<1x128xf32>
    %129 = arith.addf %127, %128 : vector<1x128xf32>
    %130 = arith.negf %129 : vector<1x128xf32>
    %131 = math.exp %130 : vector<1x128xf32>
    %cst_51 = arith.constant 1.000000e+00 : f32
    %132 = vector.broadcast %cst_51 : f32 to vector<1x128xf32>
    %133 = arith.addf %132, %131 : vector<1x128xf32>
    %134 = arith.divf %132, %133 : vector<1x128xf32>
    %c0_52 = arith.constant 0 : index
    %c0_53 = arith.constant 0 : index
    %135 = vector.load %arg10[%c0_52, %c0_53] : memref<128x128xbf16, #tpu.memory_space<vmem>>, vector<128x128xbf16>
    %136 = tpu.transpose %134, [1, 0] : vector<1x128xf32> -> vector<128x1xf32>
    %137 = arith.truncf %136 : vector<128x1xf32> to vector<128x1xbf16>
    %138 = vector.broadcast %137 : vector<128x1xbf16> to vector<128x128xbf16>
    %139 = arith.mulf %135, %138 : vector<128x128xbf16>
    %cst_54 = arith.constant dense<0.000000e+00> : vector<256x128xf32>
    %140 = tpu.matmul %109, %139, %cst_54 {dimension_numbers = #tpu.dot_dimension_numbers<[1], [0], [0], [1], [0, 0, 1, 1], [], []>} : vector<256x128xbf16>, vector<128x128xbf16>, vector<256x128xf32> -> vector<256x128xf32>
    %c0_55 = arith.constant 0 : index
    %c0_56 = arith.constant 0 : index
    %141 = vector.load %arg11[%c0_55, %c0_56] : memref<1x128xf32, #tpu.memory_space<vmem>>, vector<1x128xf32>
    %142 = vector.broadcast %141 : vector<1x128xf32> to vector<256x128xf32>
    %143 = arith.addf %140, %142 : vector<256x128xf32>
    %144 = arith.extf %2 : vector<256x128xbf16> to vector<256x128xf32>
    %145 = arith.addf %143, %144 : vector<256x128xf32>
    %146 = arith.truncf %145 : vector<256x128xf32> to vector<256x128xbf16>
    %147 = vector.shape_cast %146 : vector<256x128xbf16> to vector<16x16x128xbf16>
    %c0_57 = arith.constant 0 : index
    %c0_58 = arith.constant 0 : index
    %c0_59 = arith.constant 0 : index
    %c0_60 = arith.constant 0 : index
    %148 = vector.load %arg12[%c0_57, %c0_58, %c0_59, %c0_60] : memref<1x16x16x128xbf16, #tpu.memory_space<vmem>>, vector<1x16x16x128xbf16>
    %149 = vector.shape_cast %148 : vector<1x16x16x128xbf16> to vector<16x16x128xbf16>
    %150 = vector.shape_cast %147 : vector<16x16x128xbf16> to vector<1x16x16x128xbf16>
    tpu.vector_store %arg12[%c0_57, %c0_58, %c0_59, %c0_60], %150 {strides = array<i32>} : memref<1x16x16x128xbf16, #tpu.memory_space<vmem>>, vector<1x16x16x128xbf16>,
    return
  }
  func.func @transform_0(%arg0: i32) -> (i32, i32, i32, i32) {
    %c0_i32 = arith.constant 0 : i32
    %c0_i32_0 = arith.constant 0 : i32
    %c0_i32_1 = arith.constant 0 : i32
    %c0_i32_2 = arith.constant 0 : i32
    return %arg0, %c0_i32, %c0_i32_0, %c0_i32_1 : i32, i32, i32, i32
  }
  func.func @transform_1(%arg0: i32) -> (i32, i32) {
    %c0_i32 = arith.constant 0 : i32
    %c0_i32_0 = arith.constant 0 : i32
    %c0_i32_1 = arith.constant 0 : i32
    return %c0_i32, %c0_i32_0 : i32, i32
  }
  func.func @transform_2(%arg0: i32) -> (i32, i32) {
    %c0_i32 = arith.constant 0 : i32
    %c0_i32_0 = arith.constant 0 : i32
    %c0_i32_1 = arith.constant 0 : i32
    return %c0_i32, %c0_i32_0 : i32, i32
  }
  func.func @transform_3(%arg0: i32) -> (i32, i32, i32) {
    %c0_i32 = arith.constant 0 : i32
    %c0_i32_0 = arith.constant 0 : i32
    %c0_i32_1 = arith.constant 0 : i32
    %c0_i32_2 = arith.constant 0 : i32
    return %c0_i32, %c0_i32_0, %c0_i32_1 : i32, i32, i32
  }
  func.func @transform_4(%arg0: i32) -> (i32, i32) {
    %c0_i32 = arith.constant 0 : i32
    %c0_i32_0 = arith.constant 0 : i32
    %c0_i32_1 = arith.constant 0 : i32
    return %c0_i32, %c0_i32_0 : i32, i32
  }
  func.func @transform_5(%arg0: i32) -> (i32, i32) {
    %c0_i32 = arith.constant 0 : i32
    %c0_i32_0 = arith.constant 0 : i32
    %c0_i32_1 = arith.constant 0 : i32
    return %c0_i32, %c0_i32_0 : i32, i32
  }
  func.func @transform_6(%arg0: i32) -> (i32, i32) {
    %c0_i32 = arith.constant 0 : i32
    %c0_i32_0 = arith.constant 0 : i32
    %c0_i32_1 = arith.constant 0 : i32
    return %c0_i32, %c0_i32_0 : i32, i32
  }
  func.func @transform_7(%arg0: i32) -> (i32, i32) {
    %c0_i32 = arith.constant 0 : i32
    %c0_i32_0 = arith.constant 0 : i32
    %c0_i32_1 = arith.constant 0 : i32
    return %c0_i32, %c0_i32_0 : i32, i32
  }
  func.func @transform_8(%arg0: i32) -> (i32, i32) {
    %c0_i32 = arith.constant 0 : i32
    %c0_i32_0 = arith.constant 0 : i32
    %c0_i32_1 = arith.constant 0 : i32
    return %c0_i32, %c0_i32_0 : i32, i32
  }
  func.func @transform_9(%arg0: i32) -> (i32, i32) {
    %c0_i32 = arith.constant 0 : i32
    %c0_i32_0 = arith.constant 0 : i32
    %c0_i32_1 = arith.constant 0 : i32
    return %c0_i32, %c0_i32_0 : i32, i32
  }
  func.func @transform_10(%arg0: i32) -> (i32, i32) {
    %c0_i32 = arith.constant 0 : i32
    %c0_i32_0 = arith.constant 0 : i32
    %c0_i32_1 = arith.constant 0 : i32
    return %c0_i32, %c0_i32_0 : i32, i32
  }
  func.func @transform_11(%arg0: i32) -> (i32, i32, i32, i32) {
    %c0_i32 = arith.constant 0 : i32
    %c0_i32_0 = arith.constant 0 : i32
    %c0_i32_1 = arith.constant 0 : i32
    %c0_i32_2 = arith.constant 0 : i32
    return %arg0, %c0_i32, %c0_i32_0, %c0_i32_1 : i32, i32, i32, i32
  }
}

</mosaic_0001>

<llo_original>
// kernel: tpu_custom_call.1
$region0: #{tpu_custom_call.1}
  #allocation0 [shape = 'u32[]', space=smem, size = 0x4, offset = 0x4, fixed_abs, tag = 'smem constant byte address 0x4 - core index']
  #allocation1 [shape = 'u32[144,128]{1,0:T(1,128)}', space=vmem, size = 0x12000, scoped, tag = 'internal scratch']
  #allocation2 [shape = 'bf16[18,18,128]{2,1,0:T(8,128)(2,1)}', space=vmem, size = 0x1b000, scoped, tag = 'scratch operand']
  %s0 = inlined_call_operand.hbm [shape: bf16[2,16,16,128], index: 0, kind: input, shape index: {}]
  %s1 = inlined_call_operand.hbm [shape: bf16[128,128], index: 1, kind: input, shape index: {}]
  %s2 = inlined_call_operand.vmem [shape: f32[1,128], index: 2, kind: input, shape index: {}]
  %s3 = inlined_call_operand.hbm [shape: bf16[3,3,128], index: 3, kind: input, shape index: {}]
  %s4 = inlined_call_operand.vmem [shape: f32[1,128], index: 4, kind: input, shape index: {}]
  %s5 = inlined_call_operand.hbm [shape: bf16[128,128], index: 5, kind: input, shape index: {}]
  %s6 = inlined_call_operand.vmem [shape: f32[1,128], index: 6, kind: input, shape index: {}]
  %s7 = inlined_call_operand.hbm [shape: bf16[128,128], index: 7, kind: input, shape index: {}]
  %s8 = inlined_call_operand.vmem [shape: f32[1,128], index: 8, kind: input, shape index: {}]
  %s9 = inlined_call_operand.hbm [shape: bf16[128,128], index: 9, kind: input, shape index: {}]
  %s10 = inlined_call_operand.vmem [shape: f32[1,128], index: 10, kind: input, shape index: {}]
  %s11 = inlined_call_operand.hbm [shape: bf16[2,16,16,128], index: 11, kind: output, shape index: {}]
  %s12 = sld [smem:[#allocation0]]
  $region101: #{tpu_custom_call.1} parent=0
    _
  %s14 = ssub.s32 1, %s12
  %s15 = scalar_select 0, %s14, %s12
  $region1: #{tpu_custom_call.1} parent=0
    #allocation3 [shape = 'u8[131072]{0}', space=vmem, size = 0x20000, scoped, tag = 'input window, operand 0']
    #allocation4 [shape = 's32[2]{0}', space=sflag, size = 0x8, scoped, tag = 'scoped memory for tpu_custom_call.1']
    #allocation5 [shape = 's32[2]{0}', space=sflag, size = 0x8, scoped, tag = 'scoped memory for tpu_custom_call.1']
    #allocation6 [shape = 'u8[32768]{0}', space=vmem, size = 0x8000, scoped, tag = 'input window, operand 1, single buffered']
    #allocation7 [shape = 's32[1]{0}', space=sflag, size = 0x4, scoped, tag = 'scoped memory for tpu_custom_call.1']
    #allocation8 [shape = 'u8[3072]{0}', space=vmem, size = 0xc00, scoped, tag = 'input window, operand 3, single buffered']
    #allocation9 [shape = 'u8[32768]{0}', space=vmem, size = 0x8000, scoped, tag = 'input window, operand 5, single buffered']
    #allocation10 [shape = 's32[1]{0}', space=sflag, size = 0x4, scoped, tag = 'scoped memory for tpu_custom_call.1']
    #allocation11 [shape = 'u8[32768]{0}', space=vmem, size = 0x8000, scoped, tag = 'input window, operand 7, single buffered']
    #allocation12 [shape = 'u8[32768]{0}', space=vmem, size = 0x8000, scoped, tag = 'input window, operand 9, single buffered']
    #allocation13 [shape = 's32[1]{0}', space=sflag, size = 0x4, scoped, tag = 'scoped memory for tpu_custom_call.1']
    #allocation14 [shape = 'u8[131072]{0}', space=vmem, size = 0x20000, scoped, tag = 'output window, operand 0']
    %16 = vsyncpa [#allocation4], 0
    %s17 = scalar_lea.sflag [#allocation4], 1
    %18 = vsyncpa %s17, 0
    %19 = vsyncpa [#allocation7], 0
    %20 = vsyncpa [#allocation10], 0
    %21 = vsyncpa [#allocation13], 0
    %22 = vsyncpa [#allocation5], 0
    %s23 = scalar_lea.sflag [#allocation5], 1
    %24 = vsyncpa %s23, 0
    loop: start=0, step=1, limit=4
    $region2: #{tpu_custom_call.1} parent=1 // loop_pre_header
      _
    $region3: #{tpu_custom_call.1} parent=1 // loop_header
      %s26 = sphi 0, %s30
      %p27 = scmp.ge.s32.totalorder %s26, 4
      %s36 = sphi 0, %s38
      %s39 = sphi 0, %s36
      %s40 = sphi 0, %s39
      %s56 = sphi 0, %s40
      %s60 = sphi 0, %s60
      %s62 = sphi 0, %s60
      %s63 = sphi 0, %s62
      %s77 = sphi 0, %s63
      %s81 = sphi 0, %s81
      %s83 = sphi 0, %s81
      %s84 = sphi 0, %s83
      %s98 = sphi 0, %s84
      %s102 = sphi 0, %s102
      %s104 = sphi 0, %s102
      %s105 = sphi 0, %s104
      %s119 = sphi 0, %s105
      %s123 = sphi 0, %s123
      %s125 = sphi 0, %s123
      %s126 = sphi 0, %s125
      %s140 = sphi 0, %s126
      %s144 = sphi 0, %s144
      %s146 = sphi 0, %s144
      %s147 = sphi 0, %s146
      %s161 = sphi 0, %s147
      %s165 = sphi 0, %s165
      %s167 = sphi 0, %s165
      %s168 = sphi 0, %s167
      %s182 = sphi 0, %s168
      %s186 = sphi 0, %s186
      %s188 = sphi 0, %s186
      %s189 = sphi 0, %s188
      %s203 = sphi 0, %s189
      %s207 = sphi 0, %s207
      %s209 = sphi 0, %s207
      %s210 = sphi 0, %s209
      %s224 = sphi 0, %s210
      %s228 = sphi 0, %s228
      %s230 = sphi 0, %s228
      %s231 = sphi 0, %s230
      %s245 = sphi 0, %s231
      %s249 = sphi 0, %s249
      %s251 = sphi 0, %s249
      %s252 = sphi 0, %s251
      %s266 = sphi 0, %s252
      %s272 = sphi 0, %s274
      %s275 = sphi 0, %s272
      %s276 = sphi 0, %s275
      %s292 = sphi 0, %s276
    $region4: #{tpu_custom_call.1} parent=1 // loop_header_branch
      %29 = sbr.rel (%p27) target = $region8
    $region5: #{tpu_custom_call.1} parent=1 // loop_body
      %s31 = ssub.s32 %s26, 1
      %s32 = ssub.s32 %s26, 2
      %s33 = sadd.s32 %s26, 1
      %s34 = ssub.s32 %s26, %s33
      %p35 = scmp.eq.s32.totalorder %s34, 0
      %s37 = sadd.s32 %s36, 1
      %s38 = scalar_select %p35, %s36, %s37
      %p41 = pneg %p35
      %p42 = scmp.eq.s32.totalorder %s26, 1
      %p43 = por %p41, %p42
      %p44 = scmp.ne.s32.totalorder %s36, %s39
      %p45 = scmp.eq.s32.totalorder %s26, 0
      %p46 = por %p44, %p45
      %p47 = scmp.ne.s32.totalorder %s36, %s39
      %p48 = scmp.eq.s32.totalorder %s31, 1
      %p49 = por %p47, %p48
      %p50 = scmp.ne.s32.totalorder %s39, %s40
      %p51 = scmp.eq.s32.totalorder %s31, 0
      %p52 = por %p50, %p51
      %p53 = scmp.ne.s32.totalorder %s39, %s40
      %p54 = scmp.eq.s32.totalorder %s32, 1
      %p55 = por %p53, %p54
      %p57 = scmp.ne.s32.totalorder %s40, %s56
      %p58 = scmp.eq.s32.totalorder %s32, 0
      %p59 = por %p57, %p58
      %s61 = sadd.s32 %s60, 1
      %p64 = scmp.eq.s32.totalorder %s26, 1
      %p65 = scmp.ne.s32.totalorder %s60, %s62
      %p66 = scmp.eq.s32.totalorder %s26, 0
      %p67 = por %p65, %p66
      %p68 = scmp.ne.s32.totalorder %s60, %s62
      %p69 = scmp.eq.s32.totalorder %s31, 1
      %p70 = por %p68, %p69
      %p71 = scmp.ne.s32.totalorder %s62, %s63
      %p72 = scmp.eq.s32.totalorder %s31, 0
      %p73 = por %p71, %p72
      %p74 = scmp.ne.s32.totalorder %s62, %s63
      %p75 = scmp.eq.s32.totalorder %s32, 1
      %p76 = por %p74, %p75
      %p78 = scmp.ne.s32.totalorder %s63, %s77
      %p79 = scmp.eq.s32.totalorder %s32, 0
      %p80 = por %p78, %p79
      %s82 = sadd.s32 %s81, 1
      %p85 = scmp.eq.s32.totalorder %s26, 1
      %p86 = scmp.ne.s32.totalorder %s81, %s83
      %p87 = scmp.eq.s32.totalorder %s26, 0
      %p88 = por %p86, %p87
      %p89 = scmp.ne.s32.totalorder %s81, %s83
      %p90 = scmp.eq.s32.totalorder %s31, 1
      %p91 = por %p89, %p90
      %p92 = scmp.ne.s32.totalorder %s83, %s84
      %p93 = scmp.eq.s32.totalorder %s31, 0
      %p94 = por %p92, %p93
      %p95 = scmp.ne.s32.totalorder %s83, %s84
      %p96 = scmp.eq.s32.totalorder %s32, 1
      %p97 = por %p95, %p96
      %p99 = scmp.ne.s32.totalorder %s84, %s98
      %p100 = scmp.eq.s32.totalorder %s32, 0
      %p101 = por %p99, %p100
      %s103 = sadd.s32 %s102, 1
      %p106 = scmp.eq.s32.totalorder %s26, 1
      %p107 = scmp.ne.s32.totalorder %s102, %s104
      %p108 = scmp.eq.s32.totalorder %s26, 0
      %p109 = por %p107, %p108
      %p110 = scmp.ne.s32.totalorder %s102, %s104
      %p111 = scmp.eq.s32.totalorder %s31, 1
      %p112 = por %p110, %p111
      %p113 = scmp.ne.s32.totalorder %s104, %s105
      %p114 = scmp.eq.s32.totalorder %s31, 0
      %p115 = por %p113, %p114
      %p116 = scmp.ne.s32.totalorder %s104, %s105
      %p117 = scmp.eq.s32.totalorder %s32, 1
      %p118 = por %p116, %p117
      %p120 = scmp.ne.s32.totalorder %s105, %s119
      %p121 = scmp.eq.s32.totalorder %s32, 0
      %p122 = por %p120, %p121
      %s124 = sadd.s32 %s123, 1
      %p127 = scmp.eq.s32.totalorder %s26, 1
      %p128 = scmp.ne.s32.totalorder %s123, %s125
      %p129 = scmp.eq.s32.totalorder %s26, 0
      %p130 = por %p128, %p129
      %p131 = scmp.ne.s32.totalorder %s123, %s125
      %p132 = scmp.eq.s32.totalorder %s31, 1
      %p133 = por %p131, %p132
      %p134 = scmp.ne.s32.totalorder %s125, %s126
      %p135 = scmp.eq.s32.totalorder %s31, 0
      %p136 = por %p134, %p135
      %p137 = scmp.ne.s32.totalorder %s125, %s126
      %p138 = scmp.eq.s32.totalorder %s32, 1
      %p139 = por %p137, %p138
      %p141 = scmp.ne.s32.totalorder %s126, %s140
      %p142 = scmp.eq.s32.totalorder %s32, 0
      %p143 = por %p141, %p142
      %s145 = sadd.s32 %s144, 1
      %p148 = scmp.eq.s32.totalorder %s26, 1
      %p149 = scmp.ne.s32.totalorder %s144, %s146
      %p150 = scmp.eq.s32.totalorder %s26, 0
      %p151 = por %p149, %p150
      %p152 = scmp.ne.s32.totalorder %s144, %s146
      %p153 = scmp.eq.s32.totalorder %s31, 1
      %p154 = por %p152, %p153
      %p155 = scmp.ne.s32.totalorder %s146, %s147
      %p156 = scmp.eq.s32.totalorder %s31, 0
      %p157 = por %p155, %p156
      %p158 = scmp.ne.s32.totalorder %s146, %s147
      %p159 = scmp.eq.s32.totalorder %s32, 1
      %p160 = por %p158, %p159
      %p162 = scmp.ne.s32.totalorder %s147, %s161
      %p163 = scmp.eq.s32.totalorder %s32, 0
      %p164 = por %p162, %p163
      %s166 = sadd.s32 %s165, 1
      %p169 = scmp.eq.s32.totalorder %s26, 1
      %p170 = scmp.ne.s32.totalorder %s165, %s167
      %p171 = scmp.eq.s32.totalorder %s26, 0
      %p172 = por %p170, %p171
      %p173 = scmp.ne.s32.totalorder %s165, %s167
      %p174 = scmp.eq.s32.totalorder %s31, 1
      %p175 = por %p173, %p174
      %p176 = scmp.ne.s32.totalorder %s167, %s168
      %p177 = scmp.eq.s32.totalorder %s31, 0
      %p178 = por %p176, %p177
      %p179 = scmp.ne.s32.totalorder %s167, %s168
      %p180 = scmp.eq.s32.totalorder %s32, 1
      %p181 = por %p179, %p180
      %p183 = scmp.ne.s32.totalorder %s168, %s182
      %p184 = scmp.eq.s32.totalorder %s32, 0
      %p185 = por %p183, %p184
      %s187 = sadd.s32 %s186, 1
      %p190 = scmp.eq.s32.totalorder %s26, 1
      %p191 = scmp.ne.s32.totalorder %s186, %s188
      %p192 = scmp.eq.s32.totalorder %s26, 0
      %p193 = por %p191, %p192
      %p194 = scmp.ne.s32.totalorder %s186, %s188
      %p195 = scmp.eq.s32.totalorder %s31, 1
      %p196 = por %p194, %p195
      %p197 = scmp.ne.s32.totalorder %s188, %s189
      %p198 = scmp.eq.s32.totalorder %s31, 0
      %p199 = por %p197, %p198
      %p200 = scmp.ne.s32.totalorder %s188, %s189
      %p201 = scmp.eq.s32.totalorder %s32, 1
      %p202 = por %p200, %p201
      %p204 = scmp.ne.s32.totalorder %s189, %s203
      %p205 = scmp.eq.s32.totalorder %s32, 0
      %p206 = por %p204, %p205
      %s208 = sadd.s32 %s207, 1
      %p211 = scmp.eq.s32.totalorder %s26, 1
      %p212 = scmp.ne.s32.totalorder %s207, %s209
      %p213 = scmp.eq.s32.totalorder %s26, 0
      %p214 = por %p212, %p213
      %p215 = scmp.ne.s32.totalorder %s207, %s209
      %p216 = scmp.eq.s32.totalorder %s31, 1
      %p217 = por %p215, %p216
      %p218 = scmp.ne.s32.totalorder %s209, %s210
      %p219 = scmp.eq.s32.totalorder %s31, 0
      %p220 = por %p218, %p219
      %p221 = scmp.ne.s32.totalorder %s209, %s210
      %p222 = scmp.eq.s32.totalorder %s32, 1
      %p223 = por %p221, %p222
      %p225 = scmp.ne.s32.totalorder %s210, %s224
      %p226 = scmp.eq.s32.totalorder %s32, 0
      %p227 = por %p225, %p226
      %s229 = sadd.s32 %s228, 1
      %p232 = scmp.eq.s32.totalorder %s26, 1
      %p233 = scmp.ne.s32.totalorder %s228, %s230
      %p234 = scmp.eq.s32.totalorder %s26, 0
      %p235 = por %p233, %p234
      %p236 = scmp.ne.s32.totalorder %s228, %s230
      %p237 = scmp.eq.s32.totalorder %s31, 1
      %p238 = por %p236, %p237
      %p239 = scmp.ne.s32.totalorder %s230, %s231
      %p240 = scmp.eq.s32.totalorder %s31, 0
      %p241 = por %p239, %p240
      %p242 = scmp.ne.s32.totalorder %s230, %s231
      %p243 = scmp.eq.s32.totalorder %s32, 1
      %p244 = por %p242, %p243
      %p246 = scmp.ne.s32.totalorder %s231, %s245
      %p247 = scmp.eq.s32.totalorder %s32, 0
      %p248 = por %p246, %p247
      %s250 = sadd.s32 %s249, 1
      %p253 = scmp.eq.s32.totalorder %s26, 1
      %p254 = scmp.ne.s32.totalorder %s249, %s251
      %p255 = scmp.eq.s32.totalorder %s26, 0
      %p256 = por %p254, %p255
      %p257 = scmp.ne.s32.totalorder %s249, %s251
      %p258 = scmp.eq.s32.totalorder %s31, 1
      %p259 = por %p257, %p258
      %p260 = scmp.ne.s32.totalorder %s251, %s252
      %p261 = scmp.eq.s32.totalorder %s31, 0
      %p262 = por %p260, %p261
      %p263 = scmp.ne.s32.totalorder %s251, %s252
      %p264 = scmp.eq.s32.totalorder %s32, 1
      %p265 = por %p263, %p264
      %p267 = scmp.ne.s32.totalorder %s252, %s266
      %p268 = scmp.eq.s32.totalorder %s32, 0
      %p269 = por %p267, %p268
      %s270 = ssub.s32 %s26, %s33
      %p271 = scmp.eq.s32.totalorder %s270, 0
      %s273 = sadd.s32 %s272, 1
      %s274 = scalar_select %p271, %s272, %s273
      %p277 = pneg %p271
      %p278 = scmp.eq.s32.totalorder %s26, 1
      %p279 = por %p277, %p278
      %p280 = scmp.ne.s32.totalorder %s272, %s275
      %p281 = scmp.eq.s32.totalorder %s26, 0
      %p282 = por %p280, %p281
      %p283 = scmp.ne.s32.totalorder %s272, %s275
      %p284 = scmp.eq.s32.totalorder %s31, 1
      %p285 = por %p283, %p284
      %p286 = scmp.ne.s32.totalorder %s275, %s276
      %p287 = scmp.eq.s32.totalorder %s31, 0
      %p288 = por %p286, %p287
      %p289 = scmp.ne.s32.totalorder %s275, %s276
      %p290 = scmp.eq.s32.totalorder %s32, 1
      %p291 = por %p289, %p290
      %p293 = scmp.ne.s32.totalorder %s276, %s292
      %p294 = scmp.eq.s32.totalorder %s32, 0
      %p295 = por %p293, %p294
      %p296 = scmp.le.s32.totalorder 1, %s26
      %p297 = scmp.lt.s32.totalorder %s26, 3
      %p298 = pnand %p296, %p297
      %p299 = pneg %p298
      // Predicated region
      $region9: #{tpu_custom_call.1} parent=5 // pred_check
        _
      $region10: #{tpu_custom_call.1} parent=5 // pred_check_branch
        %301 = sbr.rel (%p298) target = $region12
      $region11: #{tpu_custom_call.1} parent=5 // pred_region
        %s302 = ssub.s32 %s26, 1
        // Predicated region
        $region13: #{tpu_custom_call.1} parent=11 // pred_check
          %p303 = pneg %p73
        $region14: #{tpu_custom_call.1} parent=11 // pred_check_branch
          %305 = sbr.rel (%p303) target = $region16
        $region15: #{tpu_custom_call.1} parent=11 // pred_region
          %s307 = ssub.s32 1024, 1024
          %308 = vsyncadd [#allocation7], %s307
          %s309 = sshll.u32 [#allocation6], 4
          %s310 = int_to_ptr.vmem [resolvable:$true] %s309
          %315 = dma.hbm_to_vmem [thread:$0]  %s1, 1024, %s310, [#allocation7], 64, 64, 4
        $region16: #{tpu_custom_call.1} parent=11 // pred_fallthru
          _
        // Predicated region
        $region17: #{tpu_custom_call.1} parent=11 // pred_check
          %p316 = pneg %p94
        $region18: #{tpu_custom_call.1} parent=11 // pred_check_branch
          %318 = sbr.rel (%p316) target = $region20
        $region19: #{tpu_custom_call.1} parent=11 // pred_region
          _
        $region20: #{tpu_custom_call.1} parent=11 // pred_fallthru
          _
        // Predicated region
        $region21: #{tpu_custom_call.1} parent=11 // pred_check
          %p319 = pneg %p115
        $region22: #{tpu_custom_call.1} parent=11 // pred_check_branch
          %321 = sbr.rel (%p319) target = $region24
        $region23: #{tpu_custom_call.1} parent=11 // pred_region
          %s323 = ssub.s32 96, 96
          %324 = vsyncadd [#allocation7], %s323
          %s325 = sshll.u32 [#allocation8], 4
          %s326 = int_to_ptr.vmem [resolvable:$true] %s325
          %331 = dma.hbm_to_vmem [thread:$0]  %s3, 96, %s326, [#allocation7], 32, 32, 2
        $region24: #{tpu_custom_call.1} parent=11 // pred_fallthru
          _
        // Predicated region
        $region25: #{tpu_custom_call.1} parent=11 // pred_check
          %p332 = pneg %p136
        $region26: #{tpu_custom_call.1} parent=11 // pred_check_branch
          %334 = sbr.rel (%p332) target = $region28
        $region27: #{tpu_custom_call.1} parent=11 // pred_region
          _
        $region28: #{tpu_custom_call.1} parent=11 // pred_fallthru
          _
        // Predicated region
        $region29: #{tpu_custom_call.1} parent=11 // pred_check
          %p335 = pneg %p157
        $region30: #{tpu_custom_call.1} parent=11 // pred_check_branch
          %337 = sbr.rel (%p335) target = $region32
        $region31: #{tpu_custom_call.1} parent=11 // pred_region
          %s339 = ssub.s32 1024, 1024
          %340 = vsyncadd [#allocation10], %s339
          %s341 = sshll.u32 [#allocation9], 4
          %s342 = int_to_ptr.vmem [resolvable:$true] %s341
          %347 = dma.hbm_to_vmem [thread:$0]  %s5, 1024, %s342, [#allocation10], 64, 64, 4
        $region32: #{tpu_custom_call.1} parent=11 // pred_fallthru
          _
        // Predicated region
        $region33: #{tpu_custom_call.1} parent=11 // pred_check
          %p348 = pneg %p178
        $region34: #{tpu_custom_call.1} parent=11 // pred_check_branch
          %350 = sbr.rel (%p348) target = $region36
        $region35: #{tpu_custom_call.1} parent=11 // pred_region
          _
        $region36: #{tpu_custom_call.1} parent=11 // pred_fallthru
          _
        // Predicated region
        $region37: #{tpu_custom_call.1} parent=11 // pred_check
          %p351 = pneg %p199
        $region38: #{tpu_custom_call.1} parent=11 // pred_check_branch
          %353 = sbr.rel (%p351) target = $region40
        $region39: #{tpu_custom_call.1} parent=11 // pred_region
          %s355 = ssub.s32 1024, 1024
          %356 = vsyncadd [#allocation10], %s355
          %s357 = sshll.u32 [#allocation11], 4
          %s358 = int_to_ptr.vmem [resolvable:$true] %s357
          %363 = dma.hbm_to_vmem [thread:$0]  %s7, 1024, %s358, [#allocation10], 64, 64, 4
        $region40: #{tpu_custom_call.1} parent=11 // pred_fallthru
          _
        // Predicated region
        $region41: #{tpu_custom_call.1} parent=11 // pred_check
          %p364 = pneg %p220
        $region42: #{tpu_custom_call.1} parent=11 // pred_check_branch
          %366 = sbr.rel (%p364) target = $region44
        $region43: #{tpu_custom_call.1} parent=11 // pred_region
          _
        $region44: #{tpu_custom_call.1} parent=11 // pred_fallthru
          _
        // Predicated region
        $region45: #{tpu_custom_call.1} parent=11 // pred_check
          %p367 = pneg %p241
        $region46: #{tpu_custom_call.1} parent=11 // pred_check_branch
          %369 = sbr.rel (%p367) target = $region48
        $region47: #{tpu_custom_call.1} parent=11 // pred_region
          %s371 = ssub.s32 1024, 1024
          %372 = vsyncadd [#allocation13], %s371
          %s373 = sshll.u32 [#allocation12], 4
          %s374 = int_to_ptr.vmem [resolvable:$true] %s373
          %379 = dma.hbm_to_vmem [thread:$0]  %s9, 1024, %s374, [#allocation13], 64, 64, 4
        $region48: #{tpu_custom_call.1} parent=11 // pred_fallthru
          _
        // Predicated region
        $region49: #{tpu_custom_call.1} parent=11 // pred_check
          %p380 = pneg %p262
        $region50: #{tpu_custom_call.1} parent=11 // pred_check_branch
          %382 = sbr.rel (%p380) target = $region52
        $region51: #{tpu_custom_call.1} parent=11 // pred_region
          _
        $region52: #{tpu_custom_call.1} parent=11 // pred_fallthru
          _
      $region12: #{tpu_custom_call.1} parent=5 // pred_fallthru
        _
      %p383 = scmp.lt.s32.totalorder %s26, 2
      // Predicated region
      $region53: #{tpu_custom_call.1} parent=5 // pred_check
        %p384 = pneg %p383
      $region54: #{tpu_custom_call.1} parent=5 // pred_check_branch
        %386 = sbr.rel (%p384) target = $region56
      $region55: #{tpu_custom_call.1} parent=5 // pred_region
        // Predicated region
        $region57: #{tpu_custom_call.1} parent=55 // pred_check
          %p387 = pneg %p46
        $region58: #{tpu_custom_call.1} parent=55 // pred_check_branch
          %389 = sbr.rel (%p387) target = $region60
        $region59: #{tpu_custom_call.1} parent=55 // pred_region
          %s390 = sand.u32 %s36, 1
          %s391 = scalar_lea.sflag [#allocation4], %s390
          %s392 = sand.u32 %s36, 1
          %s393 = smul.addr %s392, 128
          %s394 = scalar_lea.vmem [#allocation3], %s393
          %s396 = ssub.s32 2048, 2048
          %397 = vsyncadd %s391, %s396
          %s398 = smul.addr %s26, 32
          %s399 = smul.addr %s398, 64
          %s400 = scalar_lea.hbm %s0, %s399
          %s401 = sshll.u32 %s394, 4
          %s402 = int_to_ptr.vmem [resolvable:$true] %s401
          %407 = dma.hbm_to_vmem [thread:$0]  %s400, 2048, %s402, %s391, 64, 64, 4
        $region60: #{tpu_custom_call.1} parent=55 // pred_fallthru
          _
      $region56: #{tpu_custom_call.1} parent=5 // pred_fallthru
        _
      %p408 = scmp.le.s32.totalorder 1, %s26
      %p409 = scmp.lt.s32.totalorder %s26, 3
      %p410 = pnand %p408, %p409
      %p411 = pneg %p410
      // Predicated region
      $region61: #{tpu_custom_call.1} parent=5 // pred_check
        _
      $region62: #{tpu_custom_call.1} parent=5 // pred_check_branch
        %413 = sbr.rel (%p410) target = $region64
      $region63: #{tpu_custom_call.1} parent=5 // pred_region
        %s414 = ssub.s32 %s26, 1
        %s415 = sand.u32 %s39, 1
        %s416 = scalar_lea.sflag [#allocation4], %s415
        %s417 = sand.u32 %s39, 1
        %s418 = smul.addr %s417, 128
        %s419 = scalar_lea.vmem [#allocation3], %s418
        // Predicated region
        $region65: #{tpu_custom_call.1} parent=63 // pred_check
          %p420 = pneg %p52
        $region66: #{tpu_custom_call.1} parent=63 // pred_check_branch
          %422 = sbr.rel (%p420) target = $region68
        $region67: #{tpu_custom_call.1} parent=63 // pred_region
          %423 = dma.done %s416, 2048
        $region68: #{tpu_custom_call.1} parent=63 // pred_fallthru
          _
        // Predicated region
        $region69: #{tpu_custom_call.1} parent=63 // pred_check
          %p424 = pneg %p73
        $region70: #{tpu_custom_call.1} parent=63 // pred_check_branch
          %426 = sbr.rel (%p424) target = $region72
        $region71: #{tpu_custom_call.1} parent=63 // pred_region
          %427 = dma.done [#allocation7], 1024
        $region72: #{tpu_custom_call.1} parent=63 // pred_fallthru
          _
        // Predicated region
        $region73: #{tpu_custom_call.1} parent=63 // pred_check
          %p428 = pneg %p115
        $region74: #{tpu_custom_call.1} parent=63 // pred_check_branch
          %430 = sbr.rel (%p428) target = $region76
        $region75: #{tpu_custom_call.1} parent=63 // pred_region
          %431 = dma.done [#allocation7], 96
        $region76: #{tpu_custom_call.1} parent=63 // pred_fallthru
          _
        // Predicated region
        $region77: #{tpu_custom_call.1} parent=63 // pred_check
          %p432 = pneg %p157
        $region78: #{tpu_custom_call.1} parent=63 // pred_check_branch
          %434 = sbr.rel (%p432) target = $region80
        $region79: #{tpu_custom_call.1} parent=63 // pred_region
          %435 = dma.done [#allocation10], 1024
        $region80: #{tpu_custom_call.1} parent=63 // pred_fallthru
          _
        // Predicated region
        $region81: #{tpu_custom_call.1} parent=63 // pred_check
          %p436 = pneg %p199
        $region82: #{tpu_custom_call.1} parent=63 // pred_check_branch
          %438 = sbr.rel (%p436) target = $region84
        $region83: #{tpu_custom_call.1} parent=63 // pred_region
          %439 = dma.done [#allocation10], 1024
        $region84: #{tpu_custom_call.1} parent=63 // pred_fallthru
          _
        // Predicated region
        $region85: #{tpu_custom_call.1} parent=63 // pred_check
          %p440 = pneg %p241
        $region86: #{tpu_custom_call.1} parent=63 // pred_check_branch
          %442 = sbr.rel (%p440) target = $region88
        $region87: #{tpu_custom_call.1} parent=63 // pred_region
          %443 = dma.done [#allocation13], 1024
        $region88: #{tpu_custom_call.1} parent=63 // pred_fallthru
          _
        %s444 = sand.u32 %s39, 1
        %s445 = scalar_lea.sflag [#allocation4], %s444
        %s446 = sand.u32 %s39, 1
        %s447 = smul.addr %s446, 128
        %s448 = scalar_lea.vmem [#allocation3], %s447
        %p449 = pneg %p52
        %p450 = pneg %p49
        %p451 = pneg %p73
        %p452 = pneg %p70
        %p453 = pneg %p94
        %p454 = pneg %p91
        %p455 = pneg %p115
        %p456 = pneg %p112
        %p457 = pneg %p136
        %p458 = pneg %p133
        %p459 = pneg %p157
        %p460 = pneg %p154
        %p461 = pneg %p178
        %p462 = pneg %p175
        %p463 = pneg %p199
        %p464 = pneg %p196
        %p465 = pneg %p220
        %p466 = pneg %p217
        %p467 = pneg %p241
        %p468 = pneg %p238
        %p469 = pneg %p262
        %p470 = pneg %p259
        %p471 = pneg %p288
        %p472 = pneg %p285
        %s473 = sand.u32 %s275, 1
        %s474 = scalar_lea.sflag [#allocation5], %s473
        %s475 = sand.u32 %s275, 1
        %s476 = smul.addr %s475, 128
        %s477 = scalar_lea.vmem [#allocation14], %s476
        %v480 = vld [vmem:[%s419] sm:$0xf]
        %v481 = vld [vmem:[%s419 + $0x4] sm:$0xf]
        %v482 = vld [vmem:[%s419 + $0x8] sm:$0xf]
        %v483 = vld [vmem:[%s419 + $0xc] sm:$0xf]
        %v484 = vld [vmem:[%s419 + $0x10] sm:$0xf]
        %v485 = vld [vmem:[%s419 + $0x14] sm:$0xf]
        %v486 = vld [vmem:[%s419 + $0x18] sm:$0xf]
        %v487 = vld [vmem:[%s419 + $0x1c] sm:$0xf]
        %v488 = vld [vmem:[%s419 + $0x20] sm:$0xf]
        %v489 = vld [vmem:[%s419 + $0x24] sm:$0xf]
        %v490 = vld [vmem:[%s419 + $0x28] sm:$0xf]
        %v491 = vld [vmem:[%s419 + $0x2c] sm:$0xf]
        %v492 = vld [vmem:[%s419 + $0x30] sm:$0xf]
        %v493 = vld [vmem:[%s419 + $0x34] sm:$0xf]
        %v494 = vld [vmem:[%s419 + $0x38] sm:$0xf]
        %v495 = vld [vmem:[%s419 + $0x3c] sm:$0xf]
        %v496 = vld [vmem:[%s419 + $0x40] sm:$0xf]
        %v497 = vld [vmem:[%s419 + $0x44] sm:$0xf]
        %v498 = vld [vmem:[%s419 + $0x48] sm:$0xf]
        %v499 = vld [vmem:[%s419 + $0x4c] sm:$0xf]
        %v500 = vld [vmem:[%s419 + $0x50] sm:$0xf]
        %v501 = vld [vmem:[%s419 + $0x54] sm:$0xf]
        %v502 = vld [vmem:[%s419 + $0x58] sm:$0xf]
        %v503 = vld [vmem:[%s419 + $0x5c] sm:$0xf]
        %v504 = vld [vmem:[%s419 + $0x60] sm:$0xf]
        %v505 = vld [vmem:[%s419 + $0x64] sm:$0xf]
        %v506 = vld [vmem:[%s419 + $0x68] sm:$0xf]
        %v507 = vld [vmem:[%s419 + $0x6c] sm:$0xf]
        %v508 = vld [vmem:[%s419 + $0x70] sm:$0xf]
        %v509 = vld [vmem:[%s419 + $0x74] sm:$0xf]
        %v510 = vld [vmem:[%s419 + $0x78] sm:$0xf]
        %v511 = vld [vmem:[%s419 + $0x7c] sm:$0xf]
        %v512 = vld [vmem:[#allocation6] sm:$0xf]
        %v513 = vld [vmem:[#allocation6 + $0x4] sm:$0xf]
        %v514 = vld [vmem:[#allocation6 + $0x8] sm:$0xf]
        %v515 = vld [vmem:[#allocation6 + $0xc] sm:$0xf]
        %v516 = vld [vmem:[#allocation6 + $0x10] sm:$0xf]
        %v517 = vld [vmem:[#allocation6 + $0x14] sm:$0xf]
        %v518 = vld [vmem:[#allocation6 + $0x18] sm:$0xf]
        %v519 = vld [vmem:[#allocation6 + $0x1c] sm:$0xf]
        %v520 = vld [vmem:[#allocation6 + $0x20] sm:$0xf]
        %v521 = vld [vmem:[#allocation6 + $0x24] sm:$0xf]
        %v522 = vld [vmem:[#allocation6 + $0x28] sm:$0xf]
        %v523 = vld [vmem:[#allocation6 + $0x2c] sm:$0xf]
        %v524 = vld [vmem:[#allocation6 + $0x30] sm:$0xf]
        %v525 = vld [vmem:[#allocation6 + $0x34] sm:$0xf]
        %v526 = vld [vmem:[#allocation6 + $0x38] sm:$0xf]
        %v527 = vld [vmem:[#allocation6 + $0x3c] sm:$0xf]
        %v528 = vld [vmem:[%s2] sm:$0x1]
        %v530 = vlaneseq
        %v531 = vshrl.u32 %v530, 7
        %v532 = vsub.s32 0, %v531
        %v533 = vrot.slane %v528, %v532
        %v567 = vunpack.c.l.b16 %v480
        %v568 = vunpack.c.l.b16 %v481
        %v569 = vunpack.c.l.b16 %v482
        %v570 = vunpack.c.l.b16 %v483
        %v571 = vunpack.c.l.b16 %v484
        %v572 = vunpack.c.l.b16 %v485
        %v573 = vunpack.c.l.b16 %v486
        %v574 = vunpack.c.l.b16 %v487
        %v575 = vunpack.c.l.b16 %v488
        %v576 = vunpack.c.l.b16 %v489
        %v577 = vunpack.c.l.b16 %v490
        %v578 = vunpack.c.l.b16 %v491
        %v579 = vunpack.c.l.b16 %v492
        %v580 = vunpack.c.l.b16 %v493
        %v581 = vunpack.c.l.b16 %v494
        %v582 = vunpack.c.l.b16 %v495
        %v583 = vunpack.c.l.b16 %v496
        %v584 = vunpack.c.l.b16 %v497
        %v585 = vunpack.c.l.b16 %v498
        %v586 = vunpack.c.l.b16 %v499
        %v587 = vunpack.c.l.b16 %v500
        %v588 = vunpack.c.l.b16 %v501
        %v589 = vunpack.c.l.b16 %v502
        %v590 = vunpack.c.l.b16 %v503
        %v591 = vunpack.c.l.b16 %v504
        %v592 = vunpack.c.l.b16 %v505
        %v593 = vunpack.c.l.b16 %v506
        %v594 = vunpack.c.l.b16 %v507
        %v595 = vunpack.c.l.b16 %v508
        %v596 = vunpack.c.l.b16 %v509
        %v597 = vunpack.c.l.b16 %v510
        %v598 = vunpack.c.l.b16 %v511
        %v599 = vpack.c.b16 %v568, %v567
        %v600 = vpack.c.b16 %v570, %v569
        %v601 = vpack.c.b16 %v572, %v571
        %v602 = vpack.c.b16 %v574, %v573
        %v603 = vpack.c.b16 %v576, %v575
        %v604 = vpack.c.b16 %v578, %v577
        %v605 = vpack.c.b16 %v580, %v579
        %v606 = vpack.c.b16 %v582, %v581
        %v607 = vpack.c.b16 %v584, %v583
        %v608 = vpack.c.b16 %v586, %v585
        %v609 = vpack.c.b16 %v588, %v587
        %v610 = vpack.c.b16 %v590, %v589
        %v611 = vpack.c.b16 %v592, %v591
        %v612 = vpack.c.b16 %v594, %v593
        %v613 = vpack.c.b16 %v596, %v595
        %v614 = vpack.c.b16 %v598, %v597
        %v647 = vunpack.c.l.b16 %v512
        %v648 = vunpack.c.l.b16 %v513
        %v649 = vunpack.c.l.b16 %v514
        %v650 = vunpack.c.l.b16 %v515
        %v651 = vunpack.c.l.b16 %v516
        %v652 = vunpack.c.l.b16 %v517
        %v653 = vunpack.c.l.b16 %v518
        %v654 = vunpack.c.l.b16 %v519
        %v655 = vunpack.c.l.b16 %v520
        %v656 = vunpack.c.l.b16 %v521
        %v657 = vunpack.c.l.b16 %v522
        %v658 = vunpack.c.l.b16 %v523
        %v659 = vunpack.c.l.b16 %v524
        %v660 = vunpack.c.l.b16 %v525
        %v661 = vunpack.c.l.b16 %v526
        %v662 = vunpack.c.l.b16 %v527
        %v663 = vpack.c.b16 %v648, %v647
        %v664 = vpack.c.b16 %v650, %v649
        %v665 = vpack.c.b16 %v652, %v651
        %v666 = vpack.c.b16 %v654, %v653
        %v667 = vpack.c.b16 %v656, %v655
        %v668 = vpack.c.b16 %v658, %v657
        %v669 = vpack.c.b16 %v660, %v659
        %v670 = vpack.c.b16 %v662, %v661
        %679 = vmatprep.subr.bf16.mxu0 0
        %680 = vmatpush1.bf16.msra.mxu0 %v670
        %681 = vmatprep.subr.bf16.mxu0 0
        %682 = vmatpush1.bf16.msra.mxu0 %v669
        %683 = vmatprep.subr.bf16.mxu0 0
        %684 = vmatpush1.bf16.msra.mxu0 %v668
        %685 = vmatprep.subr.bf16.mxu0 0
        %686 = vmatpush1.bf16.msra.mxu0 %v667
        %687 = vmatprep.subr.bf16.mxu0 0
        %688 = vmatpush1.bf16.msra.mxu0 %v666
        %689 = vmatprep.subr.bf16.mxu0 0
        %690 = vmatpush1.bf16.msra.mxu0 %v665
        %691 = vmatprep.subr.bf16.mxu0 0
        %692 = vmatpush1.bf16.msra.mxu0 %v664
        %693 = vmatprep.subr.bf16.mxu0 0
        %694 = vmatpush1.bf16.msra.mxu0 %v663
        %695 = vmatprep.subr.bf16.mxu0 0
        %696 = vmatpush2.bf16.msra.mxu0 0
        %697 = vmatprep.subr.bf16.mxu0 0
        %698 = vmatpush2.bf16.msra.mxu0 0
        %699 = vmatprep.subr.bf16.mxu0 0
        %700 = vmatpush2.bf16.msra.mxu0 0
        %701 = vmatprep.subr.bf16.mxu0 0
        %702 = vmatpush2.bf16.msra.mxu0 0
        %703 = vmatprep.subr.bf16.mxu0 0
        %704 = vmatpush2.bf16.msra.mxu0 0
        %705 = vmatprep.subr.bf16.mxu0 0
        %706 = vmatpush2.bf16.msra.mxu0 0
        %707 = vmatprep.subr.bf16.mxu0 0
        %708 = vmatpush2.bf16.msra.mxu0 0
        %709 = vmatprep.subr.bf16.mxu0 0
        %710 = vmatpush2.bf16.msra.mxu0 0
        %711 = vmatprep.mubr.bf16.mxu0 0
        %712 = vmatmul.mubr.bf16.gmra.mxu0 %v599
        %v713 = vpop.f32.mrf.mxu0
        %v714 = vadd.f32 %v533, %v713
        %v715 = vpop.f32.mrf.mxu0
        %v716 = vpop.f32.mrf.mxu0
        %v717 = vadd.f32 %v533, %v716
        %v718 = vpop.f32.mrf.mxu0
        %719 = vmatprep.mubr.bf16.mxu0 0
        %720 = vmatmul.mubr.bf16.gmra.mxu0 %v600
        %v721 = vpop.f32.mrf.mxu0
        %v722 = vadd.f32 %v533, %v721
        %v723 = vpop.f32.mrf.mxu0
        %v724 = vpop.f32.mrf.mxu0
        %v725 = vadd.f32 %v533, %v724
        %v726 = vpop.f32.mrf.mxu0
        %727 = vmatprep.mubr.bf16.mxu0 0
        %728 = vmatmul.mubr.bf16.gmra.mxu0 %v601
        %v729 = vpop.f32.mrf.mxu0
        %v730 = vadd.f32 %v533, %v729
        %v731 = vpop.f32.mrf.mxu0
        %v732 = vpop.f32.mrf.mxu0
        %v733 = vadd.f32 %v533, %v732
        %v734 = vpop.f32.mrf.mxu0
        %735 = vmatprep.mubr.bf16.mxu0 0
        %736 = vmatmul.mubr.bf16.gmra.mxu0 %v602
        %v737 = vpop.f32.mrf.mxu0
        %v738 = vadd.f32 %v533, %v737
        %v739 = vpop.f32.mrf.mxu0
        %v740 = vpop.f32.mrf.mxu0
        %v741 = vadd.f32 %v533, %v740
        %v742 = vpop.f32.mrf.mxu0
        %743 = vmatprep.mubr.bf16.mxu0 0
        %744 = vmatmul.mubr.bf16.gmra.mxu0 %v603
        %v745 = vpop.f32.mrf.mxu0
        %v746 = vadd.f32 %v533, %v745
        %v747 = vpop.f32.mrf.mxu0
        %v748 = vpop.f32.mrf.mxu0
        %v749 = vadd.f32 %v533, %v748
        %v750 = vpop.f32.mrf.mxu0
        %751 = vmatprep.mubr.bf16.mxu0 0
        %752 = vmatmul.mubr.bf16.gmra.mxu0 %v604
        %v753 = vpop.f32.mrf.mxu0
        %v754 = vadd.f32 %v533, %v753
        %v755 = vpop.f32.mrf.mxu0
        %v756 = vpop.f32.mrf.mxu0
        %v757 = vadd.f32 %v533, %v756
        %v758 = vpop.f32.mrf.mxu0
        %759 = vmatprep.mubr.bf16.mxu0 0
        %760 = vmatmul.mubr.bf16.gmra.mxu0 %v605
        %v761 = vpop.f32.mrf.mxu0
        %v762 = vadd.f32 %v533, %v761
        %v763 = vpop.f32.mrf.mxu0
        %v764 = vpop.f32.mrf.mxu0
        %v765 = vadd.f32 %v533, %v764
        %v766 = vpop.f32.mrf.mxu0
        %767 = vmatprep.mubr.bf16.mxu0 0
        %768 = vmatmul.mubr.bf16.gmra.mxu0 %v606
        %v769 = vpop.f32.mrf.mxu0
        %v770 = vadd.f32 %v533, %v769
        %v771 = vpop.f32.mrf.mxu0
        %v772 = vpop.f32.mrf.mxu0
        %v773 = vadd.f32 %v533, %v772
        %v774 = vpop.f32.mrf.mxu0
        %775 = vmatprep.mubr.bf16.mxu0 0
        %776 = vmatmul.mubr.bf16.gmra.mxu0 %v607
        %v777 = vpop.f32.mrf.mxu0
        %v778 = vadd.f32 %v533, %v777
        %v779 = vpop.f32.mrf.mxu0
        %v780 = vpop.f32.mrf.mxu0
        %v781 = vadd.f32 %v533, %v780
        %v782 = vpop.f32.mrf.mxu0
        %783 = vmatprep.mubr.bf16.mxu0 0
        %784 = vmatmul.mubr.bf16.gmra.mxu0 %v608
        %v785 = vpop.f32.mrf.mxu0
        %v786 = vadd.f32 %v533, %v785
        %v787 = vpop.f32.mrf.mxu0
        %v788 = vpop.f32.mrf.mxu0
        %v789 = vadd.f32 %v533, %v788
        %v790 = vpop.f32.mrf.mxu0
        %791 = vmatprep.mubr.bf16.mxu0 0
        %792 = vmatmul.mubr.bf16.gmra.mxu0 %v609
        %v793 = vpop.f32.mrf.mxu0
        %v794 = vadd.f32 %v533, %v793
        %v795 = vpop.f32.mrf.mxu0
        %v796 = vpop.f32.mrf.mxu0
        %v797 = vadd.f32 %v533, %v796
        %v798 = vpop.f32.mrf.mxu0
        %799 = vmatprep.mubr.bf16.mxu0 0
        %800 = vmatmul.mubr.bf16.gmra.mxu0 %v610
        %v801 = vpop.f32.mrf.mxu0
        %v802 = vadd.f32 %v533, %v801
        %v803 = vpop.f32.mrf.mxu0
        %v804 = vpop.f32.mrf.mxu0
        %v805 = vadd.f32 %v533, %v804
        %v806 = vpop.f32.mrf.mxu0
        %807 = vmatprep.mubr.bf16.mxu0 0
        %808 = vmatmul.mubr.bf16.gmra.mxu0 %v611
        %v809 = vpop.f32.mrf.mxu0
        %v810 = vadd.f32 %v533, %v809
        %v811 = vpop.f32.mrf.mxu0
        %v812 = vpop.f32.mrf.mxu0
        %v813 = vadd.f32 %v533, %v812
        %v814 = vpop.f32.mrf.mxu0
        %815 = vmatprep.mubr.bf16.mxu0 0
        %816 = vmatmul.mubr.bf16.gmra.mxu0 %v612
        %v817 = vpop.f32.mrf.mxu0
        %v818 = vadd.f32 %v533, %v817
        %v819 = vpop.f32.mrf.mxu0
        %v820 = vpop.f32.mrf.mxu0
        %v821 = vadd.f32 %v533, %v820
        %v822 = vpop.f32.mrf.mxu0
        %823 = vmatprep.mubr.bf16.mxu0 0
        %824 = vmatmul.mubr.bf16.gmra.mxu0 %v613
        %v825 = vpop.f32.mrf.mxu0
        %v826 = vadd.f32 %v533, %v825
        %v827 = vpop.f32.mrf.mxu0
        %v828 = vpop.f32.mrf.mxu0
        %v829 = vadd.f32 %v533, %v828
        %v830 = vpop.f32.mrf.mxu0
        %831 = vmatprep.mubr.bf16.mxu0 0
        %832 = vmatmul.mubr.bf16.gmra.mxu0 %v614
        %v833 = vpop.f32.mrf.mxu0
        %v834 = vadd.f32 %v533, %v833
        %v835 = vpop.f32.mrf.mxu0
        %v836 = vpop.f32.mrf.mxu0
        %v837 = vadd.f32 %v533, %v836
        %v838 = vpop.f32.mrf.mxu0
        %839 = vdwg.mxu0
        %v840 = vxor.u32 %v714, 2147483648
        %v841 = vxor.u32 %v717, 2147483648
        %v842 = vxor.u32 %v722, 2147483648
        %v843 = vxor.u32 %v725, 2147483648
        %v844 = vxor.u32 %v730, 2147483648
        %v845 = vxor.u32 %v733, 2147483648
        %v846 = vxor.u32 %v738, 2147483648
        %v847 = vxor.u32 %v741, 2147483648
        %v848 = vxor.u32 %v746, 2147483648
        %v849 = vxor.u32 %v749, 2147483648
        %v850 = vxor.u32 %v754, 2147483648
        %v851 = vxor.u32 %v757, 2147483648
        %v852 = vxor.u32 %v762, 2147483648
        %v853 = vxor.u32 %v765, 2147483648
        %v854 = vxor.u32 %v770, 2147483648
        %v855 = vxor.u32 %v773, 2147483648
        %v856 = vxor.u32 %v778, 2147483648
        %v857 = vxor.u32 %v781, 2147483648
        %v858 = vxor.u32 %v786, 2147483648
        %v859 = vxor.u32 %v789, 2147483648
        %v860 = vxor.u32 %v794, 2147483648
        %v861 = vxor.u32 %v797, 2147483648
        %v862 = vxor.u32 %v802, 2147483648
        %v863 = vxor.u32 %v805, 2147483648
        %v864 = vxor.u32 %v810, 2147483648
        %v865 = vxor.u32 %v813, 2147483648
        %v866 = vxor.u32 %v818, 2147483648
        %v867 = vxor.u32 %v821, 2147483648
        %v868 = vxor.u32 %v826, 2147483648
        %v869 = vxor.u32 %v829, 2147483648
        %v870 = vxor.u32 %v834, 2147483648
        %v871 = vxor.u32 %v837, 2147483648
        %v872 = vmul.f32 %v840, 1.442695
        %v873 = vpow.pop %v872
        %v874 = vmul.f32 %v841, 1.442695
        %v875 = vpow.pop %v874
        %v876 = vmul.f32 %v842, 1.442695
        %v877 = vpow.pop %v876
        %v878 = vmul.f32 %v843, 1.442695
        %v879 = vpow.pop %v878
        %v880 = vmul.f32 %v844, 1.442695
        %v881 = vpow.pop %v880
        %v882 = vmul.f32 %v845, 1.442695
        %v883 = vpow.pop %v882
        %v884 = vmul.f32 %v846, 1.442695
        %v885 = vpow.pop %v884
        %v886 = vmul.f32 %v847, 1.442695
        %v887 = vpow.pop %v886
        %v888 = vmul.f32 %v848, 1.442695
        %v889 = vpow.pop %v888
        %v890 = vmul.f32 %v849, 1.442695
        %v891 = vpow.pop %v890
        %v892 = vmul.f32 %v850, 1.442695
        %v893 = vpow.pop %v892
        %v894 = vmul.f32 %v851, 1.442695
        %v895 = vpow.pop %v894
        %v896 = vmul.f32 %v852, 1.442695
        %v897 = vpow.pop %v896
        %v898 = vmul.f32 %v853, 1.442695
        %v899 = vpow.pop %v898
        %v900 = vmul.f32 %v854, 1.442695
        %v901 = vpow.pop %v900
        %v902 = vmul.f32 %v855, 1.442695
        %v903 = vpow.pop %v902
        %v904 = vmul.f32 %v856, 1.442695
        %v905 = vpow.pop %v904
        %v906 = vmul.f32 %v857, 1.442695
        %v907 = vpow.pop %v906
        %v908 = vmul.f32 %v858, 1.442695
        %v909 = vpow.pop %v908
        %v910 = vmul.f32 %v859, 1.442695
        %v911 = vpow.pop %v910
        %v912 = vmul.f32 %v860, 1.442695
        %v913 = vpow.pop %v912
        %v914 = vmul.f32 %v861, 1.442695
        %v915 = vpow.pop %v914
        %v916 = vmul.f32 %v862, 1.442695
        %v917 = vpow.pop %v916
        %v918 = vmul.f32 %v863, 1.442695
        %v919 = vpow.pop %v918
        %v920 = vmul.f32 %v864, 1.442695
        %v921 = vpow.pop %v920
        %v922 = vmul.f32 %v865, 1.442695
        %v923 = vpow.pop %v922
        %v924 = vmul.f32 %v866, 1.442695
        %v925 = vpow.pop %v924
        %v926 = vmul.f32 %v867, 1.442695
        %v927 = vpow.pop %v926
        %v928 = vmul.f32 %v868, 1.442695
        %v929 = vpow.pop %v928
        %v930 = vmul.f32 %v869, 1.442695
        %v931 = vpow.pop %v930
        %v932 = vmul.f32 %v870, 1.442695
        %v933 = vpow.pop %v932
        %v934 = vmul.f32 %v871, 1.442695
        %v935 = vpow.pop %v934
        %v936 = vadd.f32 %v873, 1.0
        %v937 = vadd.f32 %v875, 1.0
        %v938 = vadd.f32 %v877, 1.0
        %v939 = vadd.f32 %v879, 1.0
        %v940 = vadd.f32 %v881, 1.0
        %v941 = vadd.f32 %v883, 1.0
        %v942 = vadd.f32 %v885, 1.0
        %v943 = vadd.f32 %v887, 1.0
        %v944 = vadd.f32 %v889, 1.0
        %v945 = vadd.f32 %v891, 1.0
        %v946 = vadd.f32 %v893, 1.0
        %v947 = vadd.f32 %v895, 1.0
        %v948 = vadd.f32 %v897, 1.0
        %v949 = vadd.f32 %v899, 1.0
        %v950 = vadd.f32 %v901, 1.0
        %v951 = vadd.f32 %v903, 1.0
        %v952 = vadd.f32 %v905, 1.0
        %v953 = vadd.f32 %v907, 1.0
        %v954 = vadd.f32 %v909, 1.0
        %v955 = vadd.f32 %v911, 1.0
        %v956 = vadd.f32 %v913, 1.0
        %v957 = vadd.f32 %v915, 1.0
        %v958 = vadd.f32 %v917, 1.0
        %v959 = vadd.f32 %v919, 1.0
        %v960 = vadd.f32 %v921, 1.0
        %v961 = vadd.f32 %v923, 1.0
        %v962 = vadd.f32 %v925, 1.0
        %v963 = vadd.f32 %v927, 1.0
        %v964 = vadd.f32 %v929, 1.0
        %v965 = vadd.f32 %v931, 1.0
        %v966 = vadd.f32 %v933, 1.0
        %v967 = vadd.f32 %v935, 1.0
        %v968 = vrcp.pop %v936
        %v969 = vmul.f32 1.0, %v968
        %v970 = vrcp.pop %v937
        %v971 = vmul.f32 1.0, %v970
        %v972 = vrcp.pop %v938
        %v973 = vmul.f32 1.0, %v972
        %v974 = vrcp.pop %v939
        %v975 = vmul.f32 1.0, %v974
        %v976 = vrcp.pop %v940
        %v977 = vmul.f32 1.0, %v976
        %v978 = vrcp.pop %v941
        %v979 = vmul.f32 1.0, %v978
        %v980 = vrcp.pop %v942
        %v981 = vmul.f32 1.0, %v980
        %v982 = vrcp.pop %v943
        %v983 = vmul.f32 1.0, %v982
        %v984 = vrcp.pop %v944
        %v985 = vmul.f32 1.0, %v984
        %v986 = vrcp.pop %v945
        %v987 = vmul.f32 1.0, %v986
        %v988 = vrcp.pop %v946
        %v989 = vmul.f32 1.0, %v988
        %v990 = vrcp.pop %v947
        %v991 = vmul.f32 1.0, %v990
        %v992 = vrcp.pop %v948
        %v993 = vmul.f32 1.0, %v992
        %v994 = vrcp.pop %v949
        %v995 = vmul.f32 1.0, %v994
        %v996 = vrcp.pop %v950
        %v997 = vmul.f32 1.0, %v996
        %v998 = vrcp.pop %v951
        %v999 = vmul.f32 1.0, %v998
        %v1000 = vrcp.pop %v952
        %v1001 = vmul.f32 1.0, %v1000
        %v1002 = vrcp.pop %v953
        %v1003 = vmul.f32 1.0, %v1002
        %v1004 = vrcp.pop %v954
        %v1005 = vmul.f32 1.0, %v1004
        %v1006 = vrcp.pop %v955
        %v1007 = vmul.f32 1.0, %v1006
        %v1008 = vrcp.pop %v956
        %v1009 = vmul.f32 1.0, %v1008
        %v1010 = vrcp.pop %v957
        %v1011 = vmul.f32 1.0, %v1010
        %v1012 = vrcp.pop %v958
        %v1013 = vmul.f32 1.0, %v1012
        %v1014 = vrcp.pop %v959
        %v1015 = vmul.f32 1.0, %v1014
        %v1016 = vrcp.pop %v960
        %v1017 = vmul.f32 1.0, %v1016
        %v1018 = vrcp.pop %v961
        %v1019 = vmul.f32 1.0, %v1018
        %v1020 = vrcp.pop %v962
        %v1021 = vmul.f32 1.0, %v1020
        %v1022 = vrcp.pop %v963
        %v1023 = vmul.f32 1.0, %v1022
        %v1024 = vrcp.pop %v964
        %v1025 = vmul.f32 1.0, %v1024
        %v1026 = vrcp.pop %v965
        %v1027 = vmul.f32 1.0, %v1026
        %v1028 = vrcp.pop %v966
        %v1029 = vmul.f32 1.0, %v1028
        %v1030 = vrcp.pop %v967
        %v1031 = vmul.f32 1.0, %v1030
        %v1032 = vmul.f32 %v714, %v969
        %v1033 = vmul.f32 %v717, %v971
        %v1034 = vmul.f32 %v722, %v973
        %v1035 = vmul.f32 %v725, %v975
        %v1036 = vmul.f32 %v730, %v977
        %v1037 = vmul.f32 %v733, %v979
        %v1038 = vmul.f32 %v738, %v981
        %v1039 = vmul.f32 %v741, %v983
        %v1040 = vmul.f32 %v746, %v985
        %v1041 = vmul.f32 %v749, %v987
        %v1042 = vmul.f32 %v754, %v989
        %v1043 = vmul.f32 %v757, %v991
        %v1044 = vmul.f32 %v762, %v993
        %v1045 = vmul.f32 %v765, %v995
        %v1046 = vmul.f32 %v770, %v997
        %v1047 = vmul.f32 %v773, %v999
        %v1048 = vmul.f32 %v778, %v1001
        %v1049 = vmul.f32 %v781, %v1003
        %v1050 = vmul.f32 %v786, %v1005
        %v1051 = vmul.f32 %v789, %v1007
        %v1052 = vmul.f32 %v794, %v1009
        %v1053 = vmul.f32 %v797, %v1011
        %v1054 = vmul.f32 %v802, %v1013
        %v1055 = vmul.f32 %v805, %v1015
        %v1056 = vmul.f32 %v810, %v1017
        %v1057 = vmul.f32 %v813, %v1019
        %v1058 = vmul.f32 %v818, %v1021
        %v1059 = vmul.f32 %v821, %v1023
        %v1060 = vmul.f32 %v826, %v1025
        %v1061 = vmul.f32 %v829, %v1027
        %v1062 = vmul.f32 %v834, %v1029
        %v1063 = vmul.f32 %v837, %v1031
        %v1064 = vpack.c.bf16 %v1033, %v1032
        %v1065 = vpack.c.bf16 %v1035, %v1034
        %v1066 = vpack.c.bf16 %v1037, %v1036
        %v1067 = vpack.c.bf16 %v1039, %v1038
        %v1068 = vpack.c.bf16 %v1041, %v1040
        %v1069 = vpack.c.bf16 %v1043, %v1042
        %v1070 = vpack.c.bf16 %v1045, %v1044
        %v1071 = vpack.c.bf16 %v1047, %v1046
        %v1072 = vpack.c.bf16 %v1049, %v1048
        %v1073 = vpack.c.bf16 %v1051, %v1050
        %v1074 = vpack.c.bf16 %v1053, %v1052
        %v1075 = vpack.c.bf16 %v1055, %v1054
        %v1076 = vpack.c.bf16 %v1057, %v1056
        %v1077 = vpack.c.bf16 %v1059, %v1058
        %v1078 = vpack.c.bf16 %v1061, %v1060
        %v1079 = vpack.c.bf16 %v1063, %v1062
        %1080 = vst [vmem:[#allocation2] sm:$0xf] 0
        %1081 = vst [vmem:[#allocation2 + $0x4] sm:$0xf] 0
        %1082 = vst [vmem:[#allocation2 + $0x8] sm:$0x1] 0
        %s1083 = scalar_lea.vmem [#allocation2], 204
        %1084 = vst [vmem:[%s1083] sm:$0xf] 0
        %1085 = vst [vmem:[%s1083 + $0x4] sm:$0xf] 0
        %1086 = vst [vmem:[%s1083 + $0x8] sm:$0x1] 0
        %s1087 = scalar_lea.vmem [#allocation2], 12
        %vm1088 = vcmask 1040384
        %vm1089 = vsmask.f32 256
        %vm1090 = vmand %vm1088, %vm1089
        %v1091 = vld [vmem:[%s1087] sm:$0x1]
        %v1092 = vsel %vm1090, 0, %v1091
        %1093 = vst [vmem:[%s1087] sm:$0x1] %v1092
        %v1094 = vld [vmem:[%s1087 + $0xc] sm:$0x1]
        %v1095 = vsel %vm1090, 0, %v1094
        %1096 = vst [vmem:[%s1087 + $0xc] sm:$0x1] %v1095
        %v1097 = vld [vmem:[%s1087 + $0x18] sm:$0x1]
        %v1098 = vsel %vm1090, 0, %v1097
        %1099 = vst [vmem:[%s1087 + $0x18] sm:$0x1] %v1098
        %v1100 = vld [vmem:[%s1087 + $0x24] sm:$0x1]
        %v1101 = vsel %vm1090, 0, %v1100
        %1102 = vst [vmem:[%s1087 + $0x24] sm:$0x1] %v1101
        %v1103 = vld [vmem:[%s1087 + $0x30] sm:$0x1]
        %v1104 = vsel %vm1090, 0, %v1103
        %1105 = vst [vmem:[%s1087 + $0x30] sm:$0x1] %v1104
        %v1106 = vld [vmem:[%s1087 + $0x3c] sm:$0x1]
        %v1107 = vsel %vm1090, 0, %v1106
        %1108 = vst [vmem:[%s1087 + $0x3c] sm:$0x1] %v1107
        %v1109 = vld [vmem:[%s1087 + $0x48] sm:$0x1]
        %v1110 = vsel %vm1090, 0, %v1109
        %1111 = vst [vmem:[%s1087 + $0x48] sm:$0x1] %v1110
        %v1112 = vld [vmem:[%s1087 + $0x54] sm:$0x1]
        %v1113 = vsel %vm1090, 0, %v1112
        %1114 = vst [vmem:[%s1087 + $0x54] sm:$0x1] %v1113
        %v1115 = vld [vmem:[%s1087 + $0x60] sm:$0x1]
        %v1116 = vsel %vm1090, 0, %v1115
        %1117 = vst [vmem:[%s1087 + $0x60] sm:$0x1] %v1116
        %v1118 = vld [vmem:[%s1087 + $0x6c] sm:$0x1]
        %v1119 = vsel %vm1090, 0, %v1118
        %1120 = vst [vmem:[%s1087 + $0x6c] sm:$0x1] %v1119
        %v1121 = vld [vmem:[%s1087 + $0x78] sm:$0x1]
        %v1122 = vsel %vm1090, 0, %v1121
        %1123 = vst [vmem:[%s1087 + $0x78] sm:$0x1] %v1122
        %v1124 = vld [vmem:[%s1087 + $0x84] sm:$0x1]
        %v1125 = vsel %vm1090, 0, %v1124
        %1126 = vst [vmem:[%s1087 + $0x84] sm:$0x1] %v1125
        %v1127 = vld [vmem:[%s1087 + $0x90] sm:$0x1]
        %v1128 = vsel %vm1090, 0, %v1127
        %1129 = vst [vmem:[%s1087 + $0x90] sm:$0x1] %v1128
        %v1130 = vld [vmem:[%s1087 + $0x9c] sm:$0x1]
        %v1131 = vsel %vm1090, 0, %v1130
        %1132 = vst [vmem:[%s1087 + $0x9c] sm:$0x1] %v1131
        %v1133 = vld [vmem:[%s1087 + $0xa8] sm:$0x1]
        %v1134 = vsel %vm1090, 0, %v1133
        %1135 = vst [vmem:[%s1087 + $0xa8] sm:$0x1] %v1134
        %v1136 = vld [vmem:[%s1087 + $0xb4] sm:$0x1]
        %v1137 = vsel %vm1090, 0, %v1136
        %1138 = vst [vmem:[%s1087 + $0xb4] sm:$0x1] %v1137
        %vm1139 = vsmask.f32 7938
        %vm1140 = vmand %vm1088, %vm1139
        %v1141 = vld [vmem:[%s1087 + $0x8] sm:$0x1]
        %v1142 = vsel %vm1140, 0, %v1141
        %1143 = vst [vmem:[%s1087 + $0x8] sm:$0x1] %v1142
        %v1144 = vld [vmem:[%s1087 + $0x14] sm:$0x1]
        %v1145 = vsel %vm1140, 0, %v1144
        %1146 = vst [vmem:[%s1087 + $0x14] sm:$0x1] %v1145
        %v1147 = vld [vmem:[%s1087 + $0x20] sm:$0x1]
        %v1148 = vsel %vm1140, 0, %v1147
        %1149 = vst [vmem:[%s1087 + $0x20] sm:$0x1] %v1148
        %v1150 = vld [vmem:[%s1087 + $0x2c] sm:$0x1]
        %v1151 = vsel %vm1140, 0, %v1150
        %1152 = vst [vmem:[%s1087 + $0x2c] sm:$0x1] %v1151
        %v1153 = vld [vmem:[%s1087 + $0x38] sm:$0x1]
        %v1154 = vsel %vm1140, 0, %v1153
        %1155 = vst [vmem:[%s1087 + $0x38] sm:$0x1] %v1154
        %v1156 = vld [vmem:[%s1087 + $0x44] sm:$0x1]
        %v1157 = vsel %vm1140, 0, %v1156
        %1158 = vst [vmem:[%s1087 + $0x44] sm:$0x1] %v1157
        %v1159 = vld [vmem:[%s1087 + $0x50] sm:$0x1]
        %v1160 = vsel %vm1140, 0, %v1159
        %1161 = vst [vmem:[%s1087 + $0x50] sm:$0x1] %v1160
        %v1162 = vld [vmem:[%s1087 + $0x5c] sm:$0x1]
        %v1163 = vsel %vm1140, 0, %v1162
        %1164 = vst [vmem:[%s1087 + $0x5c] sm:$0x1] %v1163
        %v1165 = vld [vmem:[%s1087 + $0x68] sm:$0x1]
        %v1166 = vsel %vm1140, 0, %v1165
        %1167 = vst [vmem:[%s1087 + $0x68] sm:$0x1] %v1166
        %v1168 = vld [vmem:[%s1087 + $0x74] sm:$0x1]
        %v1169 = vsel %vm1140, 0, %v1168
        %1170 = vst [vmem:[%s1087 + $0x74] sm:$0x1] %v1169
        %v1171 = vld [vmem:[%s1087 + $0x80] sm:$0x1]
        %v1172 = vsel %vm1140, 0, %v1171
        %1173 = vst [vmem:[%s1087 + $0x80] sm:$0x1] %v1172
        %v1174 = vld [vmem:[%s1087 + $0x8c] sm:$0x1]
        %v1175 = vsel %vm1140, 0, %v1174
        %1176 = vst [vmem:[%s1087 + $0x8c] sm:$0x1] %v1175
        %v1177 = vld [vmem:[%s1087 + $0x98] sm:$0x1]
        %v1178 = vsel %vm1140, 0, %v1177
        %1179 = vst [vmem:[%s1087 + $0x98] sm:$0x1] %v1178
        %v1180 = vld [vmem:[%s1087 + $0xa4] sm:$0x1]
        %v1181 = vsel %vm1140, 0, %v1180
        %1182 = vst [vmem:[%s1087 + $0xa4] sm:$0x1] %v1181
        %v1183 = vld [vmem:[%s1087 + $0xb0] sm:$0x1]
        %v1184 = vsel %vm1140, 0, %v1183
        %1185 = vst [vmem:[%s1087 + $0xb0] sm:$0x1] %v1184
        %v1186 = vld [vmem:[%s1087 + $0xbc] sm:$0x1]
        %v1187 = vsel %vm1140, 0, %v1186
        %1188 = vst [vmem:[%s1087 + $0xbc] sm:$0x1] %v1187
        %v1205 = vunpack.c.l.b16 %v1064
        %v1206 = vunpack.c.h.b16 %v1064
        %v1207 = vunpack.c.l.b16 %v1065
        %v1208 = vunpack.c.h.b16 %v1065
        %v1209 = vunpack.c.l.b16 %v1066
        %v1210 = vunpack.c.h.b16 %v1066
        %v1211 = vunpack.c.l.b16 %v1067
        %v1212 = vunpack.c.h.b16 %v1067
        %v1213 = vunpack.c.l.b16 %v1068
        %v1214 = vunpack.c.h.b16 %v1068
        %v1215 = vunpack.c.l.b16 %v1069
        %v1216 = vunpack.c.h.b16 %v1069
        %v1217 = vunpack.c.l.b16 %v1070
        %v1218 = vunpack.c.h.b16 %v1070
        %v1219 = vunpack.c.l.b16 %v1071
        %v1220 = vunpack.c.h.b16 %v1071
        %v1221 = vunpack.c.l.b16 %v1072
        %v1222 = vunpack.c.h.b16 %v1072
        %v1223 = vunpack.c.l.b16 %v1073
        %v1224 = vunpack.c.h.b16 %v1073
        %v1225 = vunpack.c.l.b16 %v1074
        %v1226 = vunpack.c.h.b16 %v1074
        %v1227 = vunpack.c.l.b16 %v1075
        %v1228 = vunpack.c.h.b16 %v1075
        %v1229 = vunpack.c.l.b16 %v1076
        %v1230 = vunpack.c.h.b16 %v1076
        %v1231 = vunpack.c.l.b16 %v1077
        %v1232 = vunpack.c.h.b16 %v1077
        %v1233 = vunpack.c.l.b16 %v1078
        %v1234 = vunpack.c.h.b16 %v1078
        %v1235 = vunpack.c.l.b16 %v1079
        %v1236 = vunpack.c.h.b16 %v1079
        %v1237 = vpack.c.b16 %v1205, %v1205
        %v1238 = vpack.c.b16 %v1206, %v1206
        %v1239 = vpack.c.b16 %v1207, %v1207
        %v1240 = vpack.c.b16 %v1208, %v1208
        %v1241 = vpack.c.b16 %v1209, %v1209
        %v1242 = vpack.c.b16 %v1210, %v1210
        %v1243 = vpack.c.b16 %v1211, %v1211
        %v1244 = vpack.c.b16 %v1212, %v1212
        %v1245 = vpack.c.b16 %v1213, %v1213
        %v1246 = vpack.c.b16 %v1214, %v1214
        %v1247 = vpack.c.b16 %v1215, %v1215
        %v1248 = vpack.c.b16 %v1216, %v1216
        %v1249 = vpack.c.b16 %v1217, %v1217
        %v1250 = vpack.c.b16 %v1218, %v1218
        %v1251 = vpack.c.b16 %v1219, %v1219
        %v1252 = vpack.c.b16 %v1220, %v1220
        %v1253 = vpack.c.b16 %v1221, %v1221
        %v1254 = vpack.c.b16 %v1222, %v1222
        %v1255 = vpack.c.b16 %v1223, %v1223
        %v1256 = vpack.c.b16 %v1224, %v1224
        %v1257 = vpack.c.b16 %v1225, %v1225
        %v1258 = vpack.c.b16 %v1226, %v1226
        %v1259 = vpack.c.b16 %v1227, %v1227
        %v1260 = vpack.c.b16 %v1228, %v1228
        %v1261 = vpack.c.b16 %v1229, %v1229
        %v1262 = vpack.c.b16 %v1230, %v1230
        %v1263 = vpack.c.b16 %v1231, %v1231
        %v1264 = vpack.c.b16 %v1232, %v1232
        %v1265 = vpack.c.b16 %v1233, %v1233
        %v1266 = vpack.c.b16 %v1234, %v1234
        %v1267 = vpack.c.b16 %v1235, %v1235
        %v1268 = vpack.c.b16 %v1236, %v1236
        %vm1269 = vsmask.f32 4368
        %vm1270 = vmor %vm1089, %vm1269
        %v1272 = vshrl.u32 %v1237, 16
        %v1274 = vrot.slane %v1272, 7
        %v1275 = vshll.u32 %v1237, 16
        %v1277 = vor.u32 %v1274, %v1275
        %v1278 = vrot.slane %v1274, 4
        %v1280 = vshrl.u32 %v1238, 16
        %v1282 = vrot.slane %v1280, 7
        %v1283 = vshll.u32 %v1238, 16
        %v1285 = vor.u32 %v1282, %v1283
        %v1286 = vsel %vm1270, %v1278, %v1285
        %v1287 = vrot.slane %v1282, 4
        %v1289 = vshrl.u32 %v1239, 16
        %v1291 = vrot.slane %v1289, 7
        %v1292 = vshll.u32 %v1239, 16
        %v1294 = vor.u32 %v1291, %v1292
        %v1295 = vrot.slane %v1291, 4
        %v1297 = vshrl.u32 %v1240, 16
        %v1299 = vrot.slane %v1297, 7
        %v1300 = vshll.u32 %v1240, 16
        %v1302 = vor.u32 %v1299, %v1300
        %v1303 = vsel %vm1270, %v1295, %v1302
        %v1304 = vrot.slane %v1299, 4
        %v1306 = vshrl.u32 %v1241, 16
        %v1308 = vrot.slane %v1306, 7
        %v1309 = vshll.u32 %v1241, 16
        %v1311 = vor.u32 %v1308, %v1309
        %v1312 = vrot.slane %v1308, 4
        %v1314 = vshrl.u32 %v1242, 16
        %v1316 = vrot.slane %v1314, 7
        %v1317 = vshll.u32 %v1242, 16
        %v1319 = vor.u32 %v1316, %v1317
        %v1320 = vsel %vm1270, %v1312, %v1319
        %v1321 = vrot.slane %v1316, 4
        %v1323 = vshrl.u32 %v1243, 16
        %v1325 = vrot.slane %v1323, 7
        %v1326 = vshll.u32 %v1243, 16
        %v1328 = vor.u32 %v1325, %v1326
        %v1329 = vrot.slane %v1325, 4
        %v1331 = vshrl.u32 %v1244, 16
        %v1333 = vrot.slane %v1331, 7
        %v1334 = vshll.u32 %v1244, 16
        %v1336 = vor.u32 %v1333, %v1334
        %v1337 = vsel %vm1270, %v1329, %v1336
        %v1338 = vrot.slane %v1333, 4
        %v1340 = vshrl.u32 %v1245, 16
        %v1342 = vrot.slane %v1340, 7
        %v1343 = vshll.u32 %v1245, 16
        %v1345 = vor.u32 %v1342, %v1343
        %v1346 = vrot.slane %v1342, 4
        %v1348 = vshrl.u32 %v1246, 16
        %v1350 = vrot.slane %v1348, 7
        %v1351 = vshll.u32 %v1246, 16
        %v1353 = vor.u32 %v1350, %v1351
        %v1354 = vsel %vm1270, %v1346, %v1353
        %v1355 = vrot.slane %v1350, 4
        %v1357 = vshrl.u32 %v1247, 16
        %v1359 = vrot.slane %v1357, 7
        %v1360 = vshll.u32 %v1247, 16
        %v1362 = vor.u32 %v1359, %v1360
        %v1363 = vrot.slane %v1359, 4
        %v1365 = vshrl.u32 %v1248, 16
        %v1367 = vrot.slane %v1365, 7
        %v1368 = vshll.u32 %v1248, 16
        %v1370 = vor.u32 %v1367, %v1368
        %v1371 = vsel %vm1270, %v1363, %v1370
        %v1372 = vrot.slane %v1367, 4
        %v1374 = vshrl.u32 %v1249, 16
        %v1376 = vrot.slane %v1374, 7
        %v1377 = vshll.u32 %v1249, 16
        %v1379 = vor.u32 %v1376, %v1377
        %v1380 = vrot.slane %v1376, 4
        %v1382 = vshrl.u32 %v1250, 16
        %v1384 = vrot.slane %v1382, 7
        %v1385 = vshll.u32 %v1250, 16
        %v1387 = vor.u32 %v1384, %v1385
        %v1388 = vsel %vm1270, %v1380, %v1387
        %v1389 = vrot.slane %v1384, 4
        %v1391 = vshrl.u32 %v1251, 16
        %v1393 = vrot.slane %v1391, 7
        %v1394 = vshll.u32 %v1251, 16
        %v1396 = vor.u32 %v1393, %v1394
        %v1397 = vrot.slane %v1393, 4
        %v1399 = vshrl.u32 %v1252, 16
        %v1401 = vrot.slane %v1399, 7
        %v1402 = vshll.u32 %v1252, 16
        %v1404 = vor.u32 %v1401, %v1402
        %v1405 = vsel %vm1270, %v1397, %v1404
        %v1406 = vrot.slane %v1401, 4
        %v1408 = vshrl.u32 %v1253, 16
        %v1410 = vrot.slane %v1408, 7
        %v1411 = vshll.u32 %v1253, 16
        %v1413 = vor.u32 %v1410, %v1411
        %v1414 = vrot.slane %v1410, 4
        %v1416 = vshrl.u32 %v1254, 16
        %v1418 = vrot.slane %v1416, 7
        %v1419 = vshll.u32 %v1254, 16
        %v1421 = vor.u32 %v1418, %v1419
        %v1422 = vsel %vm1270, %v1414, %v1421
        %v1423 = vrot.slane %v1418, 4
        %v1425 = vshrl.u32 %v1255, 16
        %v1427 = vrot.slane %v1425, 7
        %v1428 = vshll.u32 %v1255, 16
        %v1430 = vor.u32 %v1427, %v1428
        %v1431 = vrot.slane %v1427, 4
        %v1433 = vshrl.u32 %v1256, 16
        %v1435 = vrot.slane %v1433, 7
        %v1436 = vshll.u32 %v1256, 16
        %v1438 = vor.u32 %v1435, %v1436
        %v1439 = vsel %vm1270, %v1431, %v1438
        %v1440 = vrot.slane %v1435, 4
        %v1442 = vshrl.u32 %v1257, 16
        %v1444 = vrot.slane %v1442, 7
        %v1445 = vshll.u32 %v1257, 16
        %v1447 = vor.u32 %v1444, %v1445
        %v1448 = vrot.slane %v1444, 4
        %v1450 = vshrl.u32 %v1258, 16
        %v1452 = vrot.slane %v1450, 7
        %v1453 = vshll.u32 %v1258, 16
        %v1455 = vor.u32 %v1452, %v1453
        %v1456 = vsel %vm1270, %v1448, %v1455
        %v1457 = vrot.slane %v1452, 4
        %v1459 = vshrl.u32 %v1259, 16
        %v1461 = vrot.slane %v1459, 7
        %v1462 = vshll.u32 %v1259, 16
        %v1464 = vor.u32 %v1461, %v1462
        %v1465 = vrot.slane %v1461, 4
        %v1467 = vshrl.u32 %v1260, 16
        %v1469 = vrot.slane %v1467, 7
        %v1470 = vshll.u32 %v1260, 16
        %v1472 = vor.u32 %v1469, %v1470
        %v1473 = vsel %vm1270, %v1465, %v1472
        %v1474 = vrot.slane %v1469, 4
        %v1476 = vshrl.u32 %v1261, 16
        %v1478 = vrot.slane %v1476, 7
        %v1479 = vshll.u32 %v1261, 16
        %v1481 = vor.u32 %v1478, %v1479
        %v1482 = vrot.slane %v1478, 4
        %v1484 = vshrl.u32 %v1262, 16
        %v1486 = vrot.slane %v1484, 7
        %v1487 = vshll.u32 %v1262, 16
        %v1489 = vor.u32 %v1486, %v1487
        %v1490 = vsel %vm1270, %v1482, %v1489
        %v1491 = vrot.slane %v1486, 4
        %v1493 = vshrl.u32 %v1263, 16
        %v1495 = vrot.slane %v1493, 7
        %v1496 = vshll.u32 %v1263, 16
        %v1498 = vor.u32 %v1495, %v1496
        %v1499 = vrot.slane %v1495, 4
        %v1501 = vshrl.u32 %v1264, 16
        %v1503 = vrot.slane %v1501, 7
        %v1504 = vshll.u32 %v1264, 16
        %v1506 = vor.u32 %v1503, %v1504
        %v1507 = vsel %vm1270, %v1499, %v1506
        %v1508 = vrot.slane %v1503, 4
        %v1510 = vshrl.u32 %v1265, 16
        %v1512 = vrot.slane %v1510, 7
        %v1513 = vshll.u32 %v1265, 16
        %v1515 = vor.u32 %v1512, %v1513
        %v1516 = vrot.slane %v1512, 4
        %v1518 = vshrl.u32 %v1266, 16
        %v1520 = vrot.slane %v1518, 7
        %v1521 = vshll.u32 %v1266, 16
        %v1523 = vor.u32 %v1520, %v1521
        %v1524 = vsel %vm1270, %v1516, %v1523
        %v1525 = vrot.slane %v1520, 4
        %v1527 = vshrl.u32 %v1267, 16
        %v1529 = vrot.slane %v1527, 7
        %v1530 = vshll.u32 %v1267, 16
        %v1532 = vor.u32 %v1529, %v1530
        %v1533 = vrot.slane %v1529, 4
        %v1535 = vshrl.u32 %v1268, 16
        %v1537 = vrot.slane %v1535, 7
        %v1538 = vshll.u32 %v1268, 16
        %v1540 = vor.u32 %v1537, %v1538
        %v1541 = vsel %vm1270, %v1533, %v1540
        %v1542 = vrot.slane %v1537, 4
        %vm1591 = vcmask 1043456
        %vm1592 = vmand %vm1591, %vm1139
        %v1593 = vld [vmem:[%s1087] sm:$0xf]
        %v1594 = vsel %vm1592, %v1277, %v1593
        %1595 = vst [vmem:[%s1087] sm:$0xf] %v1594
        %1596 = vst [vmem:[%s1087 + $0x4] sm:$0xf] %v1286
        %v1597 = vld [vmem:[%s1087 + $0x8] sm:$0x1]
        %v1598 = vsel %vm1090, %v1287, %v1597
        %1599 = vst [vmem:[%s1087 + $0x8] sm:$0x1] %v1598
        %v1600 = vld [vmem:[%s1087 + $0xc] sm:$0xf]
        %v1601 = vsel %vm1592, %v1294, %v1600
        %1602 = vst [vmem:[%s1087 + $0xc] sm:$0xf] %v1601
        %1603 = vst [vmem:[%s1087 + $0x10] sm:$0xf] %v1303
        %v1604 = vld [vmem:[%s1087 + $0x14] sm:$0x1]
        %v1605 = vsel %vm1090, %v1304, %v1604
        %1606 = vst [vmem:[%s1087 + $0x14] sm:$0x1] %v1605
        %v1607 = vld [vmem:[%s1087 + $0x18] sm:$0xf]
        %v1608 = vsel %vm1592, %v1311, %v1607
        %1609 = vst [vmem:[%s1087 + $0x18] sm:$0xf] %v1608
        %1610 = vst [vmem:[%s1087 + $0x1c] sm:$0xf] %v1320
        %v1611 = vld [vmem:[%s1087 + $0x20] sm:$0x1]
        %v1612 = vsel %vm1090, %v1321, %v1611
        %1613 = vst [vmem:[%s1087 + $0x20] sm:$0x1] %v1612
        %v1614 = vld [vmem:[%s1087 + $0x24] sm:$0xf]
        %v1615 = vsel %vm1592, %v1328, %v1614
        %1616 = vst [vmem:[%s1087 + $0x24] sm:$0xf] %v1615
        %1617 = vst [vmem:[%s1087 + $0x28] sm:$0xf] %v1337
        %v1618 = vld [vmem:[%s1087 + $0x2c] sm:$0x1]
        %v1619 = vsel %vm1090, %v1338, %v1618
        %1620 = vst [vmem:[%s1087 + $0x2c] sm:$0x1] %v1619
        %v1621 = vld [vmem:[%s1087 + $0x30] sm:$0xf]
        %v1622 = vsel %vm1592, %v1345, %v1621
        %1623 = vst [vmem:[%s1087 + $0x30] sm:$0xf] %v1622
        %1624 = vst [vmem:[%s1087 + $0x34] sm:$0xf] %v1354
        %v1625 = vld [vmem:[%s1087 + $0x38] sm:$0x1]
        %v1626 = vsel %vm1090, %v1355, %v1625
        %1627 = vst [vmem:[%s1087 + $0x38] sm:$0x1] %v1626
        %v1628 = vld [vmem:[%s1087 + $0x3c] sm:$0xf]
        %v1629 = vsel %vm1592, %v1362, %v1628
        %1630 = vst [vmem:[%s1087 + $0x3c] sm:$0xf] %v1629
        %1631 = vst [vmem:[%s1087 + $0x40] sm:$0xf] %v1371
        %v1632 = vld [vmem:[%s1087 + $0x44] sm:$0x1]
        %v1633 = vsel %vm1090, %v1372, %v1632
        %1634 = vst [vmem:[%s1087 + $0x44] sm:$0x1] %v1633
        %v1635 = vld [vmem:[%s1087 + $0x48] sm:$0xf]
        %v1636 = vsel %vm1592, %v1379, %v1635
        %1637 = vst [vmem:[%s1087 + $0x48] sm:$0xf] %v1636
        %1638 = vst [vmem:[%s1087 + $0x4c] sm:$0xf] %v1388
        %v1639 = vld [vmem:[%s1087 + $0x50] sm:$0x1]
        %v1640 = vsel %vm1090, %v1389, %v1639
        %1641 = vst [vmem:[%s1087 + $0x50] sm:$0x1] %v1640
        %v1642 = vld [vmem:[%s1087 + $0x54] sm:$0xf]
        %v1643 = vsel %vm1592, %v1396, %v1642
        %1644 = vst [vmem:[%s1087 + $0x54] sm:$0xf] %v1643
        %1645 = vst [vmem:[%s1087 + $0x58] sm:$0xf] %v1405
        %v1646 = vld [vmem:[%s1087 + $0x5c] sm:$0x1]
        %v1647 = vsel %vm1090, %v1406, %v1646
        %1648 = vst [vmem:[%s1087 + $0x5c] sm:$0x1] %v1647
        %v1649 = vld [vmem:[%s1087 + $0x60] sm:$0xf]
        %v1650 = vsel %vm1592, %v1413, %v1649
        %1651 = vst [vmem:[%s1087 + $0x60] sm:$0xf] %v1650
        %1652 = vst [vmem:[%s1087 + $0x64] sm:$0xf] %v1422
        %v1653 = vld [vmem:[%s1087 + $0x68] sm:$0x1]
        %v1654 = vsel %vm1090, %v1423, %v1653
        %1655 = vst [vmem:[%s1087 + $0x68] sm:$0x1] %v1654
        %v1656 = vld [vmem:[%s1087 + $0x6c] sm:$0xf]
        %v1657 = vsel %vm1592, %v1430, %v1656
        %1658 = vst [vmem:[%s1087 + $0x6c] sm:$0xf] %v1657
        %1659 = vst [vmem:[%s1087 + $0x70] sm:$0xf] %v1439
        %v1660 = vld [vmem:[%s1087 + $0x74] sm:$0x1]
        %v1661 = vsel %vm1090, %v1440, %v1660
        %1662 = vst [vmem:[%s1087 + $0x74] sm:$0x1] %v1661
        %v1663 = vld [vmem:[%s1087 + $0x78] sm:$0xf]
        %v1664 = vsel %vm1592, %v1447, %v1663
        %1665 = vst [vmem:[%s1087 + $0x78] sm:$0xf] %v1664
        %1666 = vst [vmem:[%s1087 + $0x7c] sm:$0xf] %v1456
        %v1667 = vld [vmem:[%s1087 + $0x80] sm:$0x1]
        %v1668 = vsel %vm1090, %v1457, %v1667
        %1669 = vst [vmem:[%s1087 + $0x80] sm:$0x1] %v1668
        %v1670 = vld [vmem:[%s1087 + $0x84] sm:$0xf]
        %v1671 = vsel %vm1592, %v1464, %v1670
        %1672 = vst [vmem:[%s1087 + $0x84] sm:$0xf] %v1671
        %1673 = vst [vmem:[%s1087 + $0x88] sm:$0xf] %v1473
        %v1674 = vld [vmem:[%s1087 + $0x8c] sm:$0x1]
        %v1675 = vsel %vm1090, %v1474, %v1674
        %1676 = vst [vmem:[%s1087 + $0x8c] sm:$0x1] %v1675
        %v1677 = vld [vmem:[%s1087 + $0x90] sm:$0xf]
        %v1678 = vsel %vm1592, %v1481, %v1677
        %1679 = vst [vmem:[%s1087 + $0x90] sm:$0xf] %v1678
        %1680 = vst [vmem:[%s1087 + $0x94] sm:$0xf] %v1490
        %v1681 = vld [vmem:[%s1087 + $0x98] sm:$0x1]
        %v1682 = vsel %vm1090, %v1491, %v1681
        %1683 = vst [vmem:[%s1087 + $0x98] sm:$0x1] %v1682
        %v1684 = vld [vmem:[%s1087 + $0x9c] sm:$0xf]
        %v1685 = vsel %vm1592, %v1498, %v1684
        %1686 = vst [vmem:[%s1087 + $0x9c] sm:$0xf] %v1685
        %1687 = vst [vmem:[%s1087 + $0xa0] sm:$0xf] %v1507
        %v1688 = vld [vmem:[%s1087 + $0xa4] sm:$0x1]
        %v1689 = vsel %vm1090, %v1508, %v1688
        %1690 = vst [vmem:[%s1087 + $0xa4] sm:$0x1] %v1689
        %v1691 = vld [vmem:[%s1087 + $0xa8] sm:$0xf]
        %v1692 = vsel %vm1592, %v1515, %v1691
        %1693 = vst [vmem:[%s1087 + $0xa8] sm:$0xf] %v1692
        %1694 = vst [vmem:[%s1087 + $0xac] sm:$0xf] %v1524
        %v1695 = vld [vmem:[%s1087 + $0xb0] sm:$0x1]
        %v1696 = vsel %vm1090, %v1525, %v1695
        %1697 = vst [vmem:[%s1087 + $0xb0] sm:$0x1] %v1696
        %v1698 = vld [vmem:[%s1087 + $0xb4] sm:$0xf]
        %v1699 = vsel %vm1592, %v1532, %v1698
        %1700 = vst [vmem:[%s1087 + $0xb4] sm:$0xf] %v1699
        %1701 = vst [vmem:[%s1087 + $0xb8] sm:$0xf] %v1541
        %v1702 = vld [vmem:[%s1087 + $0xbc] sm:$0x1]
        %v1703 = vsel %vm1090, %v1542, %v1702
        %1704 = vst [vmem:[%s1087 + $0xbc] sm:$0x1] %v1703
        %v1705 = vld [vmem:[#allocation8] sm:$0x3]
        %v1706 = vld [vmem:[#allocation8 + $0x2] sm:$0x3]
        %v1707 = vld [vmem:[#allocation8 + $0x4] sm:$0x3]
        %v1708 = vld [vmem:[#allocation2] sm:$0xf]
        %v1709 = vld [vmem:[#allocation2 + $0x4] sm:$0xf]
        %v1710 = vld [vmem:[#allocation2 + $0x8] sm:$0x1]
        %v1711 = vld [vmem:[#allocation2 + $0xc] sm:$0xf]
        %v1712 = vld [vmem:[#allocation2 + $0x10] sm:$0xf]
        %v1713 = vld [vmem:[#allocation2 + $0x14] sm:$0x1]
        %v1714 = vld [vmem:[#allocation2 + $0x18] sm:$0xf]
        %v1715 = vld [vmem:[#allocation2 + $0x1c] sm:$0xf]
        %v1716 = vld [vmem:[#allocation2 + $0x20] sm:$0x1]
        %v1717 = vld [vmem:[#allocation2 + $0x24] sm:$0xf]
        %v1718 = vld [vmem:[#allocation2 + $0x28] sm:$0xf]
        %v1719 = vld [vmem:[#allocation2 + $0x2c] sm:$0x1]
        %v1720 = vld [vmem:[#allocation2 + $0x30] sm:$0xf]
        %v1721 = vld [vmem:[#allocation2 + $0x34] sm:$0xf]
        %v1722 = vld [vmem:[#allocation2 + $0x38] sm:$0x1]
        %v1723 = vld [vmem:[#allocation2 + $0x3c] sm:$0xf]
        %v1724 = vld [vmem:[#allocation2 + $0x40] sm:$0xf]
        %v1725 = vld [vmem:[#allocation2 + $0x44] sm:$0x1]
        %v1726 = vld [vmem:[#allocation2 + $0x48] sm:$0xf]
        %v1727 = vld [vmem:[#allocation2 + $0x4c] sm:$0xf]
        %v1728 = vld [vmem:[#allocation2 + $0x50] sm:$0x1]
        %v1729 = vld [vmem:[#allocation2 + $0x54] sm:$0xf]
        %v1730 = vld [vmem:[#allocation2 + $0x58] sm:$0xf]
        %v1731 = vld [vmem:[#allocation2 + $0x5c] sm:$0x1]
        %v1732 = vld [vmem:[#allocation2 + $0x60] sm:$0xf]
        %v1733 = vld [vmem:[#allocation2 + $0x64] sm:$0xf]
        %v1734 = vld [vmem:[#allocation2 + $0x68] sm:$0x1]
        %v1735 = vld [vmem:[#allocation2 + $0x6c] sm:$0xf]
        %v1736 = vld [vmem:[#allocation2 + $0x70] sm:$0xf]
        %v1737 = vld [vmem:[#allocation2 + $0x74] sm:$0x1]
        %v1738 = vld [vmem:[#allocation2 + $0x78] sm:$0xf]
        %v1739 = vld [vmem:[#allocation2 + $0x7c] sm:$0xf]
        %v1740 = vld [vmem:[#allocation2 + $0x80] sm:$0x1]
        %v1741 = vld [vmem:[#allocation2 + $0x84] sm:$0xf]
        %v1742 = vld [vmem:[#allocation2 + $0x88] sm:$0xf]
        %v1743 = vld [vmem:[#allocation2 + $0x8c] sm:$0x1]
        %v1744 = vld [vmem:[#allocation2 + $0x90] sm:$0xf]
        %v1745 = vld [vmem:[#allocation2 + $0x94] sm:$0xf]
        %v1746 = vld [vmem:[#allocation2 + $0x98] sm:$0x1]
        %v1747 = vld [vmem:[#allocation2 + $0x9c] sm:$0xf]
        %v1748 = vld [vmem:[#allocation2 + $0xa0] sm:$0xf]
        %v1749 = vld [vmem:[#allocation2 + $0xa4] sm:$0x1]
        %v1750 = vld [vmem:[#allocation2 + $0xa8] sm:$0xf]
        %v1751 = vld [vmem:[#allocation2 + $0xac] sm:$0xf]
        %v1752 = vld [vmem:[#allocation2 + $0xb0] sm:$0x1]
        %v1753 = vld [vmem:[#allocation2 + $0xb4] sm:$0xf]
        %v1754 = vld [vmem:[#allocation2 + $0xb8] sm:$0xf]
        %v1755 = vld [vmem:[#allocation2 + $0xbc] sm:$0x1]
        %v1757 = vpack.i.b16 %v1705, %v1705
        %v1759 = vlaneseq
        %v1760 = vshrl.u32 %v1759, 7
        %v1761 = vsub.s32 0, %v1760
        %v1762 = vrot.slane %v1757, %v1761
        %v1764 = vunpack.c.l.b16 %v1762
        %v1765 = vpack.c.b16 %v1764, %v1764
        %v1767 = vmul.bf16 %v1708, %v1765
        %v1768 = vmul.bf16 %v1709, %v1765
        %v1769 = vmul.bf16 %v1711, %v1765
        %v1770 = vmul.bf16 %v1712, %v1765
        %v1771 = vmul.bf16 %v1714, %v1765
        %v1772 = vmul.bf16 %v1715, %v1765
        %v1773 = vmul.bf16 %v1717, %v1765
        %v1774 = vmul.bf16 %v1718, %v1765
        %v1775 = vmul.bf16 %v1720, %v1765
        %v1776 = vmul.bf16 %v1721, %v1765
        %v1777 = vmul.bf16 %v1723, %v1765
        %v1778 = vmul.bf16 %v1724, %v1765
        %v1779 = vmul.bf16 %v1726, %v1765
        %v1780 = vmul.bf16 %v1727, %v1765
        %v1781 = vmul.bf16 %v1729, %v1765
        %v1782 = vmul.bf16 %v1730, %v1765
        %v1783 = vmul.bf16 %v1732, %v1765
        %v1784 = vmul.bf16 %v1733, %v1765
        %v1785 = vmul.bf16 %v1735, %v1765
        %v1786 = vmul.bf16 %v1736, %v1765
        %v1787 = vmul.bf16 %v1738, %v1765
        %v1788 = vmul.bf16 %v1739, %v1765
        %v1789 = vmul.bf16 %v1741, %v1765
        %v1790 = vmul.bf16 %v1742, %v1765
        %v1791 = vmul.bf16 %v1744, %v1765
        %v1792 = vmul.bf16 %v1745, %v1765
        %v1793 = vmul.bf16 %v1747, %v1765
        %v1794 = vmul.bf16 %v1748, %v1765
        %v1795 = vmul.bf16 %v1750, %v1765
        %v1796 = vmul.bf16 %v1751, %v1765
        %v1797 = vmul.bf16 %v1753, %v1765
        %v1798 = vmul.bf16 %v1754, %v1765
        %v1799 = vunpack.c.l.bf16 %v1767
        %v1800 = vunpack.c.l.bf16 %v1768
        %v1801 = vunpack.c.l.bf16 %v1769
        %v1802 = vunpack.c.l.bf16 %v1770
        %v1803 = vunpack.c.l.bf16 %v1771
        %v1804 = vunpack.c.l.bf16 %v1772
        %v1805 = vunpack.c.l.bf16 %v1773
        %v1806 = vunpack.c.l.bf16 %v1774
        %v1807 = vunpack.c.l.bf16 %v1775
        %v1808 = vunpack.c.l.bf16 %v1776
        %v1809 = vunpack.c.l.bf16 %v1777
        %v1810 = vunpack.c.l.bf16 %v1778
        %v1811 = vunpack.c.l.bf16 %v1779
        %v1812 = vunpack.c.l.bf16 %v1780
        %v1813 = vunpack.c.l.bf16 %v1781
        %v1814 = vunpack.c.l.bf16 %v1782
        %v1815 = vunpack.c.l.bf16 %v1783
        %v1816 = vunpack.c.l.bf16 %v1784
        %v1817 = vunpack.c.l.bf16 %v1785
        %v1818 = vunpack.c.l.bf16 %v1786
        %v1819 = vunpack.c.l.bf16 %v1787
        %v1820 = vunpack.c.l.bf16 %v1788
        %v1821 = vunpack.c.l.bf16 %v1789
        %v1822 = vunpack.c.l.bf16 %v1790
        %v1823 = vunpack.c.l.bf16 %v1791
        %v1824 = vunpack.c.l.bf16 %v1792
        %v1825 = vunpack.c.l.bf16 %v1793
        %v1826 = vunpack.c.l.bf16 %v1794
        %v1827 = vunpack.c.l.bf16 %v1795
        %v1828 = vunpack.c.l.bf16 %v1796
        %v1829 = vunpack.c.l.bf16 %v1797
        %v1830 = vunpack.c.l.bf16 %v1798
        %v1831 = vshrl.u32 %v1705, 16
        %v1832 = vpack.i.b16 %v1831, %v1831
        %v1834 = vlaneseq
        %v1835 = vshrl.u32 %v1834, 7
        %v1836 = vsub.s32 0, %v1835
        %v1837 = vrot.slane %v1832, %v1836
        %v1839 = vunpack.c.l.b16 %v1837
        %v1840 = vpack.c.b16 %v1839, %v1839
        %v1842 = vmul.bf16 %v1708, %v1840
        %v1843 = vmul.bf16 %v1709, %v1840
        %v1844 = vmul.bf16 %v1710, %v1840
        %v1845 = vmul.bf16 %v1711, %v1840
        %v1846 = vmul.bf16 %v1712, %v1840
        %v1847 = vmul.bf16 %v1713, %v1840
        %v1848 = vmul.bf16 %v1714, %v1840
        %v1849 = vmul.bf16 %v1715, %v1840
        %v1850 = vmul.bf16 %v1716, %v1840
        %v1851 = vmul.bf16 %v1717, %v1840
        %v1852 = vmul.bf16 %v1718, %v1840
        %v1853 = vmul.bf16 %v1719, %v1840
        %v1854 = vmul.bf16 %v1720, %v1840
        %v1855 = vmul.bf16 %v1721, %v1840
        %v1856 = vmul.bf16 %v1722, %v1840
        %v1857 = vmul.bf16 %v1723, %v1840
        %v1858 = vmul.bf16 %v1724, %v1840
        %v1859 = vmul.bf16 %v1725, %v1840
        %v1860 = vmul.bf16 %v1726, %v1840
        %v1861 = vmul.bf16 %v1727, %v1840
        %v1862 = vmul.bf16 %v1728, %v1840
        %v1863 = vmul.bf16 %v1729, %v1840
        %v1864 = vmul.bf16 %v1730, %v1840
        %v1865 = vmul.bf16 %v1731, %v1840
        %v1866 = vmul.bf16 %v1732, %v1840
        %v1867 = vmul.bf16 %v1733, %v1840
        %v1868 = vmul.bf16 %v1734, %v1840
        %v1869 = vmul.bf16 %v1735, %v1840
        %v1870 = vmul.bf16 %v1736, %v1840
        %v1871 = vmul.bf16 %v1737, %v1840
        %v1872 = vmul.bf16 %v1738, %v1840
        %v1873 = vmul.bf16 %v1739, %v1840
        %v1874 = vmul.bf16 %v1740, %v1840
        %v1875 = vmul.bf16 %v1741, %v1840
        %v1876 = vmul.bf16 %v1742, %v1840
        %v1877 = vmul.bf16 %v1743, %v1840
        %v1878 = vmul.bf16 %v1744, %v1840
        %v1879 = vmul.bf16 %v1745, %v1840
        %v1880 = vmul.bf16 %v1746, %v1840
        %v1881 = vmul.bf16 %v1747, %v1840
        %v1882 = vmul.bf16 %v1748, %v1840
        %v1883 = vmul.bf16 %v1749, %v1840
        %v1884 = vmul.bf16 %v1750, %v1840
        %v1885 = vmul.bf16 %v1751, %v1840
        %v1886 = vmul.bf16 %v1752, %v1840
        %v1887 = vmul.bf16 %v1753, %v1840
        %v1888 = vmul.bf16 %v1754, %v1840
        %v1889 = vmul.bf16 %v1755, %v1840
        %v1890 = vunpack.c.l.bf16 %v1842
        %v1891 = vunpack.c.l.bf16 %v1843
        %v1892 = vunpack.c.l.bf16 %v1844
        %v1893 = vunpack.c.l.bf16 %v1845
        %v1894 = vunpack.c.l.bf16 %v1846
        %v1895 = vunpack.c.l.bf16 %v1847
        %v1896 = vunpack.c.l.bf16 %v1848
        %v1897 = vunpack.c.l.bf16 %v1849
        %v1898 = vunpack.c.l.bf16 %v1850
        %v1899 = vunpack.c.l.bf16 %v1851
        %v1900 = vunpack.c.l.bf16 %v1852
        %v1901 = vunpack.c.l.bf16 %v1853
        %v1902 = vunpack.c.l.bf16 %v1854
        %v1903 = vunpack.c.l.bf16 %v1855
        %v1904 = vunpack.c.l.bf16 %v1856
        %v1905 = vunpack.c.l.bf16 %v1857
        %v1906 = vunpack.c.l.bf16 %v1858
        %v1907 = vunpack.c.l.bf16 %v1859
        %v1908 = vunpack.c.l.bf16 %v1860
        %v1909 = vunpack.c.l.bf16 %v1861
        %v1910 = vunpack.c.l.bf16 %v1862
        %v1911 = vunpack.c.l.bf16 %v1863
        %v1912 = vunpack.c.l.bf16 %v1864
        %v1913 = vunpack.c.l.bf16 %v1865
        %v1914 = vunpack.c.l.bf16 %v1866
        %v1915 = vunpack.c.l.bf16 %v1867
        %v1916 = vunpack.c.l.bf16 %v1868
        %v1917 = vunpack.c.l.bf16 %v1869
        %v1918 = vunpack.c.l.bf16 %v1870
        %v1919 = vunpack.c.l.bf16 %v1871
        %v1920 = vunpack.c.l.bf16 %v1872
        %v1921 = vunpack.c.l.bf16 %v1873
        %v1922 = vunpack.c.l.bf16 %v1874
        %v1923 = vunpack.c.l.bf16 %v1875
        %v1924 = vunpack.c.l.bf16 %v1876
        %v1925 = vunpack.c.l.bf16 %v1877
        %v1926 = vunpack.c.l.bf16 %v1878
        %v1927 = vunpack.c.l.bf16 %v1879
        %v1928 = vunpack.c.l.bf16 %v1880
        %v1929 = vunpack.c.l.bf16 %v1881
        %v1930 = vunpack.c.l.bf16 %v1882
        %v1931 = vunpack.c.l.bf16 %v1883
        %v1932 = vunpack.c.l.bf16 %v1884
        %v1933 = vunpack.c.l.bf16 %v1885
        %v1934 = vunpack.c.l.bf16 %v1886
        %v1935 = vunpack.c.l.bf16 %v1887
        %v1936 = vunpack.c.l.bf16 %v1888
        %v1937 = vunpack.c.l.bf16 %v1889
        %vm1986 = vcmask 1046528
        %v1987 = vrot.slane %v1890, 1
        %v1988 = vrot.slane %v1891, 1
        %v1989 = vsel %vm1986, %v1987, %v1988
        %v1990 = vrot.slane %v1892, 1
        %v1991 = vsel %vm1986, %v1988, %v1990
        %v1992 = vrot.slane %v1893, 1
        %v1993 = vrot.slane %v1894, 1
        %v1994 = vsel %vm1986, %v1992, %v1993
        %v1995 = vrot.slane %v1895, 1
        %v1996 = vsel %vm1986, %v1993, %v1995
        %v1997 = vrot.slane %v1896, 1
        %v1998 = vrot.slane %v1897, 1
        %v1999 = vsel %vm1986, %v1997, %v1998
        %v2000 = vrot.slane %v1898, 1
        %v2001 = vsel %vm1986, %v1998, %v2000
        %v2002 = vrot.slane %v1899, 1
        %v2003 = vrot.slane %v1900, 1
        %v2004 = vsel %vm1986, %v2002, %v2003
        %v2005 = vrot.slane %v1901, 1
        %v2006 = vsel %vm1986, %v2003, %v2005
        %v2007 = vrot.slane %v1902, 1
        %v2008 = vrot.slane %v1903, 1
        %v2009 = vsel %vm1986, %v2007, %v2008
        %v2010 = vrot.slane %v1904, 1
        %v2011 = vsel %vm1986, %v2008, %v2010
        %v2012 = vrot.slane %v1905, 1
        %v2013 = vrot.slane %v1906, 1
        %v2014 = vsel %vm1986, %v2012, %v2013
        %v2015 = vrot.slane %v1907, 1
        %v2016 = vsel %vm1986, %v2013, %v2015
        %v2017 = vrot.slane %v1908, 1
        %v2018 = vrot.slane %v1909, 1
        %v2019 = vsel %vm1986, %v2017, %v2018
        %v2020 = vrot.slane %v1910, 1
        %v2021 = vsel %vm1986, %v2018, %v2020
        %v2022 = vrot.slane %v1911, 1
        %v2023 = vrot.slane %v1912, 1
        %v2024 = vsel %vm1986, %v2022, %v2023
        %v2025 = vrot.slane %v1913, 1
        %v2026 = vsel %vm1986, %v2023, %v2025
        %v2027 = vrot.slane %v1914, 1
        %v2028 = vrot.slane %v1915, 1
        %v2029 = vsel %vm1986, %v2027, %v2028
        %v2030 = vrot.slane %v1916, 1
        %v2031 = vsel %vm1986, %v2028, %v2030
        %v2032 = vrot.slane %v1917, 1
        %v2033 = vrot.slane %v1918, 1
        %v2034 = vsel %vm1986, %v2032, %v2033
        %v2035 = vrot.slane %v1919, 1
        %v2036 = vsel %vm1986, %v2033, %v2035
        %v2037 = vrot.slane %v1920, 1
        %v2038 = vrot.slane %v1921, 1
        %v2039 = vsel %vm1986, %v2037, %v2038
        %v2040 = vrot.slane %v1922, 1
        %v2041 = vsel %vm1986, %v2038, %v2040
        %v2042 = vrot.slane %v1923, 1
        %v2043 = vrot.slane %v1924, 1
        %v2044 = vsel %vm1986, %v2042, %v2043
        %v2045 = vrot.slane %v1925, 1
        %v2046 = vsel %vm1986, %v2043, %v2045
        %v2047 = vrot.slane %v1926, 1
        %v2048 = vrot.slane %v1927, 1
        %v2049 = vsel %vm1986, %v2047, %v2048
        %v2050 = vrot.slane %v1928, 1
        %v2051 = vsel %vm1986, %v2048, %v2050
        %v2052 = vrot.slane %v1929, 1
        %v2053 = vrot.slane %v1930, 1
        %v2054 = vsel %vm1986, %v2052, %v2053
        %v2055 = vrot.slane %v1931, 1
        %v2056 = vsel %vm1986, %v2053, %v2055
        %v2057 = vrot.slane %v1932, 1
        %v2058 = vrot.slane %v1933, 1
        %v2059 = vsel %vm1986, %v2057, %v2058
        %v2060 = vrot.slane %v1934, 1
        %v2061 = vsel %vm1986, %v2058, %v2060
        %v2062 = vrot.slane %v1935, 1
        %v2063 = vrot.slane %v1936, 1
        %v2064 = vsel %vm1986, %v2062, %v2063
        %v2065 = vrot.slane %v1937, 1
        %v2066 = vsel %vm1986, %v2063, %v2065
        %v2099 = vadd.f32 %v1799, %v1989
        %v2100 = vadd.f32 %v1800, %v1991
        %v2101 = vadd.f32 %v1801, %v1994
        %v2102 = vadd.f32 %v1802, %v1996
        %v2103 = vadd.f32 %v1803, %v1999
        %v2104 = vadd.f32 %v1804, %v2001
        %v2105 = vadd.f32 %v1805, %v2004
        %v2106 = vadd.f32 %v1806, %v2006
        %v2107 = vadd.f32 %v1807, %v2009
        %v2108 = vadd.f32 %v1808, %v2011
        %v2109 = vadd.f32 %v1809, %v2014
        %v2110 = vadd.f32 %v1810, %v2016
        %v2111 = vadd.f32 %v1811, %v2019
        %v2112 = vadd.f32 %v1812, %v2021
        %v2113 = vadd.f32 %v1813, %v2024
        %v2114 = vadd.f32 %v1814, %v2026
        %v2115 = vadd.f32 %v1815, %v2029
        %v2116 = vadd.f32 %v1816, %v2031
        %v2117 = vadd.f32 %v1817, %v2034
        %v2118 = vadd.f32 %v1818, %v2036
        %v2119 = vadd.f32 %v1819, %v2039
        %v2120 = vadd.f32 %v1820, %v2041
        %v2121 = vadd.f32 %v1821, %v2044
        %v2122 = vadd.f32 %v1822, %v2046
        %v2123 = vadd.f32 %v1823, %v2049
        %v2124 = vadd.f32 %v1824, %v2051
        %v2125 = vadd.f32 %v1825, %v2054
        %v2126 = vadd.f32 %v1826, %v2056
        %v2127 = vadd.f32 %v1827, %v2059
        %v2128 = vadd.f32 %v1828, %v2061
        %v2129 = vadd.f32 %v1829, %v2064
        %v2130 = vadd.f32 %v1830, %v2066
        %v2131 = vlaneseq
        %v2132 = vshrl.u32 %v2131, 7
        %v2133 = vsub.s32 1, %v2132
        %v2134 = vrot.slane %v1757, %v2133
        %v2136 = vunpack.c.l.b16 %v2134
        %v2137 = vpack.c.b16 %v2136, %v2136
        %v2139 = vmul.bf16 %v1708, %v2137
        %v2140 = vmul.bf16 %v1709, %v2137
        %v2141 = vmul.bf16 %v1710, %v2137
        %v2142 = vmul.bf16 %v1711, %v2137
        %v2143 = vmul.bf16 %v1712, %v2137
        %v2144 = vmul.bf16 %v1713, %v2137
        %v2145 = vmul.bf16 %v1714, %v2137
        %v2146 = vmul.bf16 %v1715, %v2137
        %v2147 = vmul.bf16 %v1716, %v2137
        %v2148 = vmul.bf16 %v1717, %v2137
        %v2149 = vmul.bf16 %v1718, %v2137
        %v2150 = vmul.bf16 %v1719, %v2137
        %v2151 = vmul.bf16 %v1720, %v2137
        %v2152 = vmul.bf16 %v1721, %v2137
        %v2153 = vmul.bf16 %v1722, %v2137
        %v2154 = vmul.bf16 %v1723, %v2137
        %v2155 = vmul.bf16 %v1724, %v2137
        %v2156 = vmul.bf16 %v1725, %v2137
        %v2157 = vmul.bf16 %v1726, %v2137
        %v2158 = vmul.bf16 %v1727, %v2137
        %v2159 = vmul.bf16 %v1728, %v2137
        %v2160 = vmul.bf16 %v1729, %v2137
        %v2161 = vmul.bf16 %v1730, %v2137
        %v2162 = vmul.bf16 %v1731, %v2137
        %v2163 = vmul.bf16 %v1732, %v2137
        %v2164 = vmul.bf16 %v1733, %v2137
        %v2165 = vmul.bf16 %v1734, %v2137
        %v2166 = vmul.bf16 %v1735, %v2137
        %v2167 = vmul.bf16 %v1736, %v2137
        %v2168 = vmul.bf16 %v1737, %v2137
        %v2169 = vmul.bf16 %v1738, %v2137
        %v2170 = vmul.bf16 %v1739, %v2137
        %v2171 = vmul.bf16 %v1740, %v2137
        %v2172 = vmul.bf16 %v1741, %v2137
        %v2173 = vmul.bf16 %v1742, %v2137
        %v2174 = vmul.bf16 %v1743, %v2137
        %v2175 = vmul.bf16 %v1744, %v2137
        %v2176 = vmul.bf16 %v1745, %v2137
        %v2177 = vmul.bf16 %v1746, %v2137
        %v2178 = vmul.bf16 %v1747, %v2137
        %v2179 = vmul.bf16 %v1748, %v2137
        %v2180 = vmul.bf16 %v1749, %v2137
        %v2181 = vmul.bf16 %v1750, %v2137
        %v2182 = vmul.bf16 %v1751, %v2137
        %v2183 = vmul.bf16 %v1752, %v2137
        %v2184 = vmul.bf16 %v1753, %v2137
        %v2185 = vmul.bf16 %v1754, %v2137
        %v2186 = vmul.bf16 %v1755, %v2137
        %v2187 = vunpack.c.l.bf16 %v2139
        %v2188 = vunpack.c.l.bf16 %v2140
        %v2189 = vunpack.c.l.bf16 %v2141
        %v2190 = vunpack.c.l.bf16 %v2142
        %v2191 = vunpack.c.l.bf16 %v2143
        %v2192 = vunpack.c.l.bf16 %v2144
        %v2193 = vunpack.c.l.bf16 %v2145
        %v2194 = vunpack.c.l.bf16 %v2146
        %v2195 = vunpack.c.l.bf16 %v2147
        %v2196 = vunpack.c.l.bf16 %v2148
        %v2197 = vunpack.c.l.bf16 %v2149
        %v2198 = vunpack.c.l.bf16 %v2150
        %v2199 = vunpack.c.l.bf16 %v2151
        %v2200 = vunpack.c.l.bf16 %v2152
        %v2201 = vunpack.c.l.bf16 %v2153
        %v2202 = vunpack.c.l.bf16 %v2154
        %v2203 = vunpack.c.l.bf16 %v2155
        %v2204 = vunpack.c.l.bf16 %v2156
        %v2205 = vunpack.c.l.bf16 %v2157
        %v2206 = vunpack.c.l.bf16 %v2158
        %v2207 = vunpack.c.l.bf16 %v2159
        %v2208 = vunpack.c.l.bf16 %v2160
        %v2209 = vunpack.c.l.bf16 %v2161
        %v2210 = vunpack.c.l.bf16 %v2162
        %v2211 = vunpack.c.l.bf16 %v2163
        %v2212 = vunpack.c.l.bf16 %v2164
        %v2213 = vunpack.c.l.bf16 %v2165
        %v2214 = vunpack.c.l.bf16 %v2166
        %v2215 = vunpack.c.l.bf16 %v2167
        %v2216 = vunpack.c.l.bf16 %v2168
        %v2217 = vunpack.c.l.bf16 %v2169
        %v2218 = vunpack.c.l.bf16 %v2170
        %v2219 = vunpack.c.l.bf16 %v2171
        %v2220 = vunpack.c.l.bf16 %v2172
        %v2221 = vunpack.c.l.bf16 %v2173
        %v2222 = vunpack.c.l.bf16 %v2174
        %v2223 = vunpack.c.l.bf16 %v2175
        %v2224 = vunpack.c.l.bf16 %v2176
        %v2225 = vunpack.c.l.bf16 %v2177
        %v2226 = vunpack.c.l.bf16 %v2178
        %v2227 = vunpack.c.l.bf16 %v2179
        %v2228 = vunpack.c.l.bf16 %v2180
        %v2229 = vunpack.c.l.bf16 %v2181
        %v2230 = vunpack.c.l.bf16 %v2182
        %v2231 = vunpack.c.l.bf16 %v2183
        %v2232 = vunpack.c.l.bf16 %v2184
        %v2233 = vunpack.c.l.bf16 %v2185
        %v2234 = vunpack.c.l.bf16 %v2186
        %vm2283 = vcmask 1045504
        %v2284 = vrot.slane %v2187, 2
        %v2285 = vrot.slane %v2188, 2
        %v2286 = vsel %vm2283, %v2284, %v2285
        %v2287 = vrot.slane %v2189, 2
        %v2288 = vsel %vm2283, %v2285, %v2287
        %v2289 = vrot.slane %v2190, 2
        %v2290 = vrot.slane %v2191, 2
        %v2291 = vsel %vm2283, %v2289, %v2290
        %v2292 = vrot.slane %v2192, 2
        %v2293 = vsel %vm2283, %v2290, %v2292
        %v2294 = vrot.slane %v2193, 2
        %v2295 = vrot.slane %v2194, 2
        %v2296 = vsel %vm2283, %v2294, %v2295
        %v2297 = vrot.slane %v2195, 2
        %v2298 = vsel %vm2283, %v2295, %v2297
        %v2299 = vrot.slane %v2196, 2
        %v2300 = vrot.slane %v2197, 2
        %v2301 = vsel %vm2283, %v2299, %v2300
        %v2302 = vrot.slane %v2198, 2
        %v2303 = vsel %vm2283, %v2300, %v2302
        %v2304 = vrot.slane %v2199, 2
        %v2305 = vrot.slane %v2200, 2
        %v2306 = vsel %vm2283, %v2304, %v2305
        %v2307 = vrot.slane %v2201, 2
        %v2308 = vsel %vm2283, %v2305, %v2307
        %v2309 = vrot.slane %v2202, 2
        %v2310 = vrot.slane %v2203, 2
        %v2311 = vsel %vm2283, %v2309, %v2310
        %v2312 = vrot.slane %v2204, 2
        %v2313 = vsel %vm2283, %v2310, %v2312
        %v2314 = vrot.slane %v2205, 2
        %v2315 = vrot.slane %v2206, 2
        %v2316 = vsel %vm2283, %v2314, %v2315
        %v2317 = vrot.slane %v2207, 2
        %v2318 = vsel %vm2283, %v2315, %v2317
        %v2319 = vrot.slane %v2208, 2
        %v2320 = vrot.slane %v2209, 2
        %v2321 = vsel %vm2283, %v2319, %v2320
        %v2322 = vrot.slane %v2210, 2
        %v2323 = vsel %vm2283, %v2320, %v2322
        %v2324 = vrot.slane %v2211, 2
        %v2325 = vrot.slane %v2212, 2
        %v2326 = vsel %vm2283, %v2324, %v2325
        %v2327 = vrot.slane %v2213, 2
        %v2328 = vsel %vm2283, %v2325, %v2327
        %v2329 = vrot.slane %v2214, 2
        %v2330 = vrot.slane %v2215, 2
        %v2331 = vsel %vm2283, %v2329, %v2330
        %v2332 = vrot.slane %v2216, 2
        %v2333 = vsel %vm2283, %v2330, %v2332
        %v2334 = vrot.slane %v2217, 2
        %v2335 = vrot.slane %v2218, 2
        %v2336 = vsel %vm2283, %v2334, %v2335
        %v2337 = vrot.slane %v2219, 2
        %v2338 = vsel %vm2283, %v2335, %v2337
        %v2339 = vrot.slane %v2220, 2
        %v2340 = vrot.slane %v2221, 2
        %v2341 = vsel %vm2283, %v2339, %v2340
        %v2342 = vrot.slane %v2222, 2
        %v2343 = vsel %vm2283, %v2340, %v2342
        %v2344 = vrot.slane %v2223, 2
        %v2345 = vrot.slane %v2224, 2
        %v2346 = vsel %vm2283, %v2344, %v2345
        %v2347 = vrot.slane %v2225, 2
        %v2348 = vsel %vm2283, %v2345, %v2347
        %v2349 = vrot.slane %v2226, 2
        %v2350 = vrot.slane %v2227, 2
        %v2351 = vsel %vm2283, %v2349, %v2350
        %v2352 = vrot.slane %v2228, 2
        %v2353 = vsel %vm2283, %v2350, %v2352
        %v2354 = vrot.slane %v2229, 2
        %v2355 = vrot.slane %v2230, 2
        %v2356 = vsel %vm2283, %v2354, %v2355
        %v2357 = vrot.slane %v2231, 2
        %v2358 = vsel %vm2283, %v2355, %v2357
        %v2359 = vrot.slane %v2232, 2
        %v2360 = vrot.slane %v2233, 2
        %v2361 = vsel %vm2283, %v2359, %v2360
        %v2362 = vrot.slane %v2234, 2
        %v2363 = vsel %vm2283, %v2360, %v2362
        %v2396 = vadd.f32 %v2099, %v2286
        %v2397 = vadd.f32 %v2100, %v2288
        %v2398 = vadd.f32 %v2101, %v2291
        %v2399 = vadd.f32 %v2102, %v2293
        %v2400 = vadd.f32 %v2103, %v2296
        %v2401 = vadd.f32 %v2104, %v2298
        %v2402 = vadd.f32 %v2105, %v2301
        %v2403 = vadd.f32 %v2106, %v2303
        %v2404 = vadd.f32 %v2107, %v2306
        %v2405 = vadd.f32 %v2108, %v2308
        %v2406 = vadd.f32 %v2109, %v2311
        %v2407 = vadd.f32 %v2110, %v2313
        %v2408 = vadd.f32 %v2111, %v2316
        %v2409 = vadd.f32 %v2112, %v2318
        %v2410 = vadd.f32 %v2113, %v2321
        %v2411 = vadd.f32 %v2114, %v2323
        %v2412 = vadd.f32 %v2115, %v2326
        %v2413 = vadd.f32 %v2116, %v2328
        %v2414 = vadd.f32 %v2117, %v2331
        %v2415 = vadd.f32 %v2118, %v2333
        %v2416 = vadd.f32 %v2119, %v2336
        %v2417 = vadd.f32 %v2120, %v2338
        %v2418 = vadd.f32 %v2121, %v2341
        %v2419 = vadd.f32 %v2122, %v2343
        %v2420 = vadd.f32 %v2123, %v2346
        %v2421 = vadd.f32 %v2124, %v2348
        %v2422 = vadd.f32 %v2125, %v2351
        %v2423 = vadd.f32 %v2126, %v2353
        %v2424 = vadd.f32 %v2127, %v2356
        %v2425 = vadd.f32 %v2128, %v2358
        %v2426 = vadd.f32 %v2129, %v2361
        %v2427 = vadd.f32 %v2130, %v2363
        %v2428 = vld [vmem:[%s1087] sm:$0xf]
        %v2429 = vld [vmem:[%s1087 + $0x4] sm:$0xf]
        %v2430 = vld [vmem:[%s1087 + $0x8] sm:$0x1]
        %v2431 = vld [vmem:[%s1087 + $0xc] sm:$0xf]
        %v2432 = vld [vmem:[%s1087 + $0x10] sm:$0xf]
        %v2433 = vld [vmem:[%s1087 + $0x14] sm:$0x1]
        %v2434 = vld [vmem:[%s1087 + $0x18] sm:$0xf]
        %v2435 = vld [vmem:[%s1087 + $0x1c] sm:$0xf]
        %v2436 = vld [vmem:[%s1087 + $0x20] sm:$0x1]
        %v2437 = vld [vmem:[%s1087 + $0x24] sm:$0xf]
        %v2438 = vld [vmem:[%s1087 + $0x28] sm:$0xf]
        %v2439 = vld [vmem:[%s1087 + $0x2c] sm:$0x1]
        %v2440 = vld [vmem:[%s1087 + $0x30] sm:$0xf]
        %v2441 = vld [vmem:[%s1087 + $0x34] sm:$0xf]
        %v2442 = vld [vmem:[%s1087 + $0x38] sm:$0x1]
        %v2443 = vld [vmem:[%s1087 + $0x3c] sm:$0xf]
        %v2444 = vld [vmem:[%s1087 + $0x40] sm:$0xf]
        %v2445 = vld [vmem:[%s1087 + $0x44] sm:$0x1]
        %v2446 = vld [vmem:[%s1087 + $0x48] sm:$0xf]
        %v2447 = vld [vmem:[%s1087 + $0x4c] sm:$0xf]
        %v2448 = vld [vmem:[%s1087 + $0x50] sm:$0x1]
        %v2449 = vld [vmem:[%s1087 + $0x54] sm:$0xf]
        %v2450 = vld [vmem:[%s1087 + $0x58] sm:$0xf]
        %v2451 = vld [vmem:[%s1087 + $0x5c] sm:$0x1]
        %v2452 = vld [vmem:[%s1087 + $0x60] sm:$0xf]
        %v2453 = vld [vmem:[%s1087 + $0x64] sm:$0xf]
        %v2454 = vld [vmem:[%s1087 + $0x68] sm:$0x1]
        %v2455 = vld [vmem:[%s1087 + $0x6c] sm:$0xf]
        %v2456 = vld [vmem:[%s1087 + $0x70] sm:$0xf]
        %v2457 = vld [vmem:[%s1087 + $0x74] sm:$0x1]
        %v2458 = vld [vmem:[%s1087 + $0x78] sm:$0xf]
        %v2459 = vld [vmem:[%s1087 + $0x7c] sm:$0xf]
        %v2460 = vld [vmem:[%s1087 + $0x80] sm:$0x1]
        %v2461 = vld [vmem:[%s1087 + $0x84] sm:$0xf]
        %v2462 = vld [vmem:[%s1087 + $0x88] sm:$0xf]
        %v2463 = vld [vmem:[%s1087 + $0x8c] sm:$0x1]
        %v2464 = vld [vmem:[%s1087 + $0x90] sm:$0xf]
        %v2465 = vld [vmem:[%s1087 + $0x94] sm:$0xf]
        %v2466 = vld [vmem:[%s1087 + $0x98] sm:$0x1]
        %v2467 = vld [vmem:[%s1087 + $0x9c] sm:$0xf]
        %v2468 = vld [vmem:[%s1087 + $0xa0] sm:$0xf]
        %v2469 = vld [vmem:[%s1087 + $0xa4] sm:$0x1]
        %v2470 = vld [vmem:[%s1087 + $0xa8] sm:$0xf]
        %v2471 = vld [vmem:[%s1087 + $0xac] sm:$0xf]
        %v2472 = vld [vmem:[%s1087 + $0xb0] sm:$0x1]
        %v2473 = vld [vmem:[%s1087 + $0xb4] sm:$0xf]
        %v2474 = vld [vmem:[%s1087 + $0xb8] sm:$0xf]
        %v2475 = vld [vmem:[%s1087 + $0xbc] sm:$0x1]
        %v2477 = vpack.i.b16 %v1706, %v1706
        %v2479 = vlaneseq
        %v2480 = vshrl.u32 %v2479, 7
        %v2481 = vsub.s32 0, %v2480
        %v2482 = vrot.slane %v2477, %v2481
        %v2484 = vunpack.c.l.b16 %v2482
        %v2485 = vpack.c.b16 %v2484, %v2484
        %v2487 = vmul.bf16 %v2428, %v2485
        %v2488 = vmul.bf16 %v2429, %v2485
        %v2489 = vmul.bf16 %v2431, %v2485
        %v2490 = vmul.bf16 %v2432, %v2485
        %v2491 = vmul.bf16 %v2434, %v2485
        %v2492 = vmul.bf16 %v2435, %v2485
        %v2493 = vmul.bf16 %v2437, %v2485
        %v2494 = vmul.bf16 %v2438, %v2485
        %v2495 = vmul.bf16 %v2440, %v2485
        %v2496 = vmul.bf16 %v2441, %v2485
        %v2497 = vmul.bf16 %v2443, %v2485
        %v2498 = vmul.bf16 %v2444, %v2485
        %v2499 = vmul.bf16 %v2446, %v2485
        %v2500 = vmul.bf16 %v2447, %v2485
        %v2501 = vmul.bf16 %v2449, %v2485
        %v2502 = vmul.bf16 %v2450, %v2485
        %v2503 = vmul.bf16 %v2452, %v2485
        %v2504 = vmul.bf16 %v2453, %v2485
        %v2505 = vmul.bf16 %v2455, %v2485
        %v2506 = vmul.bf16 %v2456, %v2485
        %v2507 = vmul.bf16 %v2458, %v2485
        %v2508 = vmul.bf16 %v2459, %v2485
        %v2509 = vmul.bf16 %v2461, %v2485
        %v2510 = vmul.bf16 %v2462, %v2485
        %v2511 = vmul.bf16 %v2464, %v2485
        %v2512 = vmul.bf16 %v2465, %v2485
        %v2513 = vmul.bf16 %v2467, %v2485
        %v2514 = vmul.bf16 %v2468, %v2485
        %v2515 = vmul.bf16 %v2470, %v2485
        %v2516 = vmul.bf16 %v2471, %v2485
        %v2517 = vmul.bf16 %v2473, %v2485
        %v2518 = vmul.bf16 %v2474, %v2485
        %v2519 = vunpack.c.l.bf16 %v2487
        %v2520 = vunpack.c.l.bf16 %v2488
        %v2521 = vunpack.c.l.bf16 %v2489
        %v2522 = vunpack.c.l.bf16 %v2490
        %v2523 = vunpack.c.l.bf16 %v2491
        %v2524 = vunpack.c.l.bf16 %v2492
        %v2525 = vunpack.c.l.bf16 %v2493
        %v2526 = vunpack.c.l.bf16 %v2494
        %v2527 = vunpack.c.l.bf16 %v2495
        %v2528 = vunpack.c.l.bf16 %v2496
        %v2529 = vunpack.c.l.bf16 %v2497
        %v2530 = vunpack.c.l.bf16 %v2498
        %v2531 = vunpack.c.l.bf16 %v2499
        %v2532 = vunpack.c.l.bf16 %v2500
        %v2533 = vunpack.c.l.bf16 %v2501
        %v2534 = vunpack.c.l.bf16 %v2502
        %v2535 = vunpack.c.l.bf16 %v2503
        %v2536 = vunpack.c.l.bf16 %v2504
        %v2537 = vunpack.c.l.bf16 %v2505
        %v2538 = vunpack.c.l.bf16 %v2506
        %v2539 = vunpack.c.l.bf16 %v2507
        %v2540 = vunpack.c.l.bf16 %v2508
        %v2541 = vunpack.c.l.bf16 %v2509
        %v2542 = vunpack.c.l.bf16 %v2510
        %v2543 = vunpack.c.l.bf16 %v2511
        %v2544 = vunpack.c.l.bf16 %v2512
        %v2545 = vunpack.c.l.bf16 %v2513
        %v2546 = vunpack.c.l.bf16 %v2514
        %v2547 = vunpack.c.l.bf16 %v2515
        %v2548 = vunpack.c.l.bf16 %v2516
        %v2549 = vunpack.c.l.bf16 %v2517
        %v2550 = vunpack.c.l.bf16 %v2518
        %v2551 = vadd.f32 %v2396, %v2519
        %v2552 = vadd.f32 %v2397, %v2520
        %v2553 = vadd.f32 %v2398, %v2521
        %v2554 = vadd.f32 %v2399, %v2522
        %v2555 = vadd.f32 %v2400, %v2523
        %v2556 = vadd.f32 %v2401, %v2524
        %v2557 = vadd.f32 %v2402, %v2525
        %v2558 = vadd.f32 %v2403, %v2526
        %v2559 = vadd.f32 %v2404, %v2527
        %v2560 = vadd.f32 %v2405, %v2528
        %v2561 = vadd.f32 %v2406, %v2529
        %v2562 = vadd.f32 %v2407, %v2530
        %v2563 = vadd.f32 %v2408, %v2531
        %v2564 = vadd.f32 %v2409, %v2532
        %v2565 = vadd.f32 %v2410, %v2533
        %v2566 = vadd.f32 %v2411, %v2534
        %v2567 = vadd.f32 %v2412, %v2535
        %v2568 = vadd.f32 %v2413, %v2536
        %v2569 = vadd.f32 %v2414, %v2537
        %v2570 = vadd.f32 %v2415, %v2538
        %v2571 = vadd.f32 %v2416, %v2539
        %v2572 = vadd.f32 %v2417, %v2540
        %v2573 = vadd.f32 %v2418, %v2541
        %v2574 = vadd.f32 %v2419, %v2542
        %v2575 = vadd.f32 %v2420, %v2543
        %v2576 = vadd.f32 %v2421, %v2544
        %v2577 = vadd.f32 %v2422, %v2545
        %v2578 = vadd.f32 %v2423, %v2546
        %v2579 = vadd.f32 %v2424, %v2547
        %v2580 = vadd.f32 %v2425, %v2548
        %v2581 = vadd.f32 %v2426, %v2549
        %v2582 = vadd.f32 %v2427, %v2550
        %v2583 = vshrl.u32 %v1706, 16
        %v2584 = vpack.i.b16 %v2583, %v2583
        %v2586 = vlaneseq
        %v2587 = vshrl.u32 %v2586, 7
        %v2588 = vsub.s32 0, %v2587
        %v2589 = vrot.slane %v2584, %v2588
        %v2591 = vunpack.c.l.b16 %v2589
        %v2592 = vpack.c.b16 %v2591, %v2591
        %v2594 = vmul.bf16 %v2428, %v2592
        %v2595 = vmul.bf16 %v2429, %v2592
        %v2596 = vmul.bf16 %v2430, %v2592
        %v2597 = vmul.bf16 %v2431, %v2592
        %v2598 = vmul.bf16 %v2432, %v2592
        %v2599 = vmul.bf16 %v2433, %v2592
        %v2600 = vmul.bf16 %v2434, %v2592
        %v2601 = vmul.bf16 %v2435, %v2592
        %v2602 = vmul.bf16 %v2436, %v2592
        %v2603 = vmul.bf16 %v2437, %v2592
        %v2604 = vmul.bf16 %v2438, %v2592
        %v2605 = vmul.bf16 %v2439, %v2592
        %v2606 = vmul.bf16 %v2440, %v2592
        %v2607 = vmul.bf16 %v2441, %v2592
        %v2608 = vmul.bf16 %v2442, %v2592
        %v2609 = vmul.bf16 %v2443, %v2592
        %v2610 = vmul.bf16 %v2444, %v2592
        %v2611 = vmul.bf16 %v2445, %v2592
        %v2612 = vmul.bf16 %v2446, %v2592
        %v2613 = vmul.bf16 %v2447, %v2592
        %v2614 = vmul.bf16 %v2448, %v2592
        %v2615 = vmul.bf16 %v2449, %v2592
        %v2616 = vmul.bf16 %v2450, %v2592
        %v2617 = vmul.bf16 %v2451, %v2592
        %v2618 = vmul.bf16 %v2452, %v2592
        %v2619 = vmul.bf16 %v2453, %v2592
        %v2620 = vmul.bf16 %v2454, %v2592
        %v2621 = vmul.bf16 %v2455, %v2592
        %v2622 = vmul.bf16 %v2456, %v2592
        %v2623 = vmul.bf16 %v2457, %v2592
        %v2624 = vmul.bf16 %v2458, %v2592
        %v2625 = vmul.bf16 %v2459, %v2592
        %v2626 = vmul.bf16 %v2460, %v2592
        %v2627 = vmul.bf16 %v2461, %v2592
        %v2628 = vmul.bf16 %v2462, %v2592
        %v2629 = vmul.bf16 %v2463, %v2592
        %v2630 = vmul.bf16 %v2464, %v2592
        %v2631 = vmul.bf16 %v2465, %v2592
        %v2632 = vmul.bf16 %v2466, %v2592
        %v2633 = vmul.bf16 %v2467, %v2592
        %v2634 = vmul.bf16 %v2468, %v2592
        %v2635 = vmul.bf16 %v2469, %v2592
        %v2636 = vmul.bf16 %v2470, %v2592
        %v2637 = vmul.bf16 %v2471, %v2592
        %v2638 = vmul.bf16 %v2472, %v2592
        %v2639 = vmul.bf16 %v2473, %v2592
        %v2640 = vmul.bf16 %v2474, %v2592
        %v2641 = vmul.bf16 %v2475, %v2592
        %v2642 = vunpack.c.l.bf16 %v2594
        %v2643 = vunpack.c.l.bf16 %v2595
        %v2644 = vunpack.c.l.bf16 %v2596
        %v2645 = vunpack.c.l.bf16 %v2597
        %v2646 = vunpack.c.l.bf16 %v2598
        %v2647 = vunpack.c.l.bf16 %v2599
        %v2648 = vunpack.c.l.bf16 %v2600
        %v2649 = vunpack.c.l.bf16 %v2601
        %v2650 = vunpack.c.l.bf16 %v2602
        %v2651 = vunpack.c.l.bf16 %v2603
        %v2652 = vunpack.c.l.bf16 %v2604
        %v2653 = vunpack.c.l.bf16 %v2605
        %v2654 = vunpack.c.l.bf16 %v2606
        %v2655 = vunpack.c.l.bf16 %v2607
        %v2656 = vunpack.c.l.bf16 %v2608
        %v2657 = vunpack.c.l.bf16 %v2609
        %v2658 = vunpack.c.l.bf16 %v2610
        %v2659 = vunpack.c.l.bf16 %v2611
        %v2660 = vunpack.c.l.bf16 %v2612
        %v2661 = vunpack.c.l.bf16 %v2613
        %v2662 = vunpack.c.l.bf16 %v2614
        %v2663 = vunpack.c.l.bf16 %v2615
        %v2664 = vunpack.c.l.bf16 %v2616
        %v2665 = vunpack.c.l.bf16 %v2617
        %v2666 = vunpack.c.l.bf16 %v2618
        %v2667 = vunpack.c.l.bf16 %v2619
        %v2668 = vunpack.c.l.bf16 %v2620
        %v2669 = vunpack.c.l.bf16 %v2621
        %v2670 = vunpack.c.l.bf16 %v2622
        %v2671 = vunpack.c.l.bf16 %v2623
        %v2672 = vunpack.c.l.bf16 %v2624
        %v2673 = vunpack.c.l.bf16 %v2625
        %v2674 = vunpack.c.l.bf16 %v2626
        %v2675 = vunpack.c.l.bf16 %v2627
        %v2676 = vunpack.c.l.bf16 %v2628
        %v2677 = vunpack.c.l.bf16 %v2629
        %v2678 = vunpack.c.l.bf16 %v2630
        %v2679 = vunpack.c.l.bf16 %v2631
        %v2680 = vunpack.c.l.bf16 %v2632
        %v2681 = vunpack.c.l.bf16 %v2633
        %v2682 = vunpack.c.l.bf16 %v2634
        %v2683 = vunpack.c.l.bf16 %v2635
        %v2684 = vunpack.c.l.bf16 %v2636
        %v2685 = vunpack.c.l.bf16 %v2637
        %v2686 = vunpack.c.l.bf16 %v2638
        %v2687 = vunpack.c.l.bf16 %v2639
        %v2688 = vunpack.c.l.bf16 %v2640
        %v2689 = vunpack.c.l.bf16 %v2641
        %v2738 = vrot.slane %v2642, 1
        %v2739 = vrot.slane %v2643, 1
        %v2740 = vsel %vm1986, %v2738, %v2739
        %v2741 = vrot.slane %v2644, 1
        %v2742 = vsel %vm1986, %v2739, %v2741
        %v2743 = vrot.slane %v2645, 1
        %v2744 = vrot.slane %v2646, 1
        %v2745 = vsel %vm1986, %v2743, %v2744
        %v2746 = vrot.slane %v2647, 1
        %v2747 = vsel %vm1986, %v2744, %v2746
        %v2748 = vrot.slane %v2648, 1
        %v2749 = vrot.slane %v2649, 1
        %v2750 = vsel %vm1986, %v2748, %v2749
        %v2751 = vrot.slane %v2650, 1
        %v2752 = vsel %vm1986, %v2749, %v2751
        %v2753 = vrot.slane %v2651, 1
        %v2754 = vrot.slane %v2652, 1
        %v2755 = vsel %vm1986, %v2753, %v2754
        %v2756 = vrot.slane %v2653, 1
        %v2757 = vsel %vm1986, %v2754, %v2756
        %v2758 = vrot.slane %v2654, 1
        %v2759 = vrot.slane %v2655, 1
        %v2760 = vsel %vm1986, %v2758, %v2759
        %v2761 = vrot.slane %v2656, 1
        %v2762 = vsel %vm1986, %v2759, %v2761
        %v2763 = vrot.slane %v2657, 1
        %v2764 = vrot.slane %v2658, 1
        %v2765 = vsel %vm1986, %v2763, %v2764
        %v2766 = vrot.slane %v2659, 1
        %v2767 = vsel %vm1986, %v2764, %v2766
        %v2768 = vrot.slane %v2660, 1
        %v2769 = vrot.slane %v2661, 1
        %v2770 = vsel %vm1986, %v2768, %v2769
        %v2771 = vrot.slane %v2662, 1
        %v2772 = vsel %vm1986, %v2769, %v2771
        %v2773 = vrot.slane %v2663, 1
        %v2774 = vrot.slane %v2664, 1
        %v2775 = vsel %vm1986, %v2773, %v2774
        %v2776 = vrot.slane %v2665, 1
        %v2777 = vsel %vm1986, %v2774, %v2776
        %v2778 = vrot.slane %v2666, 1
        %v2779 = vrot.slane %v2667, 1
        %v2780 = vsel %vm1986, %v2778, %v2779
        %v2781 = vrot.slane %v2668, 1
        %v2782 = vsel %vm1986, %v2779, %v2781
        %v2783 = vrot.slane %v2669, 1
        %v2784 = vrot.slane %v2670, 1
        %v2785 = vsel %vm1986, %v2783, %v2784
        %v2786 = vrot.slane %v2671, 1
        %v2787 = vsel %vm1986, %v2784, %v2786
        %v2788 = vrot.slane %v2672, 1
        %v2789 = vrot.slane %v2673, 1
        %v2790 = vsel %vm1986, %v2788, %v2789
        %v2791 = vrot.slane %v2674, 1
        %v2792 = vsel %vm1986, %v2789, %v2791
        %v2793 = vrot.slane %v2675, 1
        %v2794 = vrot.slane %v2676, 1
        %v2795 = vsel %vm1986, %v2793, %v2794
        %v2796 = vrot.slane %v2677, 1
        %v2797 = vsel %vm1986, %v2794, %v2796
        %v2798 = vrot.slane %v2678, 1
        %v2799 = vrot.slane %v2679, 1
        %v2800 = vsel %vm1986, %v2798, %v2799
        %v2801 = vrot.slane %v2680, 1
        %v2802 = vsel %vm1986, %v2799, %v2801
        %v2803 = vrot.slane %v2681, 1
        %v2804 = vrot.slane %v2682, 1
        %v2805 = vsel %vm1986, %v2803, %v2804
        %v2806 = vrot.slane %v2683, 1
        %v2807 = vsel %vm1986, %v2804, %v2806
        %v2808 = vrot.slane %v2684, 1
        %v2809 = vrot.slane %v2685, 1
        %v2810 = vsel %vm1986, %v2808, %v2809
        %v2811 = vrot.slane %v2686, 1
        %v2812 = vsel %vm1986, %v2809, %v2811
        %v2813 = vrot.slane %v2687, 1
        %v2814 = vrot.slane %v2688, 1
        %v2815 = vsel %vm1986, %v2813, %v2814
        %v2816 = vrot.slane %v2689, 1
        %v2817 = vsel %vm1986, %v2814, %v2816
        %v2850 = vadd.f32 %v2551, %v2740
        %v2851 = vadd.f32 %v2552, %v2742
        %v2852 = vadd.f32 %v2553, %v2745
        %v2853 = vadd.f32 %v2554, %v2747
        %v2854 = vadd.f32 %v2555, %v2750
        %v2855 = vadd.f32 %v2556, %v2752
        %v2856 = vadd.f32 %v2557, %v2755
        %v2857 = vadd.f32 %v2558, %v2757
        %v2858 = vadd.f32 %v2559, %v2760
        %v2859 = vadd.f32 %v2560, %v2762
        %v2860 = vadd.f32 %v2561, %v2765
        %v2861 = vadd.f32 %v2562, %v2767
        %v2862 = vadd.f32 %v2563, %v2770
        %v2863 = vadd.f32 %v2564, %v2772
        %v2864 = vadd.f32 %v2565, %v2775
        %v2865 = vadd.f32 %v2566, %v2777
        %v2866 = vadd.f32 %v2567, %v2780
        %v2867 = vadd.f32 %v2568, %v2782
        %v2868 = vadd.f32 %v2569, %v2785
        %v2869 = vadd.f32 %v2570, %v2787
        %v2870 = vadd.f32 %v2571, %v2790
        %v2871 = vadd.f32 %v2572, %v2792
        %v2872 = vadd.f32 %v2573, %v2795
        %v2873 = vadd.f32 %v2574, %v2797
        %v2874 = vadd.f32 %v2575, %v2800
        %v2875 = vadd.f32 %v2576, %v2802
        %v2876 = vadd.f32 %v2577, %v2805
        %v2877 = vadd.f32 %v2578, %v2807
        %v2878 = vadd.f32 %v2579, %v2810
        %v2879 = vadd.f32 %v2580, %v2812
        %v2880 = vadd.f32 %v2581, %v2815
        %v2881 = vadd.f32 %v2582, %v2817
        %v2882 = vlaneseq
        %v2883 = vshrl.u32 %v2882, 7
        %v2884 = vsub.s32 1, %v2883
        %v2885 = vrot.slane %v2477, %v2884
        %v2887 = vunpack.c.l.b16 %v2885
        %v2888 = vpack.c.b16 %v2887, %v2887
        %v2890 = vmul.bf16 %v2428, %v2888
        %v2891 = vmul.bf16 %v2429, %v2888
        %v2892 = vmul.bf16 %v2430, %v2888
        %v2893 = vmul.bf16 %v2431, %v2888
        %v2894 = vmul.bf16 %v2432, %v2888
        %v2895 = vmul.bf16 %v2433, %v2888
        %v2896 = vmul.bf16 %v2434, %v2888
        %v2897 = vmul.bf16 %v2435, %v2888
        %v2898 = vmul.bf16 %v2436, %v2888
        %v2899 = vmul.bf16 %v2437, %v2888
        %v2900 = vmul.bf16 %v2438, %v2888
        %v2901 = vmul.bf16 %v2439, %v2888
        %v2902 = vmul.bf16 %v2440, %v2888
        %v2903 = vmul.bf16 %v2441, %v2888
        %v2904 = vmul.bf16 %v2442, %v2888
        %v2905 = vmul.bf16 %v2443, %v2888
        %v2906 = vmul.bf16 %v2444, %v2888
        %v2907 = vmul.bf16 %v2445, %v2888
        %v2908 = vmul.bf16 %v2446, %v2888
        %v2909 = vmul.bf16 %v2447, %v2888
        %v2910 = vmul.bf16 %v2448, %v2888
        %v2911 = vmul.bf16 %v2449, %v2888
        %v2912 = vmul.bf16 %v2450, %v2888
        %v2913 = vmul.bf16 %v2451, %v2888
        %v2914 = vmul.bf16 %v2452, %v2888
        %v2915 = vmul.bf16 %v2453, %v2888
        %v2916 = vmul.bf16 %v2454, %v2888
        %v2917 = vmul.bf16 %v2455, %v2888
        %v2918 = vmul.bf16 %v2456, %v2888
        %v2919 = vmul.bf16 %v2457, %v2888
        %v2920 = vmul.bf16 %v2458, %v2888
        %v2921 = vmul.bf16 %v2459, %v2888
        %v2922 = vmul.bf16 %v2460, %v2888
        %v2923 = vmul.bf16 %v2461, %v2888
        %v2924 = vmul.bf16 %v2462, %v2888
        %v2925 = vmul.bf16 %v2463, %v2888
        %v2926 = vmul.bf16 %v2464, %v2888
        %v2927 = vmul.bf16 %v2465, %v2888
        %v2928 = vmul.bf16 %v2466, %v2888
        %v2929 = vmul.bf16 %v2467, %v2888
        %v2930 = vmul.bf16 %v2468, %v2888
        %v2931 = vmul.bf16 %v2469, %v2888
        %v2932 = vmul.bf16 %v2470, %v2888
        %v2933 = vmul.bf16 %v2471, %v2888
        %v2934 = vmul.bf16 %v2472, %v2888
        %v2935 = vmul.bf16 %v2473, %v2888
        %v2936 = vmul.bf16 %v2474, %v2888
        %v2937 = vmul.bf16 %v2475, %v2888
        %v2938 = vunpack.c.l.bf16 %v2890
        %v2939 = vunpack.c.l.bf16 %v2891
        %v2940 = vunpack.c.l.bf16 %v2892
        %v2941 = vunpack.c.l.bf16 %v2893
        %v2942 = vunpack.c.l.bf16 %v2894
        %v2943 = vunpack.c.l.bf16 %v2895
        %v2944 = vunpack.c.l.bf16 %v2896
        %v2945 = vunpack.c.l.bf16 %v2897
        %v2946 = vunpack.c.l.bf16 %v2898
        %v2947 = vunpack.c.l.bf16 %v2899
        %v2948 = vunpack.c.l.bf16 %v2900
        %v2949 = vunpack.c.l.bf16 %v2901
        %v2950 = vunpack.c.l.bf16 %v2902
        %v2951 = vunpack.c.l.bf16 %v2903
        %v2952 = vunpack.c.l.bf16 %v2904
        %v2953 = vunpack.c.l.bf16 %v2905
        %v2954 = vunpack.c.l.bf16 %v2906
        %v2955 = vunpack.c.l.bf16 %v2907
        %v2956 = vunpack.c.l.bf16 %v2908
        %v2957 = vunpack.c.l.bf16 %v2909
        %v2958 = vunpack.c.l.bf16 %v2910
        %v2959 = vunpack.c.l.bf16 %v2911
        %v2960 = vunpack.c.l.bf16 %v2912
        %v2961 = vunpack.c.l.bf16 %v2913
        %v2962 = vunpack.c.l.bf16 %v2914
        %v2963 = vunpack.c.l.bf16 %v2915
        %v2964 = vunpack.c.l.bf16 %v2916
        %v2965 = vunpack.c.l.bf16 %v2917
        %v2966 = vunpack.c.l.bf16 %v2918
        %v2967 = vunpack.c.l.bf16 %v2919
        %v2968 = vunpack.c.l.bf16 %v2920
        %v2969 = vunpack.c.l.bf16 %v2921
        %v2970 = vunpack.c.l.bf16 %v2922
        %v2971 = vunpack.c.l.bf16 %v2923
        %v2972 = vunpack.c.l.bf16 %v2924
        %v2973 = vunpack.c.l.bf16 %v2925
        %v2974 = vunpack.c.l.bf16 %v2926
        %v2975 = vunpack.c.l.bf16 %v2927
        %v2976 = vunpack.c.l.bf16 %v2928
        %v2977 = vunpack.c.l.bf16 %v2929
        %v2978 = vunpack.c.l.bf16 %v2930
        %v2979 = vunpack.c.l.bf16 %v2931
        %v2980 = vunpack.c.l.bf16 %v2932
        %v2981 = vunpack.c.l.bf16 %v2933
        %v2982 = vunpack.c.l.bf16 %v2934
        %v2983 = vunpack.c.l.bf16 %v2935
        %v2984 = vunpack.c.l.bf16 %v2936
        %v2985 = vunpack.c.l.bf16 %v2937
        %v3034 = vrot.slane %v2938, 2
        %v3035 = vrot.slane %v2939, 2
        %v3036 = vsel %vm2283, %v3034, %v3035
        %v3037 = vrot.slane %v2940, 2
        %v3038 = vsel %vm2283, %v3035, %v3037
        %v3039 = vrot.slane %v2941, 2
        %v3040 = vrot.slane %v2942, 2
        %v3041 = vsel %vm2283, %v3039, %v3040
        %v3042 = vrot.slane %v2943, 2
        %v3043 = vsel %vm2283, %v3040, %v3042
        %v3044 = vrot.slane %v2944, 2
        %v3045 = vrot.slane %v2945, 2
        %v3046 = vsel %vm2283, %v3044, %v3045
        %v3047 = vrot.slane %v2946, 2
        %v3048 = vsel %vm2283, %v3045, %v3047
        %v3049 = vrot.slane %v2947, 2
        %v3050 = vrot.slane %v2948, 2
        %v3051 = vsel %vm2283, %v3049, %v3050
        %v3052 = vrot.slane %v2949, 2
        %v3053 = vsel %vm2283, %v3050, %v3052
        %v3054 = vrot.slane %v2950, 2
        %v3055 = vrot.slane %v2951, 2
        %v3056 = vsel %vm2283, %v3054, %v3055
        %v3057 = vrot.slane %v2952, 2
        %v3058 = vsel %vm2283, %v3055, %v3057
        %v3059 = vrot.slane %v2953, 2
        %v3060 = vrot.slane %v2954, 2
        %v3061 = vsel %vm2283, %v3059, %v3060
        %v3062 = vrot.slane %v2955, 2
        %v3063 = vsel %vm2283, %v3060, %v3062
        %v3064 = vrot.slane %v2956, 2
        %v3065 = vrot.slane %v2957, 2
        %v3066 = vsel %vm2283, %v3064, %v3065
        %v3067 = vrot.slane %v2958, 2
        %v3068 = vsel %vm2283, %v3065, %v3067
        %v3069 = vrot.slane %v2959, 2
        %v3070 = vrot.slane %v2960, 2
        %v3071 = vsel %vm2283, %v3069, %v3070
        %v3072 = vrot.slane %v2961, 2
        %v3073 = vsel %vm2283, %v3070, %v3072
        %v3074 = vrot.slane %v2962, 2
        %v3075 = vrot.slane %v2963, 2
        %v3076 = vsel %vm2283, %v3074, %v3075
        %v3077 = vrot.slane %v2964, 2
        %v3078 = vsel %vm2283, %v3075, %v3077
        %v3079 = vrot.slane %v2965, 2
        %v3080 = vrot.slane %v2966, 2
        %v3081 = vsel %vm2283, %v3079, %v3080
        %v3082 = vrot.slane %v2967, 2
        %v3083 = vsel %vm2283, %v3080, %v3082
        %v3084 = vrot.slane %v2968, 2
        %v3085 = vrot.slane %v2969, 2
        %v3086 = vsel %vm2283, %v3084, %v3085
        %v3087 = vrot.slane %v2970, 2
        %v3088 = vsel %vm2283, %v3085, %v3087
        %v3089 = vrot.slane %v2971, 2
        %v3090 = vrot.slane %v2972, 2
        %v3091 = vsel %vm2283, %v3089, %v3090
        %v3092 = vrot.slane %v2973, 2
        %v3093 = vsel %vm2283, %v3090, %v3092
        %v3094 = vrot.slane %v2974, 2
        %v3095 = vrot.slane %v2975, 2
        %v3096 = vsel %vm2283, %v3094, %v3095
        %v3097 = vrot.slane %v2976, 2
        %v3098 = vsel %vm2283, %v3095, %v3097
        %v3099 = vrot.slane %v2977, 2
        %v3100 = vrot.slane %v2978, 2
        %v3101 = vsel %vm2283, %v3099, %v3100
        %v3102 = vrot.slane %v2979, 2
        %v3103 = vsel %vm2283, %v3100, %v3102
        %v3104 = vrot.slane %v2980, 2
        %v3105 = vrot.slane %v2981, 2
        %v3106 = vsel %vm2283, %v3104, %v3105
        %v3107 = vrot.slane %v2982, 2
        %v3108 = vsel %vm2283, %v3105, %v3107
        %v3109 = vrot.slane %v2983, 2
        %v3110 = vrot.slane %v2984, 2
        %v3111 = vsel %vm2283, %v3109, %v3110
        %v3112 = vrot.slane %v2985, 2
        %v3113 = vsel %vm2283, %v3110, %v3112
        %v3146 = vadd.f32 %v2850, %v3036
        %v3147 = vadd.f32 %v2851, %v3038
        %v3148 = vadd.f32 %v2852, %v3041
        %v3149 = vadd.f32 %v2853, %v3043
        %v3150 = vadd.f32 %v2854, %v3046
        %v3151 = vadd.f32 %v2855, %v3048
        %v3152 = vadd.f32 %v2856, %v3051
        %v3153 = vadd.f32 %v2857, %v3053
        %v3154 = vadd.f32 %v2858, %v3056
        %v3155 = vadd.f32 %v2859, %v3058
        %v3156 = vadd.f32 %v2860, %v3061
        %v3157 = vadd.f32 %v2861, %v3063
        %v3158 = vadd.f32 %v2862, %v3066
        %v3159 = vadd.f32 %v2863, %v3068
        %v3160 = vadd.f32 %v2864, %v3071
        %v3161 = vadd.f32 %v2865, %v3073
        %v3162 = vadd.f32 %v2866, %v3076
        %v3163 = vadd.f32 %v2867, %v3078
        %v3164 = vadd.f32 %v2868, %v3081
        %v3165 = vadd.f32 %v2869, %v3083
        %v3166 = vadd.f32 %v2870, %v3086
        %v3167 = vadd.f32 %v2871, %v3088
        %v3168 = vadd.f32 %v2872, %v3091
        %v3169 = vadd.f32 %v2873, %v3093
        %v3170 = vadd.f32 %v2874, %v3096
        %v3171 = vadd.f32 %v2875, %v3098
        %v3172 = vadd.f32 %v2876, %v3101
        %v3173 = vadd.f32 %v2877, %v3103
        %v3174 = vadd.f32 %v2878, %v3106
        %v3175 = vadd.f32 %v2879, %v3108
        %v3176 = vadd.f32 %v2880, %v3111
        %v3177 = vadd.f32 %v2881, %v3113
        %s3178 = scalar_lea.vmem [#allocation2], 24
        %v3179 = vld [vmem:[%s3178] sm:$0xf]
        %v3180 = vld [vmem:[%s3178 + $0x4] sm:$0xf]
        %v3181 = vld [vmem:[%s3178 + $0x8] sm:$0x1]
        %v3182 = vld [vmem:[%s3178 + $0xc] sm:$0xf]
        %v3183 = vld [vmem:[%s3178 + $0x10] sm:$0xf]
        %v3184 = vld [vmem:[%s3178 + $0x14] sm:$0x1]
        %v3185 = vld [vmem:[%s3178 + $0x18] sm:$0xf]
        %v3186 = vld [vmem:[%s3178 + $0x1c] sm:$0xf]
        %v3187 = vld [vmem:[%s3178 + $0x20] sm:$0x1]
        %v3188 = vld [vmem:[%s3178 + $0x24] sm:$0xf]
        %v3189 = vld [vmem:[%s3178 + $0x28] sm:$0xf]
        %v3190 = vld [vmem:[%s3178 + $0x2c] sm:$0x1]
        %v3191 = vld [vmem:[%s3178 + $0x30] sm:$0xf]
        %v3192 = vld [vmem:[%s3178 + $0x34] sm:$0xf]
        %v3193 = vld [vmem:[%s3178 + $0x38] sm:$0x1]
        %v3194 = vld [vmem:[%s3178 + $0x3c] sm:$0xf]
        %v3195 = vld [vmem:[%s3178 + $0x40] sm:$0xf]
        %v3196 = vld [vmem:[%s3178 + $0x44] sm:$0x1]
        %v3197 = vld [vmem:[%s3178 + $0x48] sm:$0xf]
        %v3198 = vld [vmem:[%s3178 + $0x4c] sm:$0xf]
        %v3199 = vld [vmem:[%s3178 + $0x50] sm:$0x1]
        %v3200 = vld [vmem:[%s3178 + $0x54] sm:$0xf]
        %v3201 = vld [vmem:[%s3178 + $0x58] sm:$0xf]
        %v3202 = vld [vmem:[%s3178 + $0x5c] sm:$0x1]
        %v3203 = vld [vmem:[%s3178 + $0x60] sm:$0xf]
        %v3204 = vld [vmem:[%s3178 + $0x64] sm:$0xf]
        %v3205 = vld [vmem:[%s3178 + $0x68] sm:$0x1]
        %v3206 = vld [vmem:[%s3178 + $0x6c] sm:$0xf]
        %v3207 = vld [vmem:[%s3178 + $0x70] sm:$0xf]
        %v3208 = vld [vmem:[%s3178 + $0x74] sm:$0x1]
        %v3209 = vld [vmem:[%s3178 + $0x78] sm:$0xf]
        %v3210 = vld [vmem:[%s3178 + $0x7c] sm:$0xf]
        %v3211 = vld [vmem:[%s3178 + $0x80] sm:$0x1]
        %v3212 = vld [vmem:[%s3178 + $0x84] sm:$0xf]
        %v3213 = vld [vmem:[%s3178 + $0x88] sm:$0xf]
        %v3214 = vld [vmem:[%s3178 + $0x8c] sm:$0x1]
        %v3215 = vld [vmem:[%s3178 + $0x90] sm:$0xf]
        %v3216 = vld [vmem:[%s3178 + $0x94] sm:$0xf]
        %v3217 = vld [vmem:[%s3178 + $0x98] sm:$0x1]
        %v3218 = vld [vmem:[%s3178 + $0x9c] sm:$0xf]
        %v3219 = vld [vmem:[%s3178 + $0xa0] sm:$0xf]
        %v3220 = vld [vmem:[%s3178 + $0xa4] sm:$0x1]
        %v3221 = vld [vmem:[%s3178 + $0xa8] sm:$0xf]
        %v3222 = vld [vmem:[%s3178 + $0xac] sm:$0xf]
        %v3223 = vld [vmem:[%s3178 + $0xb0] sm:$0x1]
        %v3224 = vld [vmem:[%s3178 + $0xb4] sm:$0xf]
        %v3225 = vld [vmem:[%s3178 + $0xb8] sm:$0xf]
        %v3226 = vld [vmem:[%s3178 + $0xbc] sm:$0x1]
        %v3228 = vpack.i.b16 %v1707, %v1707
        %v3230 = vlaneseq
        %v3231 = vshrl.u32 %v3230, 7
        %v3232 = vsub.s32 0, %v3231
        %v3233 = vrot.slane %v3228, %v3232
        %v3235 = vunpack.c.l.b16 %v3233
        %v3236 = vpack.c.b16 %v3235, %v3235
        %v3238 = vmul.bf16 %v3179, %v3236
        %v3239 = vmul.bf16 %v3180, %v3236
        %v3240 = vmul.bf16 %v3182, %v3236
        %v3241 = vmul.bf16 %v3183, %v3236
        %v3242 = vmul.bf16 %v3185, %v3236
        %v3243 = vmul.bf16 %v3186, %v3236
        %v3244 = vmul.bf16 %v3188, %v3236
        %v3245 = vmul.bf16 %v3189, %v3236
        %v3246 = vmul.bf16 %v3191, %v3236
        %v3247 = vmul.bf16 %v3192, %v3236
        %v3248 = vmul.bf16 %v3194, %v3236
        %v3249 = vmul.bf16 %v3195, %v3236
        %v3250 = vmul.bf16 %v3197, %v3236
        %v3251 = vmul.bf16 %v3198, %v3236
        %v3252 = vmul.bf16 %v3200, %v3236
        %v3253 = vmul.bf16 %v3201, %v3236
        %v3254 = vmul.bf16 %v3203, %v3236
        %v3255 = vmul.bf16 %v3204, %v3236
        %v3256 = vmul.bf16 %v3206, %v3236
        %v3257 = vmul.bf16 %v3207, %v3236
        %v3258 = vmul.bf16 %v3209, %v3236
        %v3259 = vmul.bf16 %v3210, %v3236
        %v3260 = vmul.bf16 %v3212, %v3236
        %v3261 = vmul.bf16 %v3213, %v3236
        %v3262 = vmul.bf16 %v3215, %v3236
        %v3263 = vmul.bf16 %v3216, %v3236
        %v3264 = vmul.bf16 %v3218, %v3236
        %v3265 = vmul.bf16 %v3219, %v3236
        %v3266 = vmul.bf16 %v3221, %v3236
        %v3267 = vmul.bf16 %v3222, %v3236
        %v3268 = vmul.bf16 %v3224, %v3236
        %v3269 = vmul.bf16 %v3225, %v3236
        %v3270 = vunpack.c.l.bf16 %v3238
        %v3271 = vunpack.c.l.bf16 %v3239
        %v3272 = vunpack.c.l.bf16 %v3240
        %v3273 = vunpack.c.l.bf16 %v3241
        %v3274 = vunpack.c.l.bf16 %v3242
        %v3275 = vunpack.c.l.bf16 %v3243
        %v3276 = vunpack.c.l.bf16 %v3244
        %v3277 = vunpack.c.l.bf16 %v3245
        %v3278 = vunpack.c.l.bf16 %v3246
        %v3279 = vunpack.c.l.bf16 %v3247
        %v3280 = vunpack.c.l.bf16 %v3248
        %v3281 = vunpack.c.l.bf16 %v3249
        %v3282 = vunpack.c.l.bf16 %v3250
        %v3283 = vunpack.c.l.bf16 %v3251
        %v3284 = vunpack.c.l.bf16 %v3252
        %v3285 = vunpack.c.l.bf16 %v3253
        %v3286 = vunpack.c.l.bf16 %v3254
        %v3287 = vunpack.c.l.bf16 %v3255
        %v3288 = vunpack.c.l.bf16 %v3256
        %v3289 = vunpack.c.l.bf16 %v3257
        %v3290 = vunpack.c.l.bf16 %v3258
        %v3291 = vunpack.c.l.bf16 %v3259
        %v3292 = vunpack.c.l.bf16 %v3260
        %v3293 = vunpack.c.l.bf16 %v3261
        %v3294 = vunpack.c.l.bf16 %v3262
        %v3295 = vunpack.c.l.bf16 %v3263
        %v3296 = vunpack.c.l.bf16 %v3264
        %v3297 = vunpack.c.l.bf16 %v3265
        %v3298 = vunpack.c.l.bf16 %v3266
        %v3299 = vunpack.c.l.bf16 %v3267
        %v3300 = vunpack.c.l.bf16 %v3268
        %v3301 = vunpack.c.l.bf16 %v3269
        %v3302 = vadd.f32 %v3146, %v3270
        %v3303 = vadd.f32 %v3147, %v3271
        %v3304 = vadd.f32 %v3148, %v3272
        %v3305 = vadd.f32 %v3149, %v3273
        %v3306 = vadd.f32 %v3150, %v3274
        %v3307 = vadd.f32 %v3151, %v3275
        %v3308 = vadd.f32 %v3152, %v3276
        %v3309 = vadd.f32 %v3153, %v3277
        %v3310 = vadd.f32 %v3154, %v3278
        %v3311 = vadd.f32 %v3155, %v3279
        %v3312 = vadd.f32 %v3156, %v3280
        %v3313 = vadd.f32 %v3157, %v3281
        %v3314 = vadd.f32 %v3158, %v3282
        %v3315 = vadd.f32 %v3159, %v3283
        %v3316 = vadd.f32 %v3160, %v3284
        %v3317 = vadd.f32 %v3161, %v3285
        %v3318 = vadd.f32 %v3162, %v3286
        %v3319 = vadd.f32 %v3163, %v3287
        %v3320 = vadd.f32 %v3164, %v3288
        %v3321 = vadd.f32 %v3165, %v3289
        %v3322 = vadd.f32 %v3166, %v3290
        %v3323 = vadd.f32 %v3167, %v3291
        %v3324 = vadd.f32 %v3168, %v3292
        %v3325 = vadd.f32 %v3169, %v3293
        %v3326 = vadd.f32 %v3170, %v3294
        %v3327 = vadd.f32 %v3171, %v3295
        %v3328 = vadd.f32 %v3172, %v3296
        %v3329 = vadd.f32 %v3173, %v3297
        %v3330 = vadd.f32 %v3174, %v3298
        %v3331 = vadd.f32 %v3175, %v3299
        %v3332 = vadd.f32 %v3176, %v3300
        %v3333 = vadd.f32 %v3177, %v3301
        %v3334 = vshrl.u32 %v1707, 16
        %v3335 = vpack.i.b16 %v3334, %v3334
        %v3337 = vlaneseq
        %v3338 = vshrl.u32 %v3337, 7
        %v3339 = vsub.s32 0, %v3338
        %v3340 = vrot.slane %v3335, %v3339
        %v3342 = vunpack.c.l.b16 %v3340
        %v3343 = vpack.c.b16 %v3342, %v3342
        %v3345 = vmul.bf16 %v3179, %v3343
        %v3346 = vmul.bf16 %v3180, %v3343
        %v3347 = vmul.bf16 %v3181, %v3343
        %v3348 = vmul.bf16 %v3182, %v3343
        %v3349 = vmul.bf16 %v3183, %v3343
        %v3350 = vmul.bf16 %v3184, %v3343
        %v3351 = vmul.bf16 %v3185, %v3343
        %v3352 = vmul.bf16 %v3186, %v3343
        %v3353 = vmul.bf16 %v3187, %v3343
        %v3354 = vmul.bf16 %v3188, %v3343
        %v3355 = vmul.bf16 %v3189, %v3343
        %v3356 = vmul.bf16 %v3190, %v3343
        %v3357 = vmul.bf16 %v3191, %v3343
        %v3358 = vmul.bf16 %v3192, %v3343
        %v3359 = vmul.bf16 %v3193, %v3343
        %v3360 = vmul.bf16 %v3194, %v3343
        %v3361 = vmul.bf16 %v3195, %v3343
        %v3362 = vmul.bf16 %v3196, %v3343
        %v3363 = vmul.bf16 %v3197, %v3343
        %v3364 = vmul.bf16 %v3198, %v3343
        %v3365 = vmul.bf16 %v3199, %v3343
        %v3366 = vmul.bf16 %v3200, %v3343
        %v3367 = vmul.bf16 %v3201, %v3343
        %v3368 = vmul.bf16 %v3202, %v3343
        %v3369 = vmul.bf16 %v3203, %v3343
        %v3370 = vmul.bf16 %v3204, %v3343
        %v3371 = vmul.bf16 %v3205, %v3343
        %v3372 = vmul.bf16 %v3206, %v3343
        %v3373 = vmul.bf16 %v3207, %v3343
        %v3374 = vmul.bf16 %v3208, %v3343
        %v3375 = vmul.bf16 %v3209, %v3343
        %v3376 = vmul.bf16 %v3210, %v3343
        %v3377 = vmul.bf16 %v3211, %v3343
        %v3378 = vmul.bf16 %v3212, %v3343
        %v3379 = vmul.bf16 %v3213, %v3343
        %v3380 = vmul.bf16 %v3214, %v3343
        %v3381 = vmul.bf16 %v3215, %v3343
        %v3382 = vmul.bf16 %v3216, %v3343
        %v3383 = vmul.bf16 %v3217, %v3343
        %v3384 = vmul.bf16 %v3218, %v3343
        %v3385 = vmul.bf16 %v3219, %v3343
        %v3386 = vmul.bf16 %v3220, %v3343
        %v3387 = vmul.bf16 %v3221, %v3343
        %v3388 = vmul.bf16 %v3222, %v3343
        %v3389 = vmul.bf16 %v3223, %v3343
        %v3390 = vmul.bf16 %v3224, %v3343
        %v3391 = vmul.bf16 %v3225, %v3343
        %v3392 = vmul.bf16 %v3226, %v3343
        %v3393 = vunpack.c.l.bf16 %v3345
        %v3394 = vunpack.c.l.bf16 %v3346
        %v3395 = vunpack.c.l.bf16 %v3347
        %v3396 = vunpack.c.l.bf16 %v3348
        %v3397 = vunpack.c.l.bf16 %v3349
        %v3398 = vunpack.c.l.bf16 %v3350
        %v3399 = vunpack.c.l.bf16 %v3351
        %v3400 = vunpack.c.l.bf16 %v3352
        %v3401 = vunpack.c.l.bf16 %v3353
        %v3402 = vunpack.c.l.bf16 %v3354
        %v3403 = vunpack.c.l.bf16 %v3355
        %v3404 = vunpack.c.l.bf16 %v3356
        %v3405 = vunpack.c.l.bf16 %v3357
        %v3406 = vunpack.c.l.bf16 %v3358
        %v3407 = vunpack.c.l.bf16 %v3359
        %v3408 = vunpack.c.l.bf16 %v3360
        %v3409 = vunpack.c.l.bf16 %v3361
        %v3410 = vunpack.c.l.bf16 %v3362
        %v3411 = vunpack.c.l.bf16 %v3363
        %v3412 = vunpack.c.l.bf16 %v3364
        %v3413 = vunpack.c.l.bf16 %v3365
        %v3414 = vunpack.c.l.bf16 %v3366
        %v3415 = vunpack.c.l.bf16 %v3367
        %v3416 = vunpack.c.l.bf16 %v3368
        %v3417 = vunpack.c.l.bf16 %v3369
        %v3418 = vunpack.c.l.bf16 %v3370
        %v3419 = vunpack.c.l.bf16 %v3371
        %v3420 = vunpack.c.l.bf16 %v3372
        %v3421 = vunpack.c.l.bf16 %v3373
        %v3422 = vunpack.c.l.bf16 %v3374
        %v3423 = vunpack.c.l.bf16 %v3375
        %v3424 = vunpack.c.l.bf16 %v3376
        %v3425 = vunpack.c.l.bf16 %v3377
        %v3426 = vunpack.c.l.bf16 %v3378
        %v3427 = vunpack.c.l.bf16 %v3379
        %v3428 = vunpack.c.l.bf16 %v3380
        %v3429 = vunpack.c.l.bf16 %v3381
        %v3430 = vunpack.c.l.bf16 %v3382
        %v3431 = vunpack.c.l.bf16 %v3383
        %v3432 = vunpack.c.l.bf16 %v3384
        %v3433 = vunpack.c.l.bf16 %v3385
        %v3434 = vunpack.c.l.bf16 %v3386
        %v3435 = vunpack.c.l.bf16 %v3387
        %v3436 = vunpack.c.l.bf16 %v3388
        %v3437 = vunpack.c.l.bf16 %v3389
        %v3438 = vunpack.c.l.bf16 %v3390
        %v3439 = vunpack.c.l.bf16 %v3391
        %v3440 = vunpack.c.l.bf16 %v3392
        %v3489 = vrot.slane %v3393, 1
        %v3490 = vrot.slane %v3394, 1
        %v3491 = vsel %vm1986, %v3489, %v3490
        %v3492 = vrot.slane %v3395, 1
        %v3493 = vsel %vm1986, %v3490, %v3492
        %v3494 = vrot.slane %v3396, 1
        %v3495 = vrot.slane %v3397, 1
        %v3496 = vsel %vm1986, %v3494, %v3495
        %v3497 = vrot.slane %v3398, 1
        %v3498 = vsel %vm1986, %v3495, %v3497
        %v3499 = vrot.slane %v3399, 1
        %v3500 = vrot.slane %v3400, 1
        %v3501 = vsel %vm1986, %v3499, %v3500
        %v3502 = vrot.slane %v3401, 1
        %v3503 = vsel %vm1986, %v3500, %v3502
        %v3504 = vrot.slane %v3402, 1
        %v3505 = vrot.slane %v3403, 1
        %v3506 = vsel %vm1986, %v3504, %v3505
        %v3507 = vrot.slane %v3404, 1
        %v3508 = vsel %vm1986, %v3505, %v3507
        %v3509 = vrot.slane %v3405, 1
        %v3510 = vrot.slane %v3406, 1
        %v3511 = vsel %vm1986, %v3509, %v3510
        %v3512 = vrot.slane %v3407, 1
        %v3513 = vsel %vm1986, %v3510, %v3512
        %v3514 = vrot.slane %v3408, 1
        %v3515 = vrot.slane %v3409, 1
        %v3516 = vsel %vm1986, %v3514, %v3515
        %v3517 = vrot.slane %v3410, 1
        %v3518 = vsel %vm1986, %v3515, %v3517
        %v3519 = vrot.slane %v3411, 1
        %v3520 = vrot.slane %v3412, 1
        %v3521 = vsel %vm1986, %v3519, %v3520
        %v3522 = vrot.slane %v3413, 1
        %v3523 = vsel %vm1986, %v3520, %v3522
        %v3524 = vrot.slane %v3414, 1
        %v3525 = vrot.slane %v3415, 1
        %v3526 = vsel %vm1986, %v3524, %v3525
        %v3527 = vrot.slane %v3416, 1
        %v3528 = vsel %vm1986, %v3525, %v3527
        %v3529 = vrot.slane %v3417, 1
        %v3530 = vrot.slane %v3418, 1
        %v3531 = vsel %vm1986, %v3529, %v3530
        %v3532 = vrot.slane %v3419, 1
        %v3533 = vsel %vm1986, %v3530, %v3532
        %v3534 = vrot.slane %v3420, 1
        %v3535 = vrot.slane %v3421, 1
        %v3536 = vsel %vm1986, %v3534, %v3535
        %v3537 = vrot.slane %v3422, 1
        %v3538 = vsel %vm1986, %v3535, %v3537
        %v3539 = vrot.slane %v3423, 1
        %v3540 = vrot.slane %v3424, 1
        %v3541 = vsel %vm1986, %v3539, %v3540
        %v3542 = vrot.slane %v3425, 1
        %v3543 = vsel %vm1986, %v3540, %v3542
        %v3544 = vrot.slane %v3426, 1
        %v3545 = vrot.slane %v3427, 1
        %v3546 = vsel %vm1986, %v3544, %v3545
        %v3547 = vrot.slane %v3428, 1
        %v3548 = vsel %vm1986, %v3545, %v3547
        %v3549 = vrot.slane %v3429, 1
        %v3550 = vrot.slane %v3430, 1
        %v3551 = vsel %vm1986, %v3549, %v3550
        %v3552 = vrot.slane %v3431, 1
        %v3553 = vsel %vm1986, %v3550, %v3552
        %v3554 = vrot.slane %v3432, 1
        %v3555 = vrot.slane %v3433, 1
        %v3556 = vsel %vm1986, %v3554, %v3555
        %v3557 = vrot.slane %v3434, 1
        %v3558 = vsel %vm1986, %v3555, %v3557
        %v3559 = vrot.slane %v3435, 1
        %v3560 = vrot.slane %v3436, 1
        %v3561 = vsel %vm1986, %v3559, %v3560
        %v3562 = vrot.slane %v3437, 1
        %v3563 = vsel %vm1986, %v3560, %v3562
        %v3564 = vrot.slane %v3438, 1
        %v3565 = vrot.slane %v3439, 1
        %v3566 = vsel %vm1986, %v3564, %v3565
        %v3567 = vrot.slane %v3440, 1
        %v3568 = vsel %vm1986, %v3565, %v3567
        %v3601 = vadd.f32 %v3302, %v3491
        %v3602 = vadd.f32 %v3303, %v3493
        %v3603 = vadd.f32 %v3304, %v3496
        %v3604 = vadd.f32 %v3305, %v3498
        %v3605 = vadd.f32 %v3306, %v3501
        %v3606 = vadd.f32 %v3307, %v3503
        %v3607 = vadd.f32 %v3308, %v3506
        %v3608 = vadd.f32 %v3309, %v3508
        %v3609 = vadd.f32 %v3310, %v3511
        %v3610 = vadd.f32 %v3311, %v3513
        %v3611 = vadd.f32 %v3312, %v3516
        %v3612 = vadd.f32 %v3313, %v3518
        %v3613 = vadd.f32 %v3314, %v3521
        %v3614 = vadd.f32 %v3315, %v3523
        %v3615 = vadd.f32 %v3316, %v3526
        %v3616 = vadd.f32 %v3317, %v3528
        %v3617 = vadd.f32 %v3318, %v3531
        %v3618 = vadd.f32 %v3319, %v3533
        %v3619 = vadd.f32 %v3320, %v3536
        %v3620 = vadd.f32 %v3321, %v3538
        %v3621 = vadd.f32 %v3322, %v3541
        %v3622 = vadd.f32 %v3323, %v3543
        %v3623 = vadd.f32 %v3324, %v3546
        %v3624 = vadd.f32 %v3325, %v3548
        %v3625 = vadd.f32 %v3326, %v3551
        %v3626 = vadd.f32 %v3327, %v3553
        %v3627 = vadd.f32 %v3328, %v3556
        %v3628 = vadd.f32 %v3329, %v3558
        %v3629 = vadd.f32 %v3330, %v3561
        %v3630 = vadd.f32 %v3331, %v3563
        %v3631 = vadd.f32 %v3332, %v3566
        %v3632 = vadd.f32 %v3333, %v3568
        %v3633 = vlaneseq
        %v3634 = vshrl.u32 %v3633, 7
        %v3635 = vsub.s32 1, %v3634
        %v3636 = vrot.slane %v3228, %v3635
        %v3638 = vunpack.c.l.b16 %v3636
        %v3639 = vpack.c.b16 %v3638, %v3638
        %v3641 = vmul.bf16 %v3179, %v3639
        %v3642 = vmul.bf16 %v3180, %v3639
        %v3643 = vmul.bf16 %v3181, %v3639
        %v3644 = vmul.bf16 %v3182, %v3639
        %v3645 = vmul.bf16 %v3183, %v3639
        %v3646 = vmul.bf16 %v3184, %v3639
        %v3647 = vmul.bf16 %v3185, %v3639
        %v3648 = vmul.bf16 %v3186, %v3639
        %v3649 = vmul.bf16 %v3187, %v3639
        %v3650 = vmul.bf16 %v3188, %v3639
        %v3651 = vmul.bf16 %v3189, %v3639
        %v3652 = vmul.bf16 %v3190, %v3639
        %v3653 = vmul.bf16 %v3191, %v3639
        %v3654 = vmul.bf16 %v3192, %v3639
        %v3655 = vmul.bf16 %v3193, %v3639
        %v3656 = vmul.bf16 %v3194, %v3639
        %v3657 = vmul.bf16 %v3195, %v3639
        %v3658 = vmul.bf16 %v3196, %v3639
        %v3659 = vmul.bf16 %v3197, %v3639
        %v3660 = vmul.bf16 %v3198, %v3639
        %v3661 = vmul.bf16 %v3199, %v3639
        %v3662 = vmul.bf16 %v3200, %v3639
        %v3663 = vmul.bf16 %v3201, %v3639
        %v3664 = vmul.bf16 %v3202, %v3639
        %v3665 = vmul.bf16 %v3203, %v3639
        %v3666 = vmul.bf16 %v3204, %v3639
        %v3667 = vmul.bf16 %v3205, %v3639
        %v3668 = vmul.bf16 %v3206, %v3639
        %v3669 = vmul.bf16 %v3207, %v3639
        %v3670 = vmul.bf16 %v3208, %v3639
        %v3671 = vmul.bf16 %v3209, %v3639
        %v3672 = vmul.bf16 %v3210, %v3639
        %v3673 = vmul.bf16 %v3211, %v3639
        %v3674 = vmul.bf16 %v3212, %v3639
        %v3675 = vmul.bf16 %v3213, %v3639
        %v3676 = vmul.bf16 %v3214, %v3639
        %v3677 = vmul.bf16 %v3215, %v3639
        %v3678 = vmul.bf16 %v3216, %v3639
        %v3679 = vmul.bf16 %v3217, %v3639
        %v3680 = vmul.bf16 %v3218, %v3639
        %v3681 = vmul.bf16 %v3219, %v3639
        %v3682 = vmul.bf16 %v3220, %v3639
        %v3683 = vmul.bf16 %v3221, %v3639
        %v3684 = vmul.bf16 %v3222, %v3639
        %v3685 = vmul.bf16 %v3223, %v3639
        %v3686 = vmul.bf16 %v3224, %v3639
        %v3687 = vmul.bf16 %v3225, %v3639
        %v3688 = vmul.bf16 %v3226, %v3639
        %v3689 = vunpack.c.l.bf16 %v3641
        %v3690 = vunpack.c.l.bf16 %v3642
        %v3691 = vunpack.c.l.bf16 %v3643
        %v3692 = vunpack.c.l.bf16 %v3644
        %v3693 = vunpack.c.l.bf16 %v3645
        %v3694 = vunpack.c.l.bf16 %v3646
        %v3695 = vunpack.c.l.bf16 %v3647
        %v3696 = vunpack.c.l.bf16 %v3648
        %v3697 = vunpack.c.l.bf16 %v3649
        %v3698 = vunpack.c.l.bf16 %v3650
        %v3699 = vunpack.c.l.bf16 %v3651
        %v3700 = vunpack.c.l.bf16 %v3652
        %v3701 = vunpack.c.l.bf16 %v3653
        %v3702 = vunpack.c.l.bf16 %v3654
        %v3703 = vunpack.c.l.bf16 %v3655
        %v3704 = vunpack.c.l.bf16 %v3656
        %v3705 = vunpack.c.l.bf16 %v3657
        %v3706 = vunpack.c.l.bf16 %v3658
        %v3707 = vunpack.c.l.bf16 %v3659
        %v3708 = vunpack.c.l.bf16 %v3660
        %v3709 = vunpack.c.l.bf16 %v3661
        %v3710 = vunpack.c.l.bf16 %v3662
        %v3711 = vunpack.c.l.bf16 %v3663
        %v3712 = vunpack.c.l.bf16 %v3664
        %v3713 = vunpack.c.l.bf16 %v3665
        %v3714 = vunpack.c.l.bf16 %v3666
        %v3715 = vunpack.c.l.bf16 %v3667
        %v3716 = vunpack.c.l.bf16 %v3668
        %v3717 = vunpack.c.l.bf16 %v3669
        %v3718 = vunpack.c.l.bf16 %v3670
        %v3719 = vunpack.c.l.bf16 %v3671
        %v3720 = vunpack.c.l.bf16 %v3672
        %v3721 = vunpack.c.l.bf16 %v3673
        %v3722 = vunpack.c.l.bf16 %v3674
        %v3723 = vunpack.c.l.bf16 %v3675
        %v3724 = vunpack.c.l.bf16 %v3676
        %v3725 = vunpack.c.l.bf16 %v3677
        %v3726 = vunpack.c.l.bf16 %v3678
        %v3727 = vunpack.c.l.bf16 %v3679
        %v3728 = vunpack.c.l.bf16 %v3680
        %v3729 = vunpack.c.l.bf16 %v3681
        %v3730 = vunpack.c.l.bf16 %v3682
        %v3731 = vunpack.c.l.bf16 %v3683
        %v3732 = vunpack.c.l.bf16 %v3684
        %v3733 = vunpack.c.l.bf16 %v3685
        %v3734 = vunpack.c.l.bf16 %v3686
        %v3735 = vunpack.c.l.bf16 %v3687
        %v3736 = vunpack.c.l.bf16 %v3688
        %v3785 = vrot.slane %v3689, 2
        %v3786 = vrot.slane %v3690, 2
        %v3787 = vsel %vm2283, %v3785, %v3786
        %v3788 = vrot.slane %v3691, 2
        %v3789 = vsel %vm2283, %v3786, %v3788
        %v3790 = vrot.slane %v3692, 2
        %v3791 = vrot.slane %v3693, 2
        %v3792 = vsel %vm2283, %v3790, %v3791
        %v3793 = vrot.slane %v3694, 2
        %v3794 = vsel %vm2283, %v3791, %v3793
        %v3795 = vrot.slane %v3695, 2
        %v3796 = vrot.slane %v3696, 2
        %v3797 = vsel %vm2283, %v3795, %v3796
        %v3798 = vrot.slane %v3697, 2
        %v3799 = vsel %vm2283, %v3796, %v3798
        %v3800 = vrot.slane %v3698, 2
        %v3801 = vrot.slane %v3699, 2
        %v3802 = vsel %vm2283, %v3800, %v3801
        %v3803 = vrot.slane %v3700, 2
        %v3804 = vsel %vm2283, %v3801, %v3803
        %v3805 = vrot.slane %v3701, 2
        %v3806 = vrot.slane %v3702, 2
        %v3807 = vsel %vm2283, %v3805, %v3806
        %v3808 = vrot.slane %v3703, 2
        %v3809 = vsel %vm2283, %v3806, %v3808
        %v3810 = vrot.slane %v3704, 2
        %v3811 = vrot.slane %v3705, 2
        %v3812 = vsel %vm2283, %v3810, %v3811
        %v3813 = vrot.slane %v3706, 2
        %v3814 = vsel %vm2283, %v3811, %v3813
        %v3815 = vrot.slane %v3707, 2
        %v3816 = vrot.slane %v3708, 2
        %v3817 = vsel %vm2283, %v3815, %v3816
        %v3818 = vrot.slane %v3709, 2
        %v3819 = vsel %vm2283, %v3816, %v3818
        %v3820 = vrot.slane %v3710, 2
        %v3821 = vrot.slane %v3711, 2
        %v3822 = vsel %vm2283, %v3820, %v3821
        %v3823 = vrot.slane %v3712, 2
        %v3824 = vsel %vm2283, %v3821, %v3823
        %v3825 = vrot.slane %v3713, 2
        %v3826 = vrot.slane %v3714, 2
        %v3827 = vsel %vm2283, %v3825, %v3826
        %v3828 = vrot.slane %v3715, 2
        %v3829 = vsel %vm2283, %v3826, %v3828
        %v3830 = vrot.slane %v3716, 2
        %v3831 = vrot.slane %v3717, 2
        %v3832 = vsel %vm2283, %v3830, %v3831
        %v3833 = vrot.slane %v3718, 2
        %v3834 = vsel %vm2283, %v3831, %v3833
        %v3835 = vrot.slane %v3719, 2
        %v3836 = vrot.slane %v3720, 2
        %v3837 = vsel %vm2283, %v3835, %v3836
        %v3838 = vrot.slane %v3721, 2
        %v3839 = vsel %vm2283, %v3836, %v3838
        %v3840 = vrot.slane %v3722, 2
        %v3841 = vrot.slane %v3723, 2
        %v3842 = vsel %vm2283, %v3840, %v3841
        %v3843 = vrot.slane %v3724, 2
        %v3844 = vsel %vm2283, %v3841, %v3843
        %v3845 = vrot.slane %v3725, 2
        %v3846 = vrot.slane %v3726, 2
        %v3847 = vsel %vm2283, %v3845, %v3846
        %v3848 = vrot.slane %v3727, 2
        %v3849 = vsel %vm2283, %v3846, %v3848
        %v3850 = vrot.slane %v3728, 2
        %v3851 = vrot.slane %v3729, 2
        %v3852 = vsel %vm2283, %v3850, %v3851
        %v3853 = vrot.slane %v3730, 2
        %v3854 = vsel %vm2283, %v3851, %v3853
        %v3855 = vrot.slane %v3731, 2
        %v3856 = vrot.slane %v3732, 2
        %v3857 = vsel %vm2283, %v3855, %v3856
        %v3858 = vrot.slane %v3733, 2
        %v3859 = vsel %vm2283, %v3856, %v3858
        %v3860 = vrot.slane %v3734, 2
        %v3861 = vrot.slane %v3735, 2
        %v3862 = vsel %vm2283, %v3860, %v3861
        %v3863 = vrot.slane %v3736, 2
        %v3864 = vsel %vm2283, %v3861, %v3863
        %v3897 = vadd.f32 %v3601, %v3787
        %v3898 = vadd.f32 %v3602, %v3789
        %v3899 = vadd.f32 %v3603, %v3792
        %v3900 = vadd.f32 %v3604, %v3794
        %v3901 = vadd.f32 %v3605, %v3797
        %v3902 = vadd.f32 %v3606, %v3799
        %v3903 = vadd.f32 %v3607, %v3802
        %v3904 = vadd.f32 %v3608, %v3804
        %v3905 = vadd.f32 %v3609, %v3807
        %v3906 = vadd.f32 %v3610, %v3809
        %v3907 = vadd.f32 %v3611, %v3812
        %v3908 = vadd.f32 %v3612, %v3814
        %v3909 = vadd.f32 %v3613, %v3817
        %v3910 = vadd.f32 %v3614, %v3819
        %v3911 = vadd.f32 %v3615, %v3822
        %v3912 = vadd.f32 %v3616, %v3824
        %v3913 = vadd.f32 %v3617, %v3827
        %v3914 = vadd.f32 %v3618, %v3829
        %v3915 = vadd.f32 %v3619, %v3832
        %v3916 = vadd.f32 %v3620, %v3834
        %v3917 = vadd.f32 %v3621, %v3837
        %v3918 = vadd.f32 %v3622, %v3839
        %v3919 = vadd.f32 %v3623, %v3842
        %v3920 = vadd.f32 %v3624, %v3844
        %v3921 = vadd.f32 %v3625, %v3847
        %v3922 = vadd.f32 %v3626, %v3849
        %v3923 = vadd.f32 %v3627, %v3852
        %v3924 = vadd.f32 %v3628, %v3854
        %v3925 = vadd.f32 %v3629, %v3857
        %v3926 = vadd.f32 %v3630, %v3859
        %v3927 = vadd.f32 %v3631, %v3862
        %v3928 = vadd.f32 %v3632, %v3864
        %v3929 = vld [vmem:[%s4] sm:$0x1]
        %v3931 = vlaneseq
        %v3932 = vshrl.u32 %v3931, 7
        %v3933 = vsub.s32 0, %v3932
        %v3934 = vrot.slane %v3929, %v3933
        %v3936 = vadd.f32 %v3897, %v3934
        %v3937 = vadd.f32 %v3898, %v3934
        %v3938 = vadd.f32 %v3899, %v3934
        %v3939 = vadd.f32 %v3900, %v3934
        %v3940 = vadd.f32 %v3901, %v3934
        %v3941 = vadd.f32 %v3902, %v3934
        %v3942 = vadd.f32 %v3903, %v3934
        %v3943 = vadd.f32 %v3904, %v3934
        %v3944 = vadd.f32 %v3905, %v3934
        %v3945 = vadd.f32 %v3906, %v3934
        %v3946 = vadd.f32 %v3907, %v3934
        %v3947 = vadd.f32 %v3908, %v3934
        %v3948 = vadd.f32 %v3909, %v3934
        %v3949 = vadd.f32 %v3910, %v3934
        %v3950 = vadd.f32 %v3911, %v3934
        %v3951 = vadd.f32 %v3912, %v3934
        %v3952 = vadd.f32 %v3913, %v3934
        %v3953 = vadd.f32 %v3914, %v3934
        %v3954 = vadd.f32 %v3915, %v3934
        %v3955 = vadd.f32 %v3916, %v3934
        %v3956 = vadd.f32 %v3917, %v3934
        %v3957 = vadd.f32 %v3918, %v3934
        %v3958 = vadd.f32 %v3919, %v3934
        %v3959 = vadd.f32 %v3920, %v3934
        %v3960 = vadd.f32 %v3921, %v3934
        %v3961 = vadd.f32 %v3922, %v3934
        %v3962 = vadd.f32 %v3923, %v3934
        %v3963 = vadd.f32 %v3924, %v3934
        %v3964 = vadd.f32 %v3925, %v3934
        %v3965 = vadd.f32 %v3926, %v3934
        %v3966 = vadd.f32 %v3927, %v3934
        %v3967 = vadd.f32 %v3928, %v3934
        %v3968 = vxor.u32 %v3936, 2147483648
        %v3969 = vxor.u32 %v3937, 2147483648
        %v3970 = vxor.u32 %v3938, 2147483648
        %v3971 = vxor.u32 %v3939, 2147483648
        %v3972 = vxor.u32 %v3940, 2147483648
        %v3973 = vxor.u32 %v3941, 2147483648
        %v3974 = vxor.u32 %v3942, 2147483648
        %v3975 = vxor.u32 %v3943, 2147483648
        %v3976 = vxor.u32 %v3944, 2147483648
        %v3977 = vxor.u32 %v3945, 2147483648
        %v3978 = vxor.u32 %v3946, 2147483648
        %v3979 = vxor.u32 %v3947, 2147483648
        %v3980 = vxor.u32 %v3948, 2147483648
        %v3981 = vxor.u32 %v3949, 2147483648
        %v3982 = vxor.u32 %v3950, 2147483648
        %v3983 = vxor.u32 %v3951, 2147483648
        %v3984 = vxor.u32 %v3952, 2147483648
        %v3985 = vxor.u32 %v3953, 2147483648
        %v3986 = vxor.u32 %v3954, 2147483648
        %v3987 = vxor.u32 %v3955, 2147483648
        %v3988 = vxor.u32 %v3956, 2147483648
        %v3989 = vxor.u32 %v3957, 2147483648
        %v3990 = vxor.u32 %v3958, 2147483648
        %v3991 = vxor.u32 %v3959, 2147483648
        %v3992 = vxor.u32 %v3960, 2147483648
        %v3993 = vxor.u32 %v3961, 2147483648
        %v3994 = vxor.u32 %v3962, 2147483648
        %v3995 = vxor.u32 %v3963, 2147483648
        %v3996 = vxor.u32 %v3964, 2147483648
        %v3997 = vxor.u32 %v3965, 2147483648
        %v3998 = vxor.u32 %v3966, 2147483648
        %v3999 = vxor.u32 %v3967, 2147483648
        %v4000 = vmul.f32 %v3968, 1.442695
        %v4001 = vpow.pop %v4000
        %v4002 = vmul.f32 %v3969, 1.442695
        %v4003 = vpow.pop %v4002
        %v4004 = vmul.f32 %v3970, 1.442695
        %v4005 = vpow.pop %v4004
        %v4006 = vmul.f32 %v3971, 1.442695
        %v4007 = vpow.pop %v4006
        %v4008 = vmul.f32 %v3972, 1.442695
        %v4009 = vpow.pop %v4008
        %v4010 = vmul.f32 %v3973, 1.442695
        %v4011 = vpow.pop %v4010
        %v4012 = vmul.f32 %v3974, 1.442695
        %v4013 = vpow.pop %v4012
        %v4014 = vmul.f32 %v3975, 1.442695
        %v4015 = vpow.pop %v4014
        %v4016 = vmul.f32 %v3976, 1.442695
        %v4017 = vpow.pop %v4016
        %v4018 = vmul.f32 %v3977, 1.442695
        %v4019 = vpow.pop %v4018
        %v4020 = vmul.f32 %v3978, 1.442695
        %v4021 = vpow.pop %v4020
        %v4022 = vmul.f32 %v3979, 1.442695
        %v4023 = vpow.pop %v4022
        %v4024 = vmul.f32 %v3980, 1.442695
        %v4025 = vpow.pop %v4024
        %v4026 = vmul.f32 %v3981, 1.442695
        %v4027 = vpow.pop %v4026
        %v4028 = vmul.f32 %v3982, 1.442695
        %v4029 = vpow.pop %v4028
        %v4030 = vmul.f32 %v3983, 1.442695
        %v4031 = vpow.pop %v4030
        %v4032 = vmul.f32 %v3984, 1.442695
        %v4033 = vpow.pop %v4032
        %v4034 = vmul.f32 %v3985, 1.442695
        %v4035 = vpow.pop %v4034
        %v4036 = vmul.f32 %v3986, 1.442695
        %v4037 = vpow.pop %v4036
        %v4038 = vmul.f32 %v3987, 1.442695
        %v4039 = vpow.pop %v4038
        %v4040 = vmul.f32 %v3988, 1.442695
        %v4041 = vpow.pop %v4040
        %v4042 = vmul.f32 %v3989, 1.442695
        %v4043 = vpow.pop %v4042
        %v4044 = vmul.f32 %v3990, 1.442695
        %v4045 = vpow.pop %v4044
        %v4046 = vmul.f32 %v3991, 1.442695
        %v4047 = vpow.pop %v4046
        %v4048 = vmul.f32 %v3992, 1.442695
        %v4049 = vpow.pop %v4048
        %v4050 = vmul.f32 %v3993, 1.442695
        %v4051 = vpow.pop %v4050
        %v4052 = vmul.f32 %v3994, 1.442695
        %v4053 = vpow.pop %v4052
        %v4054 = vmul.f32 %v3995, 1.442695
        %v4055 = vpow.pop %v4054
        %v4056 = vmul.f32 %v3996, 1.442695
        %v4057 = vpow.pop %v4056
        %v4058 = vmul.f32 %v3997, 1.442695
        %v4059 = vpow.pop %v4058
        %v4060 = vmul.f32 %v3998, 1.442695
        %v4061 = vpow.pop %v4060
        %v4062 = vmul.f32 %v3999, 1.442695
        %v4063 = vpow.pop %v4062
        %v4064 = vadd.f32 %v4001, 1.0
        %v4065 = vadd.f32 %v4003, 1.0
        %v4066 = vadd.f32 %v4005, 1.0
        %v4067 = vadd.f32 %v4007, 1.0
        %v4068 = vadd.f32 %v4009, 1.0
        %v4069 = vadd.f32 %v4011, 1.0
        %v4070 = vadd.f32 %v4013, 1.0
        %v4071 = vadd.f32 %v4015, 1.0
        %v4072 = vadd.f32 %v4017, 1.0
        %v4073 = vadd.f32 %v4019, 1.0
        %v4074 = vadd.f32 %v4021, 1.0
        %v4075 = vadd.f32 %v4023, 1.0
        %v4076 = vadd.f32 %v4025, 1.0
        %v4077 = vadd.f32 %v4027, 1.0
        %v4078 = vadd.f32 %v4029, 1.0
        %v4079 = vadd.f32 %v4031, 1.0
        %v4080 = vadd.f32 %v4033, 1.0
        %v4081 = vadd.f32 %v4035, 1.0
        %v4082 = vadd.f32 %v4037, 1.0
        %v4083 = vadd.f32 %v4039, 1.0
        %v4084 = vadd.f32 %v4041, 1.0
        %v4085 = vadd.f32 %v4043, 1.0
        %v4086 = vadd.f32 %v4045, 1.0
        %v4087 = vadd.f32 %v4047, 1.0
        %v4088 = vadd.f32 %v4049, 1.0
        %v4089 = vadd.f32 %v4051, 1.0
        %v4090 = vadd.f32 %v4053, 1.0
        %v4091 = vadd.f32 %v4055, 1.0
        %v4092 = vadd.f32 %v4057, 1.0
        %v4093 = vadd.f32 %v4059, 1.0
        %v4094 = vadd.f32 %v4061, 1.0
        %v4095 = vadd.f32 %v4063, 1.0
        %v4096 = vrcp.pop %v4064
        %v4097 = vmul.f32 1.0, %v4096
        %v4098 = vrcp.pop %v4065
        %v4099 = vmul.f32 1.0, %v4098
        %v4100 = vrcp.pop %v4066
        %v4101 = vmul.f32 1.0, %v4100
        %v4102 = vrcp.pop %v4067
        %v4103 = vmul.f32 1.0, %v4102
        %v4104 = vrcp.pop %v4068
        %v4105 = vmul.f32 1.0, %v4104
        %v4106 = vrcp.pop %v4069
        %v4107 = vmul.f32 1.0, %v4106
        %v4108 = vrcp.pop %v4070
        %v4109 = vmul.f32 1.0, %v4108
        %v4110 = vrcp.pop %v4071
        %v4111 = vmul.f32 1.0, %v4110
        %v4112 = vrcp.pop %v4072
        %v4113 = vmul.f32 1.0, %v4112
        %v4114 = vrcp.pop %v4073
        %v4115 = vmul.f32 1.0, %v4114
        %v4116 = vrcp.pop %v4074
        %v4117 = vmul.f32 1.0, %v4116
        %v4118 = vrcp.pop %v4075
        %v4119 = vmul.f32 1.0, %v4118
        %v4120 = vrcp.pop %v4076
        %v4121 = vmul.f32 1.0, %v4120
        %v4122 = vrcp.pop %v4077
        %v4123 = vmul.f32 1.0, %v4122
        %v4124 = vrcp.pop %v4078
        %v4125 = vmul.f32 1.0, %v4124
        %v4126 = vrcp.pop %v4079
        %v4127 = vmul.f32 1.0, %v4126
        %v4128 = vrcp.pop %v4080
        %v4129 = vmul.f32 1.0, %v4128
        %v4130 = vrcp.pop %v4081
        %v4131 = vmul.f32 1.0, %v4130
        %v4132 = vrcp.pop %v4082
        %v4133 = vmul.f32 1.0, %v4132
        %v4134 = vrcp.pop %v4083
        %v4135 = vmul.f32 1.0, %v4134
        %v4136 = vrcp.pop %v4084
        %v4137 = vmul.f32 1.0, %v4136
        %v4138 = vrcp.pop %v4085
        %v4139 = vmul.f32 1.0, %v4138
        %v4140 = vrcp.pop %v4086
        %v4141 = vmul.f32 1.0, %v4140
        %v4142 = vrcp.pop %v4087
        %v4143 = vmul.f32 1.0, %v4142
        %v4144 = vrcp.pop %v4088
        %v4145 = vmul.f32 1.0, %v4144
        %v4146 = vrcp.pop %v4089
        %v4147 = vmul.f32 1.0, %v4146
        %v4148 = vrcp.pop %v4090
        %v4149 = vmul.f32 1.0, %v4148
        %v4150 = vrcp.pop %v4091
        %v4151 = vmul.f32 1.0, %v4150
        %v4152 = vrcp.pop %v4092
        %v4153 = vmul.f32 1.0, %v4152
        %v4154 = vrcp.pop %v4093
        %v4155 = vmul.f32 1.0, %v4154
        %v4156 = vrcp.pop %v4094
        %v4157 = vmul.f32 1.0, %v4156
        %v4158 = vrcp.pop %v4095
        %v4159 = vmul.f32 1.0, %v4158
        %v4160 = vmul.f32 %v3936, %v4097
        %v4161 = vmul.f32 %v3937, %v4099
        %v4162 = vmul.f32 %v3938, %v4101
        %v4163 = vmul.f32 %v3939, %v4103
        %v4164 = vmul.f32 %v3940, %v4105
        %v4165 = vmul.f32 %v3941, %v4107
        %v4166 = vmul.f32 %v3942, %v4109
        %v4167 = vmul.f32 %v3943, %v4111
        %v4168 = vmul.f32 %v3944, %v4113
        %v4169 = vmul.f32 %v3945, %v4115
        %v4170 = vmul.f32 %v3946, %v4117
        %v4171 = vmul.f32 %v3947, %v4119
        %v4172 = vmul.f32 %v3948, %v4121
        %v4173 = vmul.f32 %v3949, %v4123
        %v4174 = vmul.f32 %v3950, %v4125
        %v4175 = vmul.f32 %v3951, %v4127
        %v4176 = vmul.f32 %v3952, %v4129
        %v4177 = vmul.f32 %v3953, %v4131
        %v4178 = vmul.f32 %v3954, %v4133
        %v4179 = vmul.f32 %v3955, %v4135
        %v4180 = vmul.f32 %v3956, %v4137
        %v4181 = vmul.f32 %v3957, %v4139
        %v4182 = vmul.f32 %v3958, %v4141
        %v4183 = vmul.f32 %v3959, %v4143
        %v4184 = vmul.f32 %v3960, %v4145
        %v4185 = vmul.f32 %v3961, %v4147
        %v4186 = vmul.f32 %v3962, %v4149
        %v4187 = vmul.f32 %v3963, %v4151
        %v4188 = vmul.f32 %v3964, %v4153
        %v4189 = vmul.f32 %v3965, %v4155
        %v4190 = vmul.f32 %v3966, %v4157
        %v4191 = vmul.f32 %v3967, %v4159
        %v4192 = vpack.c.bf16 %v4161, %v4160
        %v4193 = vpack.c.bf16 %v4163, %v4162
        %v4194 = vpack.c.bf16 %v4165, %v4164
        %v4195 = vpack.c.bf16 %v4167, %v4166
        %v4196 = vpack.c.bf16 %v4169, %v4168
        %v4197 = vpack.c.bf16 %v4171, %v4170
        %v4198 = vpack.c.bf16 %v4173, %v4172
        %v4199 = vpack.c.bf16 %v4175, %v4174
        %v4200 = vpack.c.bf16 %v4177, %v4176
        %v4201 = vpack.c.bf16 %v4179, %v4178
        %v4202 = vpack.c.bf16 %v4181, %v4180
        %v4203 = vpack.c.bf16 %v4183, %v4182
        %v4204 = vpack.c.bf16 %v4185, %v4184
        %v4205 = vpack.c.bf16 %v4187, %v4186
        %v4206 = vpack.c.bf16 %v4189, %v4188
        %v4207 = vpack.c.bf16 %v4191, %v4190
        %4208 = vmatprep.subr.bf16.mxu0 0
        %4209 = vmatpush1.bf16.msra.mxu0 %v4199
        %4210 = vmatprep.subr.bf16.mxu0 0
        %4211 = vmatpush1.bf16.msra.mxu0 %v4198
        %4212 = vmatprep.subr.bf16.mxu0 0
        %4213 = vmatpush1.bf16.msra.mxu0 %v4197
        %4214 = vmatprep.subr.bf16.mxu0 0
        %4215 = vmatpush1.bf16.msra.mxu0 %v4196
        %4216 = vmatprep.subr.bf16.mxu0 0
        %4217 = vmatpush1.bf16.msra.mxu0 %v4195
        %4218 = vmatprep.subr.bf16.mxu0 0
        %4219 = vmatpush1.bf16.msra.mxu0 %v4194
        %4220 = vmatprep.subr.bf16.mxu0 0
        %4221 = vmatpush1.bf16.msra.mxu0 %v4193
        %4222 = vmatprep.subr.bf16.mxu0 0
        %4223 = vmatpush1.bf16.msra.mxu0 %v4192
        %4224 = vmatprep.subr.bf16.mxu0 0
        %4225 = vmatpush2.bf16.msra.mxu0 %v4207
        %4226 = vmatprep.subr.bf16.mxu0 0
        %4227 = vmatpush2.bf16.msra.mxu0 %v4206
        %4228 = vmatprep.subr.bf16.mxu0 0
        %4229 = vmatpush2.bf16.msra.mxu0 %v4205
        %4230 = vmatprep.subr.bf16.mxu0 0
        %4231 = vmatpush2.bf16.msra.mxu0 %v4204
        %4232 = vmatprep.subr.bf16.mxu0 0
        %4233 = vmatpush2.bf16.msra.mxu0 %v4203
        %4234 = vmatprep.subr.bf16.mxu0 0
        %4235 = vmatpush2.bf16.msra.mxu0 %v4202
        %4236 = vmatprep.subr.bf16.mxu0 0
        %4237 = vmatpush2.bf16.msra.mxu0 %v4201
        %4238 = vmatprep.subr.bf16.mxu0 0
        %4239 = vmatpush2.bf16.msra.mxu0 %v4200
        %4240 = vmatprep.mubr.bf16.mxu0 1065369472
        %4241 = vmatmul.mubr.bf16.gmra.mxu0 1065369472
        %v4242 = vpop.f32.mrf.mxu0
        %v4243 = vadd.f32 0.0, %v4242
        %v4244 = vpop.f32.mrf.mxu0
        %v4245 = vpop.f32.mrf.mxu0
        %v4246 = vpop.f32.mrf.mxu0
        %4247 = vdwg.mxu0
        %v4248 = vmul.f32 %v4243, 0.00390625
        %v4249 = vpack.c.bf16 %v4248, %v4248
        %v4250 = vld [vmem:[#allocation9] sm:$0xf]
        %v4251 = vld [vmem:[#allocation9 + $0x4] sm:$0xf]
        %v4252 = vld [vmem:[#allocation9 + $0x8] sm:$0xf]
        %v4253 = vld [vmem:[#allocation9 + $0xc] sm:$0xf]
        %v4254 = vld [vmem:[#allocation9 + $0x10] sm:$0xf]
        %v4255 = vld [vmem:[#allocation9 + $0x14] sm:$0xf]
        %v4256 = vld [vmem:[#allocation9 + $0x18] sm:$0xf]
        %v4257 = vld [vmem:[#allocation9 + $0x1c] sm:$0xf]
        %v4258 = vld [vmem:[#allocation9 + $0x20] sm:$0xf]
        %v4259 = vld [vmem:[#allocation9 + $0x24] sm:$0xf]
        %v4260 = vld [vmem:[#allocation9 + $0x28] sm:$0xf]
        %v4261 = vld [vmem:[#allocation9 + $0x2c] sm:$0xf]
        %v4262 = vld [vmem:[#allocation9 + $0x30] sm:$0xf]
        %v4263 = vld [vmem:[#allocation9 + $0x34] sm:$0xf]
        %v4264 = vld [vmem:[#allocation9 + $0x38] sm:$0xf]
        %v4265 = vld [vmem:[#allocation9 + $0x3c] sm:$0xf]
        %v4266 = vld [vmem:[%s6] sm:$0x1]
        %v4283 = vunpack.c.l.b16 %v4250
        %v4284 = vunpack.c.l.b16 %v4251
        %v4285 = vunpack.c.l.b16 %v4252
        %v4286 = vunpack.c.l.b16 %v4253
        %v4287 = vunpack.c.l.b16 %v4254
        %v4288 = vunpack.c.l.b16 %v4255
        %v4289 = vunpack.c.l.b16 %v4256
        %v4290 = vunpack.c.l.b16 %v4257
        %v4291 = vunpack.c.l.b16 %v4258
        %v4292 = vunpack.c.l.b16 %v4259
        %v4293 = vunpack.c.l.b16 %v4260
        %v4294 = vunpack.c.l.b16 %v4261
        %v4295 = vunpack.c.l.b16 %v4262
        %v4296 = vunpack.c.l.b16 %v4263
        %v4297 = vunpack.c.l.b16 %v4264
        %v4298 = vunpack.c.l.b16 %v4265
        %v4299 = vpack.c.b16 %v4284, %v4283
        %v4300 = vpack.c.b16 %v4286, %v4285
        %v4301 = vpack.c.b16 %v4288, %v4287
        %v4302 = vpack.c.b16 %v4290, %v4289
        %v4303 = vpack.c.b16 %v4292, %v4291
        %v4304 = vpack.c.b16 %v4294, %v4293
        %v4305 = vpack.c.b16 %v4296, %v4295
        %v4306 = vpack.c.b16 %v4298, %v4297
        %4315 = vmatprep.subr.bf16.mxu0 0
        %4316 = vmatpush1.bf16.msra.mxu0 %v4306
        %4317 = vmatprep.subr.bf16.mxu0 0
        %4318 = vmatpush1.bf16.msra.mxu0 %v4305
        %4319 = vmatprep.subr.bf16.mxu0 0
        %4320 = vmatpush1.bf16.msra.mxu0 %v4304
        %4321 = vmatprep.subr.bf16.mxu0 0
        %4322 = vmatpush1.bf16.msra.mxu0 %v4303
        %4323 = vmatprep.subr.bf16.mxu0 0
        %4324 = vmatpush1.bf16.msra.mxu0 %v4302
        %4325 = vmatprep.subr.bf16.mxu0 0
        %4326 = vmatpush1.bf16.msra.mxu0 %v4301
        %4327 = vmatprep.subr.bf16.mxu0 0
        %4328 = vmatpush1.bf16.msra.mxu0 %v4300
        %4329 = vmatprep.subr.bf16.mxu0 0
        %4330 = vmatpush1.bf16.msra.mxu0 %v4299
        %4331 = vmatprep.subr.bf16.mxu0 0
        %4332 = vmatpush2.bf16.msra.mxu0 0
        %4333 = vmatprep.subr.bf16.mxu0 0
        %4334 = vmatpush2.bf16.msra.mxu0 0
        %4335 = vmatprep.subr.bf16.mxu0 0
        %4336 = vmatpush2.bf16.msra.mxu0 0
        %4337 = vmatprep.subr.bf16.mxu0 0
        %4338 = vmatpush2.bf16.msra.mxu0 0
        %4339 = vmatprep.subr.bf16.mxu0 0
        %4340 = vmatpush2.bf16.msra.mxu0 0
        %4341 = vmatprep.subr.bf16.mxu0 0
        %4342 = vmatpush2.bf16.msra.mxu0 0
        %4343 = vmatprep.subr.bf16.mxu0 0
        %4344 = vmatpush2.bf16.msra.mxu0 0
        %4345 = vmatprep.subr.bf16.mxu0 0
        %4346 = vmatpush2.bf16.msra.mxu0 0
        %4347 = vmatprep.mubr.bf16.mxu0 0
        %4348 = vmatmul.mubr.bf16.gmra.mxu0 %v4249
        %v4349 = vpop.f32.mrf.mxu0
        %v4350 = vadd.f32 %v4266, %v4349
        %v4351 = vpop.f32.mrf.mxu0
        %v4352 = vpop.f32.mrf.mxu0
        %v4353 = vpop.f32.mrf.mxu0
        %4354 = vdwg.mxu0
        %v4355 = vxor.u32 %v4350, 2147483648
        %v4356 = vmul.f32 %v4355, 1.442695
        %v4357 = vpow.pop %v4356
        %v4358 = vadd.f32 %v4357, 1.0
        %v4359 = vrcp.pop %v4358
        %v4360 = vmul.f32 1.0, %v4359
        %v4361 = vmul.f32 %v4350, %v4360
        %v4362 = vpack.c.bf16 %v4361, %v4361
        %v4363 = vld [vmem:[#allocation11] sm:$0xf]
        %v4364 = vld [vmem:[#allocation11 + $0x4] sm:$0xf]
        %v4365 = vld [vmem:[#allocation11 + $0x8] sm:$0xf]
        %v4366 = vld [vmem:[#allocation11 + $0xc] sm:$0xf]
        %v4367 = vld [vmem:[#allocation11 + $0x10] sm:$0xf]
        %v4368 = vld [vmem:[#allocation11 + $0x14] sm:$0xf]
        %v4369 = vld [vmem:[#allocation11 + $0x18] sm:$0xf]
        %v4370 = vld [vmem:[#allocation11 + $0x1c] sm:$0xf]
        %v4371 = vld [vmem:[#allocation11 + $0x20] sm:$0xf]
        %v4372 = vld [vmem:[#allocation11 + $0x24] sm:$0xf]
        %v4373 = vld [vmem:[#allocation11 + $0x28] sm:$0xf]
        %v4374 = vld [vmem:[#allocation11 + $0x2c] sm:$0xf]
        %v4375 = vld [vmem:[#allocation11 + $0x30] sm:$0xf]
        %v4376 = vld [vmem:[#allocation11 + $0x34] sm:$0xf]
        %v4377 = vld [vmem:[#allocation11 + $0x38] sm:$0xf]
        %v4378 = vld [vmem:[#allocation11 + $0x3c] sm:$0xf]
        %v4379 = vld [vmem:[%s8] sm:$0x1]
        %v4396 = vunpack.c.l.b16 %v4363
        %v4397 = vunpack.c.l.b16 %v4364
        %v4398 = vunpack.c.l.b16 %v4365
        %v4399 = vunpack.c.l.b16 %v4366
        %v4400 = vunpack.c.l.b16 %v4367
        %v4401 = vunpack.c.l.b16 %v4368
        %v4402 = vunpack.c.l.b16 %v4369
        %v4403 = vunpack.c.l.b16 %v4370
        %v4404 = vunpack.c.l.b16 %v4371
        %v4405 = vunpack.c.l.b16 %v4372
        %v4406 = vunpack.c.l.b16 %v4373
        %v4407 = vunpack.c.l.b16 %v4374
        %v4408 = vunpack.c.l.b16 %v4375
        %v4409 = vunpack.c.l.b16 %v4376
        %v4410 = vunpack.c.l.b16 %v4377
        %v4411 = vunpack.c.l.b16 %v4378
        %v4412 = vpack.c.b16 %v4397, %v4396
        %v4413 = vpack.c.b16 %v4399, %v4398
        %v4414 = vpack.c.b16 %v4401, %v4400
        %v4415 = vpack.c.b16 %v4403, %v4402
        %v4416 = vpack.c.b16 %v4405, %v4404
        %v4417 = vpack.c.b16 %v4407, %v4406
        %v4418 = vpack.c.b16 %v4409, %v4408
        %v4419 = vpack.c.b16 %v4411, %v4410
        %4428 = vmatprep.subr.bf16.mxu0 0
        %4429 = vmatpush1.bf16.msra.mxu0 %v4419
        %4430 = vmatprep.subr.bf16.mxu0 0
        %4431 = vmatpush1.bf16.msra.mxu0 %v4418
        %4432 = vmatprep.subr.bf16.mxu0 0
        %4433 = vmatpush1.bf16.msra.mxu0 %v4417
        %4434 = vmatprep.subr.bf16.mxu0 0
        %4435 = vmatpush1.bf16.msra.mxu0 %v4416
        %4436 = vmatprep.subr.bf16.mxu0 0
        %4437 = vmatpush1.bf16.msra.mxu0 %v4415
        %4438 = vmatprep.subr.bf16.mxu0 0
        %4439 = vmatpush1.bf16.msra.mxu0 %v4414
        %4440 = vmatprep.subr.bf16.mxu0 0
        %4441 = vmatpush1.bf16.msra.mxu0 %v4413
        %4442 = vmatprep.subr.bf16.mxu0 0
        %4443 = vmatpush1.bf16.msra.mxu0 %v4412
        %4444 = vmatprep.subr.bf16.mxu0 0
        %4445 = vmatpush2.bf16.msra.mxu0 0
        %4446 = vmatprep.subr.bf16.mxu0 0
        %4447 = vmatpush2.bf16.msra.mxu0 0
        %4448 = vmatprep.subr.bf16.mxu0 0
        %4449 = vmatpush2.bf16.msra.mxu0 0
        %4450 = vmatprep.subr.bf16.mxu0 0
        %4451 = vmatpush2.bf16.msra.mxu0 0
        %4452 = vmatprep.subr.bf16.mxu0 0
        %4453 = vmatpush2.bf16.msra.mxu0 0
        %4454 = vmatprep.subr.bf16.mxu0 0
        %4455 = vmatpush2.bf16.msra.mxu0 0
        %4456 = vmatprep.subr.bf16.mxu0 0
        %4457 = vmatpush2.bf16.msra.mxu0 0
        %4458 = vmatprep.subr.bf16.mxu0 0
        %4459 = vmatpush2.bf16.msra.mxu0 0
        %4460 = vmatprep.mubr.bf16.mxu0 0
        %4461 = vmatmul.mubr.bf16.gmra.mxu0 %v4362
        %v4462 = vpop.f32.mrf.mxu0
        %v4463 = vadd.f32 %v4379, %v4462
        %v4464 = vpop.f32.mrf.mxu0
        %v4465 = vpop.f32.mrf.mxu0
        %v4466 = vpop.f32.mrf.mxu0
        %4467 = vdwg.mxu0
        %v4468 = vxor.u32 %v4463, 2147483648
        %v4469 = vmul.f32 %v4468, 1.442695
        %v4470 = vpow.pop %v4469
        %v4471 = vadd.f32 %v4470, 1.0
        %v4472 = vrcp.pop %v4471
        %v4473 = vmul.f32 1.0, %v4472
        %v4474 = vld [vmem:[#allocation12] sm:$0xf]
        %v4475 = vld [vmem:[#allocation12 + $0x4] sm:$0xf]
        %v4476 = vld [vmem:[#allocation12 + $0x8] sm:$0xf]
        %v4477 = vld [vmem:[#allocation12 + $0xc] sm:$0xf]
        %v4478 = vld [vmem:[#allocation12 + $0x10] sm:$0xf]
        %v4479 = vld [vmem:[#allocation12 + $0x14] sm:$0xf]
        %v4480 = vld [vmem:[#allocation12 + $0x18] sm:$0xf]
        %v4481 = vld [vmem:[#allocation12 + $0x1c] sm:$0xf]
        %v4482 = vld [vmem:[#allocation12 + $0x20] sm:$0xf]
        %v4483 = vld [vmem:[#allocation12 + $0x24] sm:$0xf]
        %v4484 = vld [vmem:[#allocation12 + $0x28] sm:$0xf]
        %v4485 = vld [vmem:[#allocation12 + $0x2c] sm:$0xf]
        %v4486 = vld [vmem:[#allocation12 + $0x30] sm:$0xf]
        %v4487 = vld [vmem:[#allocation12 + $0x34] sm:$0xf]
        %v4488 = vld [vmem:[#allocation12 + $0x38] sm:$0xf]
        %v4489 = vld [vmem:[#allocation12 + $0x3c] sm:$0xf]
        %4490 = vxpose.xlu0.b32.start [1/16] %v4473, 128
        %4491 = vxpose.xlu0.b32.cont [2/16] 0.0, 128
        %4492 = vxpose.xlu0.b32.cont [3/16] 0.0, 128
        %4493 = vxpose.xlu0.b32.cont [4/16] 0.0, 128
        %4494 = vxpose.xlu0.b32.cont [5/16] 0.0, 128
        %4495 = vxpose.xlu0.b32.cont [6/16] 0.0, 128
        %4496 = vxpose.xlu0.b32.cont [7/16] 0.0, 128
        %4497 = vxpose.xlu0.b32.cont [8/16] 0.0, 128
        %4498 = vxpose.xlu0.b32.cont [9/16] 0.0, 128
        %4499 = vxpose.xlu0.b32.cont [10/16] 0.0, 128
        %4500 = vxpose.xlu0.b32.cont [11/16] 0.0, 128
        %4501 = vxpose.xlu0.b32.cont [12/16] 0.0, 128
        %4502 = vxpose.xlu0.b32.cont [13/16] 0.0, 128
        %4503 = vxpose.xlu0.b32.cont [14/16] 0.0, 128
        %4504 = vxpose.xlu0.b32.cont [15/16] 0.0, 128
        %4505 = vxpose.xlu0.b32.end [16/16] 0.0, 128
        %v4506 = vpop.trf.xlu0
        %v4507 = vpop.trf.xlu0
        %v4508 = vpop.trf.xlu0
        %v4509 = vpop.trf.xlu0
        %v4510 = vpop.trf.xlu0
        %v4511 = vpop.trf.xlu0
        %v4512 = vpop.trf.xlu0
        %v4513 = vpop.trf.xlu0
        %v4514 = vpop.trf.xlu0
        %v4515 = vpop.trf.xlu0
        %v4516 = vpop.trf.xlu0
        %v4517 = vpop.trf.xlu0
        %v4518 = vpop.trf.xlu0
        %v4519 = vpop.trf.xlu0
        %v4520 = vpop.trf.xlu0
        %v4521 = vpop.trf.xlu0
        %v4522 = vpack.c.bf16 %v4507, %v4506
        %v4523 = vpack.c.bf16 %v4509, %v4508
        %v4524 = vpack.c.bf16 %v4511, %v4510
        %v4525 = vpack.c.bf16 %v4513, %v4512
        %v4526 = vpack.c.bf16 %v4515, %v4514
        %v4527 = vpack.c.bf16 %v4517, %v4516
        %v4528 = vpack.c.bf16 %v4519, %v4518
        %v4529 = vpack.c.bf16 %v4521, %v4520
        %4531 = vset.pattern.permute.xlu0 0
        %4532 = vperm.xlu0 %4531, %v4522
        %v4533 = vpop.permute.xlu0 %4532
        %4535 = vset.pattern.permute.xlu0 0
        %4536 = vperm.xlu0 %4535, %v4523
        %v4537 = vpop.permute.xlu0 %4536
        %4539 = vset.pattern.permute.xlu0 0
        %4540 = vperm.xlu0 %4539, %v4524
        %v4541 = vpop.permute.xlu0 %4540
        %4543 = vset.pattern.permute.xlu0 0
        %4544 = vperm.xlu0 %4543, %v4525
        %v4545 = vpop.permute.xlu0 %4544
        %4547 = vset.pattern.permute.xlu0 0
        %4548 = vperm.xlu0 %4547, %v4526
        %v4549 = vpop.permute.xlu0 %4548
        %4551 = vset.pattern.permute.xlu0 0
        %4552 = vperm.xlu0 %4551, %v4527
        %v4553 = vpop.permute.xlu0 %4552
        %4555 = vset.pattern.permute.xlu0 0
        %4556 = vperm.xlu0 %4555, %v4528
        %v4557 = vpop.permute.xlu0 %4556
        %4559 = vset.pattern.permute.xlu0 0
        %4560 = vperm.xlu0 %4559, %v4529
        %v4561 = vpop.permute.xlu0 %4560
        %v4571 = vunpack.c.l.s4 839922192
        %v4572 = vunpack.c.0.s8 %v4571
        %v4573 = vlaneseq
        %v4574 = vshrl.u32 %v4573, 7
        %v4575 = vsub.s32 %v4572, %v4574
        %v4576 = vrot.slane %v4533, %v4575
        %v4578 = vunpack.c.l.s4 1985246804
        %v4579 = vunpack.c.0.s8 %v4578
        %v4580 = vlaneseq
        %v4581 = vshrl.u32 %v4580, 7
        %v4582 = vsub.s32 %v4579, %v4581
        %v4583 = vrot.slane %v4533, %v4582
        %v4585 = vunpack.c.l.s4 839922192
        %v4586 = vunpack.c.0.s8 %v4585
        %v4587 = vlaneseq
        %v4588 = vshrl.u32 %v4587, 7
        %v4589 = vsub.s32 %v4586, %v4588
        %v4590 = vrot.slane %v4537, %v4589
        %v4592 = vunpack.c.l.s4 1985246804
        %v4593 = vunpack.c.0.s8 %v4592
        %v4594 = vlaneseq
        %v4595 = vshrl.u32 %v4594, 7
        %v4596 = vsub.s32 %v4593, %v4595
        %v4597 = vrot.slane %v4537, %v4596
        %v4599 = vunpack.c.l.s4 839922192
        %v4600 = vunpack.c.0.s8 %v4599
        %v4601 = vlaneseq
        %v4602 = vshrl.u32 %v4601, 7
        %v4603 = vsub.s32 %v4600, %v4602
        %v4604 = vrot.slane %v4541, %v4603
        %v4606 = vunpack.c.l.s4 1985246804
        %v4607 = vunpack.c.0.s8 %v4606
        %v4608 = vlaneseq
        %v4609 = vshrl.u32 %v4608, 7
        %v4610 = vsub.s32 %v4607, %v4609
        %v4611 = vrot.slane %v4541, %v4610
        %v4613 = vunpack.c.l.s4 839922192
        %v4614 = vunpack.c.0.s8 %v4613
        %v4615 = vlaneseq
        %v4616 = vshrl.u32 %v4615, 7
        %v4617 = vsub.s32 %v4614, %v4616
        %v4618 = vrot.slane %v4545, %v4617
        %v4620 = vunpack.c.l.s4 1985246804
        %v4621 = vunpack.c.0.s8 %v4620
        %v4622 = vlaneseq
        %v4623 = vshrl.u32 %v4622, 7
        %v4624 = vsub.s32 %v4621, %v4623
        %v4625 = vrot.slane %v4545, %v4624
        %v4627 = vunpack.c.l.s4 839922192
        %v4628 = vunpack.c.0.s8 %v4627
        %v4629 = vlaneseq
        %v4630 = vshrl.u32 %v4629, 7
        %v4631 = vsub.s32 %v4628, %v4630
        %v4632 = vrot.slane %v4549, %v4631
        %v4634 = vunpack.c.l.s4 1985246804
        %v4635 = vunpack.c.0.s8 %v4634
        %v4636 = vlaneseq
        %v4637 = vshrl.u32 %v4636, 7
        %v4638 = vsub.s32 %v4635, %v4637
        %v4639 = vrot.slane %v4549, %v4638
        %v4641 = vunpack.c.l.s4 839922192
        %v4642 = vunpack.c.0.s8 %v4641
        %v4643 = vlaneseq
        %v4644 = vshrl.u32 %v4643, 7
        %v4645 = vsub.s32 %v4642, %v4644
        %v4646 = vrot.slane %v4553, %v4645
        %v4648 = vunpack.c.l.s4 1985246804
        %v4649 = vunpack.c.0.s8 %v4648
        %v4650 = vlaneseq
        %v4651 = vshrl.u32 %v4650, 7
        %v4652 = vsub.s32 %v4649, %v4651
        %v4653 = vrot.slane %v4553, %v4652
        %v4655 = vunpack.c.l.s4 839922192
        %v4656 = vunpack.c.0.s8 %v4655
        %v4657 = vlaneseq
        %v4658 = vshrl.u32 %v4657, 7
        %v4659 = vsub.s32 %v4656, %v4658
        %v4660 = vrot.slane %v4557, %v4659
        %v4662 = vunpack.c.l.s4 1985246804
        %v4663 = vunpack.c.0.s8 %v4662
        %v4664 = vlaneseq
        %v4665 = vshrl.u32 %v4664, 7
        %v4666 = vsub.s32 %v4663, %v4665
        %v4667 = vrot.slane %v4557, %v4666
        %v4669 = vunpack.c.l.s4 839922192
        %v4670 = vunpack.c.0.s8 %v4669
        %v4671 = vlaneseq
        %v4672 = vshrl.u32 %v4671, 7
        %v4673 = vsub.s32 %v4670, %v4672
        %v4674 = vrot.slane %v4561, %v4673
        %v4676 = vunpack.c.l.s4 1985246804
        %v4677 = vunpack.c.0.s8 %v4676
        %v4678 = vlaneseq
        %v4679 = vshrl.u32 %v4678, 7
        %v4680 = vsub.s32 %v4677, %v4679
        %v4681 = vrot.slane %v4561, %v4680
        %v4698 = vmul.bf16 %v4474, %v4576
        %v4699 = vmul.bf16 %v4475, %v4583
        %v4700 = vmul.bf16 %v4476, %v4590
        %v4701 = vmul.bf16 %v4477, %v4597
        %v4702 = vmul.bf16 %v4478, %v4604
        %v4703 = vmul.bf16 %v4479, %v4611
        %v4704 = vmul.bf16 %v4480, %v4618
        %v4705 = vmul.bf16 %v4481, %v4625
        %v4706 = vmul.bf16 %v4482, %v4632
        %v4707 = vmul.bf16 %v4483, %v4639
        %v4708 = vmul.bf16 %v4484, %v4646
        %v4709 = vmul.bf16 %v4485, %v4653
        %v4710 = vmul.bf16 %v4486, %v4660
        %v4711 = vmul.bf16 %v4487, %v4667
        %v4712 = vmul.bf16 %v4488, %v4674
        %v4713 = vmul.bf16 %v4489, %v4681
        %v4714 = vld [vmem:[%s10] sm:$0x1]
        %v4716 = vlaneseq
        %v4717 = vshrl.u32 %v4716, 7
        %v4718 = vsub.s32 0, %v4717
        %v4719 = vrot.slane %v4714, %v4718
        %v4737 = vunpack.c.l.b16 %v4698
        %v4738 = vunpack.c.l.b16 %v4699
        %v4739 = vunpack.c.l.b16 %v4700
        %v4740 = vunpack.c.l.b16 %v4701
        %v4741 = vunpack.c.l.b16 %v4702
        %v4742 = vunpack.c.l.b16 %v4703
        %v4743 = vunpack.c.l.b16 %v4704
        %v4744 = vunpack.c.l.b16 %v4705
        %v4745 = vunpack.c.l.b16 %v4706
        %v4746 = vunpack.c.l.b16 %v4707
        %v4747 = vunpack.c.l.b16 %v4708
        %v4748 = vunpack.c.l.b16 %v4709
        %v4749 = vunpack.c.l.b16 %v4710
        %v4750 = vunpack.c.l.b16 %v4711
        %v4751 = vunpack.c.l.b16 %v4712
        %v4752 = vunpack.c.l.b16 %v4713
        %v4753 = vpack.c.b16 %v4738, %v4737
        %v4754 = vpack.c.b16 %v4740, %v4739
        %v4755 = vpack.c.b16 %v4742, %v4741
        %v4756 = vpack.c.b16 %v4744, %v4743
        %v4757 = vpack.c.b16 %v4746, %v4745
        %v4758 = vpack.c.b16 %v4748, %v4747
        %v4759 = vpack.c.b16 %v4750, %v4749
        %v4760 = vpack.c.b16 %v4752, %v4751
        %4769 = vmatprep.subr.bf16.mxu0 0
        %4770 = vmatpush1.bf16.msra.mxu0 %v4760
        %4771 = vmatprep.subr.bf16.mxu0 0
        %4772 = vmatpush1.bf16.msra.mxu0 %v4759
        %4773 = vmatprep.subr.bf16.mxu0 0
        %4774 = vmatpush1.bf16.msra.mxu0 %v4758
        %4775 = vmatprep.subr.bf16.mxu0 0
        %4776 = vmatpush1.bf16.msra.mxu0 %v4757
        %4777 = vmatprep.subr.bf16.mxu0 0
        %4778 = vmatpush1.bf16.msra.mxu0 %v4756
        %4779 = vmatprep.subr.bf16.mxu0 0
        %4780 = vmatpush1.bf16.msra.mxu0 %v4755
        %4781 = vmatprep.subr.bf16.mxu0 0
        %4782 = vmatpush1.bf16.msra.mxu0 %v4754
        %4783 = vmatprep.subr.bf16.mxu0 0
        %4784 = vmatpush1.bf16.msra.mxu0 %v4753
        %4785 = vmatprep.subr.bf16.mxu0 0
        %4786 = vmatpush2.bf16.msra.mxu0 0
        %4787 = vmatprep.subr.bf16.mxu0 0
        %4788 = vmatpush2.bf16.msra.mxu0 0
        %4789 = vmatprep.subr.bf16.mxu0 0
        %4790 = vmatpush2.bf16.msra.mxu0 0
        %4791 = vmatprep.subr.bf16.mxu0 0
        %4792 = vmatpush2.bf16.msra.mxu0 0
        %4793 = vmatprep.subr.bf16.mxu0 0
        %4794 = vmatpush2.bf16.msra.mxu0 0
        %4795 = vmatprep.subr.bf16.mxu0 0
        %4796 = vmatpush2.bf16.msra.mxu0 0
        %4797 = vmatprep.subr.bf16.mxu0 0
        %4798 = vmatpush2.bf16.msra.mxu0 0
        %4799 = vmatprep.subr.bf16.mxu0 0
        %4800 = vmatpush2.bf16.msra.mxu0 0
        %4801 = vmatprep.mubr.bf16.mxu0 0
        %4802 = vmatmul.mubr.bf16.gmra.mxu0 %v4192
        %v4803 = vpop.f32.mrf.mxu0
        %v4804 = vadd.f32 %v4719, %v4803
        %v4805 = vpop.f32.mrf.mxu0
        %v4806 = vpop.f32.mrf.mxu0
        %v4807 = vadd.f32 %v4719, %v4806
        %v4808 = vpop.f32.mrf.mxu0
        %4809 = vmatprep.mubr.bf16.mxu0 0
        %4810 = vmatmul.mubr.bf16.gmra.mxu0 %v4193
        %v4811 = vpop.f32.mrf.mxu0
        %v4812 = vadd.f32 %v4719, %v4811
        %v4813 = vpop.f32.mrf.mxu0
        %v4814 = vpop.f32.mrf.mxu0
        %v4815 = vadd.f32 %v4719, %v4814
        %v4816 = vpop.f32.mrf.mxu0
        %4817 = vmatprep.mubr.bf16.mxu0 0
        %4818 = vmatmul.mubr.bf16.gmra.mxu0 %v4194
        %v4819 = vpop.f32.mrf.mxu0
        %v4820 = vadd.f32 %v4719, %v4819
        %v4821 = vpop.f32.mrf.mxu0
        %v4822 = vpop.f32.mrf.mxu0
        %v4823 = vadd.f32 %v4719, %v4822
        %v4824 = vpop.f32.mrf.mxu0
        %4825 = vmatprep.mubr.bf16.mxu0 0
        %4826 = vmatmul.mubr.bf16.gmra.mxu0 %v4195
        %v4827 = vpop.f32.mrf.mxu0
        %v4828 = vadd.f32 %v4719, %v4827
        %v4829 = vpop.f32.mrf.mxu0
        %v4830 = vpop.f32.mrf.mxu0
        %v4831 = vadd.f32 %v4719, %v4830
        %v4832 = vpop.f32.mrf.mxu0
        %4833 = vmatprep.mubr.bf16.mxu0 0
        %4834 = vmatmul.mubr.bf16.gmra.mxu0 %v4196
        %v4835 = vpop.f32.mrf.mxu0
        %v4836 = vadd.f32 %v4719, %v4835
        %v4837 = vpop.f32.mrf.mxu0
        %v4838 = vpop.f32.mrf.mxu0
        %v4839 = vadd.f32 %v4719, %v4838
        %v4840 = vpop.f32.mrf.mxu0
        %4841 = vmatprep.mubr.bf16.mxu0 0
        %4842 = vmatmul.mubr.bf16.gmra.mxu0 %v4197
        %v4843 = vpop.f32.mrf.mxu0
        %v4844 = vadd.f32 %v4719, %v4843
        %v4845 = vpop.f32.mrf.mxu0
        %v4846 = vpop.f32.mrf.mxu0
        %v4847 = vadd.f32 %v4719, %v4846
        %v4848 = vpop.f32.mrf.mxu0
        %4849 = vmatprep.mubr.bf16.mxu0 0
        %4850 = vmatmul.mubr.bf16.gmra.mxu0 %v4198
        %v4851 = vpop.f32.mrf.mxu0
        %v4852 = vadd.f32 %v4719, %v4851
        %v4853 = vpop.f32.mrf.mxu0
        %v4854 = vpop.f32.mrf.mxu0
        %v4855 = vadd.f32 %v4719, %v4854
        %v4856 = vpop.f32.mrf.mxu0
        %4857 = vmatprep.mubr.bf16.mxu0 0
        %4858 = vmatmul.mubr.bf16.gmra.mxu0 %v4199
        %v4859 = vpop.f32.mrf.mxu0
        %v4860 = vadd.f32 %v4719, %v4859
        %v4861 = vpop.f32.mrf.mxu0
        %v4862 = vpop.f32.mrf.mxu0
        %v4863 = vadd.f32 %v4719, %v4862
        %v4864 = vpop.f32.mrf.mxu0
        %4865 = vmatprep.mubr.bf16.mxu0 0
        %4866 = vmatmul.mubr.bf16.gmra.mxu0 %v4200
        %v4867 = vpop.f32.mrf.mxu0
        %v4868 = vadd.f32 %v4719, %v4867
        %v4869 = vpop.f32.mrf.mxu0
        %v4870 = vpop.f32.mrf.mxu0
        %v4871 = vadd.f32 %v4719, %v4870
        %v4872 = vpop.f32.mrf.mxu0
        %4873 = vmatprep.mubr.bf16.mxu0 0
        %4874 = vmatmul.mubr.bf16.gmra.mxu0 %v4201
        %v4875 = vpop.f32.mrf.mxu0
        %v4876 = vadd.f32 %v4719, %v4875
        %v4877 = vpop.f32.mrf.mxu0
        %v4878 = vpop.f32.mrf.mxu0
        %v4879 = vadd.f32 %v4719, %v4878
        %v4880 = vpop.f32.mrf.mxu0
        %4881 = vmatprep.mubr.bf16.mxu0 0
        %4882 = vmatmul.mubr.bf16.gmra.mxu0 %v4202
        %v4883 = vpop.f32.mrf.mxu0
        %v4884 = vadd.f32 %v4719, %v4883
        %v4885 = vpop.f32.mrf.mxu0
        %v4886 = vpop.f32.mrf.mxu0
        %v4887 = vadd.f32 %v4719, %v4886
        %v4888 = vpop.f32.mrf.mxu0
        %4889 = vmatprep.mubr.bf16.mxu0 0
        %4890 = vmatmul.mubr.bf16.gmra.mxu0 %v4203
        %v4891 = vpop.f32.mrf.mxu0
        %v4892 = vadd.f32 %v4719, %v4891
        %v4893 = vpop.f32.mrf.mxu0
        %v4894 = vpop.f32.mrf.mxu0
        %v4895 = vadd.f32 %v4719, %v4894
        %v4896 = vpop.f32.mrf.mxu0
        %4897 = vmatprep.mubr.bf16.mxu0 0
        %4898 = vmatmul.mubr.bf16.gmra.mxu0 %v4204
        %v4899 = vpop.f32.mrf.mxu0
        %v4900 = vadd.f32 %v4719, %v4899
        %v4901 = vpop.f32.mrf.mxu0
        %v4902 = vpop.f32.mrf.mxu0
        %v4903 = vadd.f32 %v4719, %v4902
        %v4904 = vpop.f32.mrf.mxu0
        %4905 = vmatprep.mubr.bf16.mxu0 0
        %4906 = vmatmul.mubr.bf16.gmra.mxu0 %v4205
        %v4907 = vpop.f32.mrf.mxu0
        %v4908 = vadd.f32 %v4719, %v4907
        %v4909 = vpop.f32.mrf.mxu0
        %v4910 = vpop.f32.mrf.mxu0
        %v4911 = vadd.f32 %v4719, %v4910
        %v4912 = vpop.f32.mrf.mxu0
        %4913 = vmatprep.mubr.bf16.mxu0 0
        %4914 = vmatmul.mubr.bf16.gmra.mxu0 %v4206
        %v4915 = vpop.f32.mrf.mxu0
        %v4916 = vadd.f32 %v4719, %v4915
        %v4917 = vpop.f32.mrf.mxu0
        %v4918 = vpop.f32.mrf.mxu0
        %v4919 = vadd.f32 %v4719, %v4918
        %v4920 = vpop.f32.mrf.mxu0
        %4921 = vmatprep.mubr.bf16.mxu0 0
        %4922 = vmatmul.mubr.bf16.gmra.mxu0 %v4207
        %v4923 = vpop.f32.mrf.mxu0
        %v4924 = vadd.f32 %v4719, %v4923
        %v4925 = vpop.f32.mrf.mxu0
        %v4926 = vpop.f32.mrf.mxu0
        %v4927 = vadd.f32 %v4719, %v4926
        %v4928 = vpop.f32.mrf.mxu0
        %4929 = vdwg.mxu0
        %v4930 = vunpack.c.l.bf16 %v480
        %v4931 = vunpack.c.l.bf16 %v481
        %v4932 = vunpack.c.l.bf16 %v482
        %v4933 = vunpack.c.l.bf16 %v483
        %v4934 = vunpack.c.l.bf16 %v484
        %v4935 = vunpack.c.l.bf16 %v485
        %v4936 = vunpack.c.l.bf16 %v486
        %v4937 = vunpack.c.l.bf16 %v487
        %v4938 = vunpack.c.l.bf16 %v488
        %v4939 = vunpack.c.l.bf16 %v489
        %v4940 = vunpack.c.l.bf16 %v490
        %v4941 = vunpack.c.l.bf16 %v491
        %v4942 = vunpack.c.l.bf16 %v492
        %v4943 = vunpack.c.l.bf16 %v493
        %v4944 = vunpack.c.l.bf16 %v494
        %v4945 = vunpack.c.l.bf16 %v495
        %v4946 = vunpack.c.l.bf16 %v496
        %v4947 = vunpack.c.l.bf16 %v497
        %v4948 = vunpack.c.l.bf16 %v498
        %v4949 = vunpack.c.l.bf16 %v499
        %v4950 = vunpack.c.l.bf16 %v500
        %v4951 = vunpack.c.l.bf16 %v501
        %v4952 = vunpack.c.l.bf16 %v502
        %v4953 = vunpack.c.l.bf16 %v503
        %v4954 = vunpack.c.l.bf16 %v504
        %v4955 = vunpack.c.l.bf16 %v505
        %v4956 = vunpack.c.l.bf16 %v506
        %v4957 = vunpack.c.l.bf16 %v507
        %v4958 = vunpack.c.l.bf16 %v508
        %v4959 = vunpack.c.l.bf16 %v509
        %v4960 = vunpack.c.l.bf16 %v510
        %v4961 = vunpack.c.l.bf16 %v511
        %v4962 = vadd.f32 %v4804, %v4930
        %v4963 = vadd.f32 %v4807, %v4931
        %v4964 = vadd.f32 %v4812, %v4932
        %v4965 = vadd.f32 %v4815, %v4933
        %v4966 = vadd.f32 %v4820, %v4934
        %v4967 = vadd.f32 %v4823, %v4935
        %v4968 = vadd.f32 %v4828, %v4936
        %v4969 = vadd.f32 %v4831, %v4937
        %v4970 = vadd.f32 %v4836, %v4938
        %v4971 = vadd.f32 %v4839, %v4939
        %v4972 = vadd.f32 %v4844, %v4940
        %v4973 = vadd.f32 %v4847, %v4941
        %v4974 = vadd.f32 %v4852, %v4942
        %v4975 = vadd.f32 %v4855, %v4943
        %v4976 = vadd.f32 %v4860, %v4944
        %v4977 = vadd.f32 %v4863, %v4945
        %v4978 = vadd.f32 %v4868, %v4946
        %v4979 = vadd.f32 %v4871, %v4947
        %v4980 = vadd.f32 %v4876, %v4948
        %v4981 = vadd.f32 %v4879, %v4949
        %v4982 = vadd.f32 %v4884, %v4950
        %v4983 = vadd.f32 %v4887, %v4951
        %v4984 = vadd.f32 %v4892, %v4952
        %v4985 = vadd.f32 %v4895, %v4953
        %v4986 = vadd.f32 %v4900, %v4954
        %v4987 = vadd.f32 %v4903, %v4955
        %v4988 = vadd.f32 %v4908, %v4956
        %v4989 = vadd.f32 %v4911, %v4957
        %v4990 = vadd.f32 %v4916, %v4958
        %v4991 = vadd.f32 %v4919, %v4959
        %v4992 = vadd.f32 %v4924, %v4960
        %v4993 = vadd.f32 %v4927, %v4961
        %v4994 = vpack.c.bf16 %v4963, %v4962
        %v4995 = vpack.c.bf16 %v4965, %v4964
        %v4996 = vpack.c.bf16 %v4967, %v4966
        %v4997 = vpack.c.bf16 %v4969, %v4968
        %v4998 = vpack.c.bf16 %v4971, %v4970
        %v4999 = vpack.c.bf16 %v4973, %v4972
        %v5000 = vpack.c.bf16 %v4975, %v4974
        %v5001 = vpack.c.bf16 %v4977, %v4976
        %v5002 = vpack.c.bf16 %v4979, %v4978
        %v5003 = vpack.c.bf16 %v4981, %v4980
        %v5004 = vpack.c.bf16 %v4983, %v4982
        %v5005 = vpack.c.bf16 %v4985, %v4984
        %v5006 = vpack.c.bf16 %v4987, %v4986
        %v5007 = vpack.c.bf16 %v4989, %v4988
        %v5008 = vpack.c.bf16 %v4991, %v4990
        %v5009 = vpack.c.bf16 %v4993, %v4992
        %v5026 = vunpack.c.l.b16 %v4994
        %v5027 = vunpack.c.h.b16 %v4994
        %v5028 = vunpack.c.l.b16 %v4995
        %v5029 = vunpack.c.h.b16 %v4995
        %v5030 = vunpack.c.l.b16 %v4996
        %v5031 = vunpack.c.h.b16 %v4996
        %v5032 = vunpack.c.l.b16 %v4997
        %v5033 = vunpack.c.h.b16 %v4997
        %v5034 = vunpack.c.l.b16 %v4998
        %v5035 = vunpack.c.h.b16 %v4998
        %v5036 = vunpack.c.l.b16 %v4999
        %v5037 = vunpack.c.h.b16 %v4999
        %v5038 = vunpack.c.l.b16 %v5000
        %v5039 = vunpack.c.h.b16 %v5000
        %v5040 = vunpack.c.l.b16 %v5001
        %v5041 = vunpack.c.h.b16 %v5001
        %v5042 = vunpack.c.l.b16 %v5002
        %v5043 = vunpack.c.h.b16 %v5002
        %v5044 = vunpack.c.l.b16 %v5003
        %v5045 = vunpack.c.h.b16 %v5003
        %v5046 = vunpack.c.l.b16 %v5004
        %v5047 = vunpack.c.h.b16 %v5004
        %v5048 = vunpack.c.l.b16 %v5005
        %v5049 = vunpack.c.h.b16 %v5005
        %v5050 = vunpack.c.l.b16 %v5006
        %v5051 = vunpack.c.h.b16 %v5006
        %v5052 = vunpack.c.l.b16 %v5007
        %v5053 = vunpack.c.h.b16 %v5007
        %v5054 = vunpack.c.l.b16 %v5008
        %v5055 = vunpack.c.h.b16 %v5008
        %v5056 = vunpack.c.l.b16 %v5009
        %v5057 = vunpack.c.h.b16 %v5009
        %v5058 = vpack.c.b16 %v5026, %v5026
        %v5059 = vpack.c.b16 %v5027, %v5027
        %v5060 = vpack.c.b16 %v5028, %v5028
        %v5061 = vpack.c.b16 %v5029, %v5029
        %v5062 = vpack.c.b16 %v5030, %v5030
        %v5063 = vpack.c.b16 %v5031, %v5031
        %v5064 = vpack.c.b16 %v5032, %v5032
        %v5065 = vpack.c.b16 %v5033, %v5033
        %v5066 = vpack.c.b16 %v5034, %v5034
        %v5067 = vpack.c.b16 %v5035, %v5035
        %v5068 = vpack.c.b16 %v5036, %v5036
        %v5069 = vpack.c.b16 %v5037, %v5037
        %v5070 = vpack.c.b16 %v5038, %v5038
        %v5071 = vpack.c.b16 %v5039, %v5039
        %v5072 = vpack.c.b16 %v5040, %v5040
        %v5073 = vpack.c.b16 %v5041, %v5041
        %v5074 = vpack.c.b16 %v5042, %v5042
        %v5075 = vpack.c.b16 %v5043, %v5043
        %v5076 = vpack.c.b16 %v5044, %v5044
        %v5077 = vpack.c.b16 %v5045, %v5045
        %v5078 = vpack.c.b16 %v5046, %v5046
        %v5079 = vpack.c.b16 %v5047, %v5047
        %v5080 = vpack.c.b16 %v5048, %v5048
        %v5081 = vpack.c.b16 %v5049, %v5049
        %v5082 = vpack.c.b16 %v5050, %v5050
        %v5083 = vpack.c.b16 %v5051, %v5051
        %v5084 = vpack.c.b16 %v5052, %v5052
        %v5085 = vpack.c.b16 %v5053, %v5053
        %v5086 = vpack.c.b16 %v5054, %v5054
        %v5087 = vpack.c.b16 %v5055, %v5055
        %v5088 = vpack.c.b16 %v5056, %v5056
        %v5089 = vpack.c.b16 %v5057, %v5057
        %5122 = vst [vmem:[%s477] sm:$0xf] %v5058
        %5123 = vst [vmem:[%s477 + $0x4] sm:$0xf] %v5059
        %5124 = vst [vmem:[%s477 + $0x8] sm:$0xf] %v5060
        %5125 = vst [vmem:[%s477 + $0xc] sm:$0xf] %v5061
        %5126 = vst [vmem:[%s477 + $0x10] sm:$0xf] %v5062
        %5127 = vst [vmem:[%s477 + $0x14] sm:$0xf] %v5063
        %5128 = vst [vmem:[%s477 + $0x18] sm:$0xf] %v5064
        %5129 = vst [vmem:[%s477 + $0x1c] sm:$0xf] %v5065
        %5130 = vst [vmem:[%s477 + $0x20] sm:$0xf] %v5066
        %5131 = vst [vmem:[%s477 + $0x24] sm:$0xf] %v5067
        %5132 = vst [vmem:[%s477 + $0x28] sm:$0xf] %v5068
        %5133 = vst [vmem:[%s477 + $0x2c] sm:$0xf] %v5069
        %5134 = vst [vmem:[%s477 + $0x30] sm:$0xf] %v5070
        %5135 = vst [vmem:[%s477 + $0x34] sm:$0xf] %v5071
        %5136 = vst [vmem:[%s477 + $0x38] sm:$0xf] %v5072
        %5137 = vst [vmem:[%s477 + $0x3c] sm:$0xf] %v5073
        %5138 = vst [vmem:[%s477 + $0x40] sm:$0xf] %v5074
        %5139 = vst [vmem:[%s477 + $0x44] sm:$0xf] %v5075
        %5140 = vst [vmem:[%s477 + $0x48] sm:$0xf] %v5076
        %5141 = vst [vmem:[%s477 + $0x4c] sm:$0xf] %v5077
        %5142 = vst [vmem:[%s477 + $0x50] sm:$0xf] %v5078
        %5143 = vst [vmem:[%s477 + $0x54] sm:$0xf] %v5079
        %5144 = vst [vmem:[%s477 + $0x58] sm:$0xf] %v5080
        %5145 = vst [vmem:[%s477 + $0x5c] sm:$0xf] %v5081
        %5146 = vst [vmem:[%s477 + $0x60] sm:$0xf] %v5082
        %5147 = vst [vmem:[%s477 + $0x64] sm:$0xf] %v5083
        %5148 = vst [vmem:[%s477 + $0x68] sm:$0xf] %v5084
        %5149 = vst [vmem:[%s477 + $0x6c] sm:$0xf] %v5085
        %5150 = vst [vmem:[%s477 + $0x70] sm:$0xf] %v5086
        %5151 = vst [vmem:[%s477 + $0x74] sm:$0xf] %v5087
        %5152 = vst [vmem:[%s477 + $0x78] sm:$0xf] %v5088
        %5153 = vst [vmem:[%s477 + $0x7c] sm:$0xf] %v5089
        %s5154 = sand.u32 %s275, 1
        %s5155 = scalar_lea.sflag [#allocation5], %s5154
        %s5156 = sand.u32 %s275, 1
        %s5157 = smul.addr %s5156, 128
        %s5158 = scalar_lea.vmem [#allocation14], %s5157
        // Predicated region
        $region89: #{tpu_custom_call.1} parent=63 // pred_check
          %p5159 = pneg %p285
        $region90: #{tpu_custom_call.1} parent=63 // pred_check_branch
          %5161 = sbr.rel (%p5159) target = $region92
        $region91: #{tpu_custom_call.1} parent=63 // pred_region
          %s5163 = ssub.s32 2048, 2048
          %5164 = vsyncadd %s5155, %s5163
          %s5165 = smul.addr %s31, 32
          %s5166 = smul.addr %s5165, 64
          %s5167 = scalar_lea.hbm %s11, %s5166
          %s5168 = sshll.u32 %s5158, 4
          %s5169 = int_to_ptr.vmem [resolvable:$true] %s5168
          %5174 = dma.vmem_to_hbm [thread:$0]  %s5169, 2048, %s5167, %s5155, 64, 64, 4
        $region92: #{tpu_custom_call.1} parent=63 // pred_fallthru
          _
      $region64: #{tpu_custom_call.1} parent=5 // pred_fallthru
        _
      %p5175 = scmp.le.s32.totalorder 2, %s26
      // Predicated region
      $region93: #{tpu_custom_call.1} parent=5 // pred_check
        %p5176 = pneg %p5175
      $region94: #{tpu_custom_call.1} parent=5 // pred_check_branch
        %5178 = sbr.rel (%p5176) target = $region96
      $region95: #{tpu_custom_call.1} parent=5 // pred_region
        %s5179 = ssub.s32 %s26, 2
        // Predicated region
        $region97: #{tpu_custom_call.1} parent=95 // pred_check
          %p5180 = pneg %p291
        $region98: #{tpu_custom_call.1} parent=95 // pred_check_branch
          %5182 = sbr.rel (%p5180) target = $region100
        $region99: #{tpu_custom_call.1} parent=95 // pred_region
          %s5183 = sand.u32 %s276, 1
          %s5184 = scalar_lea.sflag [#allocation5], %s5183
          %s5185 = sand.u32 %s276, 1
          %s5186 = smul.addr %s5185, 128
          %s5187 = scalar_lea.vmem [#allocation14], %s5186
          %5188 = dma.done %s5184, 2048
        $region100: #{tpu_custom_call.1} parent=95 // pred_fallthru
          _
      $region96: #{tpu_custom_call.1} parent=5 // pred_fallthru
        _
    $region6: #{tpu_custom_call.1} parent=1 // loop_footer
      %s30 = sadd.s32 1, %s26
    $region7: #{tpu_custom_call.1} parent=1 // loop_footer_branch
      %25 = sbr.rel target = $region3
    $region8: #{tpu_custom_call.1} parent=1 // loop_exit
      _
    %5189 = vsyncpa [#allocation4], 1
    %s5190 = scalar_lea.sflag [#allocation4], 1
    %5191 = vsyncpa %s5190, 1
    %5192 = vsyncpa [#allocation7], 1
    %5193 = vsyncpa [#allocation10], 1
    %5194 = vsyncpa [#allocation13], 1
    %5195 = vsyncpa [#allocation5], 1
    %s5196 = scalar_lea.sflag [#allocation5], 1
    %5197 = vsyncpa %s5196, 1

</llo_original>
